<compile_context>
chip_gen: v6e
topology: v6e:2x2x1
jax: 0.10.0
libtpu: 0.0.40
codegen_flags: <defaults>
</compile_context>

<pallas_src>
import functools

import jax
import jax.numpy as jnp
import numpy as np
from jax import lax
from jax.experimental import pallas as pl
from jax.experimental.pallas import tpu as pltpu

_GATE_MULT = {"rnn": 1, "gru": 3, "lstm": 4}
_MATMUL_DTYPE = jnp.bfloat16     # MXU-native operand dtype (f32 accumulation)
_NEG_BIG = -1e30                 # "-inf" bias for padded vocab columns
_LANE = 128
_SUBLANE = 8


# --------------------------------------------------------------------------
# Small static helpers
# --------------------------------------------------------------------------
def _round_up(x, m):
    return (x + m - 1) // m * m


def _pick_divisor(dim, target, align):
    """Largest t <= target with dim % t == 0 and t % align == 0 (else dim)."""
    if dim <= target:
        return dim
    t = (target // align) * align
    while t >= align:
        if dim % t == 0:
            return t
        t -= align
    return dim


def _pick_time_chunk(T, target=32):
    tc = min(T, target)
    while T % tc:
        tc -= 1
    return tc


def _vmem_limit(bytes_needed):
    # Explicit scoped-VMEM budget (defaults are only 16/32 MiB).
    return int(min(max(bytes_needed + (8 << 20), 32 << 20), 96 << 20))


# --------------------------------------------------------------------------
# Recurrent chunk kernels.
#
# gi[t] = x[t] @ W_ih^T + b_ih is precomputed for all timesteps outside the
# kernel.  Each grid step processes Tc timesteps; the hidden (and cell) state
# lives in VMEM scratch and persists across sequential grid steps.
# --------------------------------------------------------------------------
def _rnn_chunk_kernel(gi_ref, whh_ref, bhh_ref, o_ref, h_scr, *, Tc, H):
    del H

    @pl.when(pl.program_id(0) == 0)
    def _():
        h_scr[...] = jnp.zeros_like(h_scr)

    def step(s, h_prev):
        gates = (gi_ref[s]
                 + jnp.dot(h_prev.astype(_MATMUL_DTYPE), whh_ref[...],
                           preferred_element_type=jnp.float32)
                 + bhh_ref[...])
        h_new = jnp.tanh(gates)
        o_ref[s] = h_new
        return h_new

    h_scr[...] = lax.fori_loop(0, Tc, step, h_scr[...], unroll=True)


def _gru_chunk_kernel(gi_ref, whh_ref, bhh_ref, o_ref, h_scr, *, Tc, H):
    @pl.when(pl.program_id(0) == 0)
    def _():
        h_scr[...] = jnp.zeros_like(h_scr)

    def step(s, h_prev):
        gi = gi_ref[s]                                    # x@W_ih^T + b_ih
        gh = (jnp.dot(h_prev.astype(_MATMUL_DTYPE), whh_ref[...],
                      preferred_element_type=jnp.float32)
              + bhh_ref[...])                             # h@W_hh^T + b_hh
        # PyTorch GRU gate order: r, z, n
        r = jax.nn.sigmoid(gi[:, 0 * H:1 * H] + gh[:, 0 * H:1 * H])
        z = jax.nn.sigmoid(gi[:, 1 * H:2 * H] + gh[:, 1 * H:2 * H])
        n = jnp.tanh(gi[:, 2 * H:3 * H] + r * gh[:, 2 * H:3 * H])
        h_new = (1.0 - z) * n + z * h_prev
        o_ref[s] = h_new
        return h_new

    h_scr[...] = lax.fori_loop(0, Tc, step, h_scr[...], unroll=True)


def _lstm_chunk_kernel(gi_ref, whh_ref, bhh_ref, o_ref, h_scr, c_scr, *, Tc, H):
    @pl.when(pl.program_id(0) == 0)
    def _():
        h_scr[...] = jnp.zeros_like(h_scr)
        c_scr[...] = jnp.zeros_like(c_scr)

    def step(s, carry):
        h_prev, c_prev = carry
        gates = (gi_ref[s]
                 + jnp.dot(h_prev.astype(_MATMUL_DTYPE), whh_ref[...],
                           preferred_element_type=jnp.float32)
                 + bhh_ref[...])                          # PyTorch order i,f,g,o
        i = jax.nn.sigmoid(gates[:, 0 * H:1 * H])
        f = jax.nn.sigmoid(gates[:, 1 * H:2 * H])
        g = jnp.tanh(gates[:, 2 * H:3 * H])
        o = jax.nn.sigmoid(gates[:, 3 * H:4 * H])
        c_new = f * c_prev + i * g
        h_new = o * jnp.tanh(c_new)
        o_ref[s] = h_new
        return (h_new, c_new)

    h_fin, c_fin = lax.fori_loop(0, Tc, step, (h_scr[...], c_scr[...]),
                                 unroll=True)
    h_scr[...] = h_fin
    c_scr[...] = c_fin


_CHUNK_KERNELS = {"rnn": _rnn_chunk_kernel, "gru": _gru_chunk_kernel,
                  "lstm": _lstm_chunk_kernel}


def _recurrent_layer_pallas(cell, gi, w_hh_t, b_hh):
    """gi: (T, B_p, GW) f32 pre-projected inputs -> (T, B_p, H_p) f32."""
    T, B_p, GW = gi.shape
    H_p = w_hh_t.shape[0]
    Tc = _pick_time_chunk(T)
    n_state = 2 if cell == "lstm" else 1

    vmem_need = (2 * (Tc * B_p * GW * 4          # gi chunk (f32, double buffer)
                      + H_p * GW * 2             # W_hh^T (bf16)
                      + GW * 4                   # b_hh
                      + Tc * B_p * H_p * 4)      # output chunk
                 + n_state * B_p * H_p * 4)      # state scratch

    scratch = [pltpu.VMEM((B_p, H_p), jnp.float32) for _ in range(n_state)]
    kernel = functools.partial(_CHUNK_KERNELS[cell], Tc=Tc, H=H_p)

    return pl.pallas_call(
        kernel,
        out_shape=jax.ShapeDtypeStruct((T, B_p, H_p), jnp.float32),
        grid_spec=pltpu.PrefetchScalarGridSpec(
            num_scalar_prefetch=0,
            grid=(T // Tc,),
            in_specs=[
                pl.BlockSpec((Tc, B_p, GW), lambda t: (t, 0, 0)),   # gi chunk
                pl.BlockSpec((H_p, GW), lambda t: (0, 0)),          # W_hh^T
                pl.BlockSpec((1, GW), lambda t: (0, 0)),            # b_hh
            ],
            out_specs=pl.BlockSpec((Tc, B_p, H_p), lambda t: (t, 0, 0)),
            scratch_shapes=scratch,
        ),
        compiler_params=pltpu.CompilerParams(
            # The time axis carries hidden state -> strictly sequential.
            dimension_semantics=("arbitrary",),
            vmem_limit_bytes=_vmem_limit(vmem_need)),
    )(gi, w_hh_t, b_hh)


# --------------------------------------------------------------------------
# Output head: tiled logits + online log-sum-exp, then in-place normalize.
# --------------------------------------------------------------------------
def _proj_logits_kernel(h_ref, w_ref, b_ref, logits_ref, lse_ref, m_scr, l_scr):
    v = pl.program_id(1)

    @pl.when(v == 0)
    def _():
        m_scr[...] = jnp.full_like(m_scr, -jnp.inf)
        l_scr[...] = jnp.zeros_like(l_scr)

    logits = (jnp.dot(h_ref[...].astype(_MATMUL_DTYPE), w_ref[...],
                      preferred_element_type=jnp.float32) + b_ref[...])
    logits_ref[...] = logits

    m_prev = m_scr[...]
    m_new = jnp.maximum(m_prev, jnp.max(logits, axis=-1, keepdims=True))
    l_scr[...] = (l_scr[...] * jnp.exp(m_prev - m_new)
                  + jnp.sum(jnp.exp(logits - m_new), axis=-1, keepdims=True))
    m_scr[...] = m_new

    @pl.when(v == pl.num_programs(1) - 1)
    def _():
        lse_ref[...] = m_scr[...] + jnp.log(l_scr[...])


def _logsoftmax_finalize_kernel(logits_ref, lse_ref, out_ref):
    out_ref[...] = logits_ref[...] - lse_ref[...]


def _projection_pallas(h2d, w_t, b, apply_log_softmax):
    """h2d: (N, H_p) f32, w_t: (H_p, V_p) bf16, b: (1, V_p) f32 -> (N, V_p)."""
    N, H_p = h2d.shape
    V_p = w_t.shape[1]
    Rt = _pick_divisor(N, 256, _SUBLANE)
    Vt = _pick_divisor(V_p, 512, _LANE)
    nr, nv = N // Rt, V_p // Vt

    vmem_need = (2 * (Rt * H_p * 4 + H_p * Vt * 2 + Vt * 4
                      + Rt * Vt * 4 + Rt * 4)
                 + 2 * Rt * 4)

    logits, lse = pl.pallas_call(
        _proj_logits_kernel,
        out_shape=(jax.ShapeDtypeStruct((N, V_p), jnp.float32),
                   jax.ShapeDtypeStruct((N, 1), jnp.float32)),
        grid_spec=pltpu.PrefetchScalarGridSpec(
            num_scalar_prefetch=0,
            grid=(nr, nv),
            in_specs=[
                pl.BlockSpec((Rt, H_p), lambda r, v: (r, 0)),
                pl.BlockSpec((H_p, Vt), lambda r, v: (0, v)),
                pl.BlockSpec((1, Vt), lambda r, v: (0, v)),
            ],
            out_specs=[pl.BlockSpec((Rt, Vt), lambda r, v: (r, v)),
                       pl.BlockSpec((Rt, 1), lambda r, v: (r, 0))],
            scratch_shapes=[pltpu.VMEM((Rt, 1), jnp.float32),
                            pltpu.VMEM((Rt, 1), jnp.float32)],
        ),
        compiler_params=pltpu.CompilerParams(
            dimension_semantics=("parallel", "arbitrary"),
            vmem_limit_bytes=_vmem_limit(vmem_need)),
    )(h2d, w_t, b)

    if not apply_log_softmax:
        return logits

    return pl.pallas_call(
        _logsoftmax_finalize_kernel,
        out_shape=jax.ShapeDtypeStruct((N, V_p), jnp.float32),
        grid_spec=pltpu.PrefetchScalarGridSpec(
            num_scalar_prefetch=0,
            grid=(nr, nv),
            in_specs=[
                pl.BlockSpec((Rt, Vt), lambda r, v: (r, v)),
                pl.BlockSpec((Rt, 1), lambda r, v: (r, 0)),
            ],
            out_specs=pl.BlockSpec((Rt, Vt), lambda r, v: (r, v)),
        ),
        compiler_params=pltpu.CompilerParams(
            dimension_semantics=("parallel", "parallel"),
            vmem_limit_bytes=_vmem_limit(2 * (2 * Rt * Vt * 4 + Rt * 4))),
        input_output_aliases={0: 0},     # normalize in place over the logits
    )(logits, lse)


# --------------------------------------------------------------------------
# One-time parameter preparation: transpose, pad, fold, cast.
# --------------------------------------------------------------------------
def prepare_params(params, cell):
    gm = _GATE_MULT[cell]
    H = params["layers"][0]["w_hh"].shape[1]
    V = params["out_w"].shape[0]
    H_p = _round_up(H, _LANE)
    V_p = _round_up(V, _LANE)

    def pad_gate_cols(w_t, pad_rows_to=None):
        # (in, gm*H) -> (in[_p], gm*H_p): zero-pad each gate's H block to H_p.
        in_dim = w_t.shape[0]
        w = jnp.pad(w_t.reshape(in_dim, gm, H),
                    ((0, 0), (0, 0), (0, H_p - H))).reshape(in_dim, gm * H_p)
        if pad_rows_to is not None:
            w = jnp.pad(w, ((0, pad_rows_to - in_dim), (0, 0)))
        return w

    def pad_gate_vec(bvec):
        return jnp.pad(bvec.reshape(gm, H),
                       ((0, 0), (0, H_p - H))).reshape(gm * H_p)

    layers = []
    for li, lp in enumerate(params["layers"]):
        w_ih_t = jnp.transpose(lp["w_ih"])          # (in, gm*H)
        w_hh_t = jnp.transpose(lp["w_hh"])          # (H,  gm*H)
        layers.append(dict(
            w_ih_t=pad_gate_cols(w_ih_t,
                                 None if li == 0 else H_p).astype(_MATMUL_DTYPE),
            w_hh_t=pad_gate_cols(w_hh_t, H_p).astype(_MATMUL_DTYPE),
            b_ih=pad_gate_vec(lp["b_ih"]).astype(jnp.float32),
            b_hh=pad_gate_vec(lp["b_hh"]).reshape(1, gm * H_p
                                                  ).astype(jnp.float32),
        ))

    out_w_t = jnp.pad(jnp.transpose(params["out_w"]),
                      ((0, H_p - H), (0, V_p - V))).astype(_MATMUL_DTYPE)
    # Padded vocab columns get a huge negative bias so they contribute nothing
    # to the log-softmax normalizer.
    out_b = jnp.pad(params["out_b"], (0, V_p - V),
                    constant_values=_NEG_BIG).reshape(1, V_p).astype(jnp.float32)

    return dict(embedding=params["embedding"], layers=layers,
                out_w_t=out_w_t, out_b=out_b)


# --------------------------------------------------------------------------
# LM forward (Pallas)
# --------------------------------------------------------------------------
def lm_forward(prep, x, cell, vocab_size, logits=False):
    """x: (B, T) int32 token ids -> (B, T, vocab_size) f32."""
    B, T = x.shape
    B_p = _round_up(B, _SUBLANE)
    x_p = jnp.pad(x, ((0, B_p - B), (0, 0)))                  # pad batch rows

    # Embedding gather straight into time-major layout (no activation
    # transposes between recurrent layers).
    h = jnp.take(prep["embedding"], jnp.transpose(x_p), axis=0)   # (T, B_p, E)

    for lp in prep["layers"]:
        # Hoisted input projection: one large (T*B, in) x (in, GW) matmul
        # (plain XLA) so the sequential kernel only does h_{t-1} @ W_hh^T.
        gw = lp["w_ih_t"].shape[1]
        gi = jnp.dot(h.reshape(T * B_p, -1).astype(_MATMUL_DTYPE),
                     lp["w_ih_t"], preferred_element_type=jnp.float32)
        gi = gi.reshape(T, B_p, gw) + lp["b_ih"]
        h = _recurrent_layer_pallas(cell, gi, lp["w_hh_t"], lp["b_hh"])
        # TODO(synk): inter-layer dropout is training-only in nn.RNN/GRU/LSTM;
        # eval semantics (no dropout) are implemented here.

    # (T, B_p, H_p) -> batch-major rows (B_p*T, H_p) for the output head.  The
    # only remaining transpose is on the narrow H_p-wide tensor, never on the
    # V_p-wide logits.
    H_p = h.shape[-1]
    h2d = jnp.transpose(h, (1, 0, 2)).reshape(B_p * T, H_p)

    out = _projection_pallas(h2d, prep["out_w_t"], prep["out_b"],
                             apply_log_softmax=not logits)
    return out.reshape(B_p, T, -1)[:B, :, :vocab_size]


# --------------------------------------------------------------------------
# Deterministic parameter init (PyTorch-style shapes / uniform(-1/sqrt(H),..))
# --------------------------------------------------------------------------
def init_params(key, cell, vocab_size, embed_size, hidden_dim, num_layers):
    gm = _GATE_MULT[cell]
    keys = jax.random.split(key, 3 + 4 * num_layers)
    bound = 1.0 / np.sqrt(hidden_dim)
    u = lambda k, shape: jax.random.uniform(k, shape, jnp.float32, -bound, bound)

    params = {"embedding": jax.random.normal(keys[0], (vocab_size, embed_size),
                                             jnp.float32)}
    layers = []
    for l in range(num_layers):
        in_size = embed_size if l == 0 else hidden_dim
        kw = keys[3 + 4 * l: 3 + 4 * (l + 1)]
        layers.append(dict(
            w_ih=u(kw[0], (gm * hidden_dim, in_size)),
            w_hh=u(kw[1], (gm * hidden_dim, hidden_dim)),
            b_ih=u(kw[2], (gm * hidden_dim,)),
            b_hh=u(kw[3], (gm * hidden_dim,)),
        ))
    params["layers"] = layers
    params["out_w"] = u(keys[1], (vocab_size, hidden_dim))
    params["out_b"] = u(keys[2], (vocab_size,))
    return params


# --------------------------------------------------------------------------
# Pure-JAX f32 reference (for correctness check)
# --------------------------------------------------------------------------
def _ref_layer(cell, p, x_seq):
    B = x_seq.shape[1]
    H = p["w_hh"].shape[1]
    h0 = jnp.zeros((B, H), jnp.float32)
    if cell == "lstm":
        def step(carry, x_t):
            h, c = carry
            g = (x_t @ p["w_ih"].T + p["b_ih"] + h @ p["w_hh"].T + p["b_hh"])
            i, f, gg, o = jnp.split(g, 4, axis=-1)
            i, f, o = jax.nn.sigmoid(i), jax.nn.sigmoid(f), jax.nn.sigmoid(o)
            c = f * c + i * jnp.tanh(gg)
            h = o * jnp.tanh(c)
            return (h, c), h
        _, ys = jax.lax.scan(step, (h0, h0), x_seq)
    elif cell == "gru":
        def step(h, x_t):
            gi = x_t @ p["w_ih"].T + p["b_ih"]
            gh = h @ p["w_hh"].T + p["b_hh"]
            ir, iz, inn = jnp.split(gi, 3, axis=-1)
            hr, hz, hn = jnp.split(gh, 3, axis=-1)
            r = jax.nn.sigmoid(ir + hr)
            z = jax.nn.sigmoid(iz + hz)
            n = jnp.tanh(inn + r * hn)
            h = (1.0 - z) * n + z * h
            return h, h
        _, ys = jax.lax.scan(step, h0, x_seq)
    else:
        def step(h, x_t):
            h = jnp.tanh(x_t @ p["w_ih"].T + p["b_ih"]
                         + h @ p["w_hh"].T + p["b_hh"])
            return h, h
        _, ys = jax.lax.scan(step, h0, x_seq)
    return ys


def ref_forward(params, x, cell, logits=False):
    emb = params["embedding"][x]
    h = jnp.transpose(emb, (1, 0, 2))
    for lp in params["layers"]:
        h = _ref_layer(cell, lp, h)
    h = jnp.transpose(h, (1, 0, 2))
    out = h @ params["out_w"].T + params["out_b"]
    if not logits:
        out = jax.nn.log_softmax(out, axis=2)
    return out


# --------------------------------------------------------------------------
if __name__ == "__main__":
    key = jax.random.PRNGKey(0)
    B, T = 2, 8
    vocab_size, embed_size, hidden_dim, num_layers = 64, 16, 32, 2

    kx, kp = jax.random.split(key)
    x = jax.random.randint(kx, (B, T), 0, vocab_size, dtype=jnp.int32)

    fwd = jax.jit(lm_forward, static_argnames=("cell", "vocab_size", "logits"))

    for cell in ("lstm", "gru", "rnn"):
        params = init_params(kp, cell, vocab_size, embed_size, hidden_dim,
                             num_layers)
        prep = prepare_params(params, cell)

        out = fwd(prep, x, cell=cell, vocab_size=vocab_size)   # (B, T, V)
        out = jax.block_until_ready(out)
        assert out.shape == (B, T, vocab_size)

        out_np = np.asarray(out)
        ref_np = np.asarray(ref_forward(params, x, cell))

        # bf16 MXU operands -> looser max tolerance vs the pure-f32 reference,
        # plus a tight mean-error bound to catch structural bugs.
        diff = np.abs(out_np - ref_np)
        assert diff.max() < 1e-1, ("max err", cell, float(diff.max()))
        assert diff.mean() < 2e-2, ("mean err", cell, float(diff.mean()))
        # Log-probs must exponentiate to a proper distribution over the REAL
        # vocab (verifies padded vocab columns did not pollute the normalizer).
        np.testing.assert_allclose(np.exp(out_np).sum(-1), 1.0, atol=1e-3)

    print("KERNEL_OK")
</pallas_src>

<mosaic_0001>
module attributes {stable_mosaic.version = 11 : i64} {
  func.func @_proj_logits_kernel(%arg0: i32, %arg1: i32, %arg2: memref<64x128xf32, #tpu.memory_space<vmem>>, %arg3: memref<128x128xbf16, #tpu.memory_space<vmem>>, %arg4: memref<1x128xf32, #tpu.memory_space<vmem>>, %arg5: memref<64x128xf32, #tpu.memory_space<vmem>>, %arg6: memref<64x1xf32, #tpu.memory_space<vmem>>, %arg7: memref<64x1xf32, #tpu.memory_space<vmem>>, %arg8: memref<64x1xf32, #tpu.memory_space<vmem>>) attributes {dimension_semantics = [#tpu.dimension_semantics<parallel>, #tpu.dimension_semantics<arbitrary>], iteration_bounds = array<i64: 1, 1>, scalar_prefetch = 0 : i64, scratch_operands = 2 : i64, tpu.core_type = #tpu.core_type<tc>, window_params = [{transform_indices = @transform_0, window_bounds = array<i64: 64, 128>}, {transform_indices = @transform_1, window_bounds = array<i64: 128, 128>}, {transform_indices = @transform_2, window_bounds = array<i64: 1, 128>}, {transform_indices = @transform_3, window_bounds = array<i64: 64, 128>}, {transform_indices = @transform_4, window_bounds = array<i64: 64, 1>}]} {
    %c0_i32 = arith.constant 0 : i32
    %0 = arith.cmpi eq, %arg1, %c0_i32 : i32
    %1 = arith.extui %0 : i1 to i32
    %c0_i32_0 = arith.constant 0 : i32
    %2 = arith.cmpi ne, %1, %c0_i32_0 : i32
    scf.if %2 {
      %cst_20 = arith.constant 0xFF800000 : f32
      %30 = vector.broadcast %cst_20 : f32 to vector<64x1xf32>
      %c0_21 = arith.constant 0 : index
      %c0_22 = arith.constant 0 : index
      %31 = vector.load %arg7[%c0_21, %c0_22] : memref<64x1xf32, #tpu.memory_space<vmem>>, vector<64x1xf32>
      tpu.vector_store %arg7[%c0_21, %c0_22], %30 {strides = array<i32>} : memref<64x1xf32, #tpu.memory_space<vmem>>, vector<64x1xf32>,
      %cst_23 = arith.constant 0.000000e+00 : f32
      %32 = vector.broadcast %cst_23 : f32 to vector<64x1xf32>
      %c0_24 = arith.constant 0 : index
      %c0_25 = arith.constant 0 : index
      %33 = vector.load %arg8[%c0_24, %c0_25] : memref<64x1xf32, #tpu.memory_space<vmem>>, vector<64x1xf32>
      tpu.vector_store %arg8[%c0_24, %c0_25], %32 {strides = array<i32>} : memref<64x1xf32, #tpu.memory_space<vmem>>, vector<64x1xf32>,
    } else {
    }
    %c0 = arith.constant 0 : index
    %c0_1 = arith.constant 0 : index
    %3 = vector.load %arg2[%c0, %c0_1] : memref<64x128xf32, #tpu.memory_space<vmem>>, vector<64x128xf32>
    %4 = arith.truncf %3 : vector<64x128xf32> to vector<64x128xbf16>
    %c0_2 = arith.constant 0 : index
    %c0_3 = arith.constant 0 : index
    %5 = vector.load %arg3[%c0_2, %c0_3] : memref<128x128xbf16, #tpu.memory_space<vmem>>, vector<128x128xbf16>
    %cst = arith.constant dense<0.000000e+00> : vector<64x128xf32>
    %6 = tpu.matmul %4, %5, %cst {dimension_numbers = #tpu.dot_dimension_numbers<[1], [0], [0], [1], [0, 0, 1, 1], [], []>} : vector<64x128xbf16>, vector<128x128xbf16>, vector<64x128xf32> -> vector<64x128xf32>
    %c0_4 = arith.constant 0 : index
    %c0_5 = arith.constant 0 : index
    %7 = vector.load %arg4[%c0_4, %c0_5] : memref<1x128xf32, #tpu.memory_space<vmem>>, vector<1x128xf32>
    %8 = vector.broadcast %7 : vector<1x128xf32> to vector<64x128xf32>
    %9 = arith.addf %6, %8 : vector<64x128xf32>
    %c0_6 = arith.constant 0 : index
    %c0_7 = arith.constant 0 : index
    %10 = vector.load %arg5[%c0_6, %c0_7] : memref<64x128xf32, #tpu.memory_space<vmem>>, vector<64x128xf32>
    tpu.vector_store %arg5[%c0_6, %c0_7], %9 {strides = array<i32>} : memref<64x128xf32, #tpu.memory_space<vmem>>, vector<64x128xf32>,
    %c0_8 = arith.constant 0 : index
    %c0_9 = arith.constant 0 : index
    %11 = vector.load %arg7[%c0_8, %c0_9] : memref<64x1xf32, #tpu.memory_space<vmem>>, vector<64x1xf32>
    %cst_10 = arith.constant dense<0xFF800000> : vector<64xf32>
    %12 = vector.multi_reduction <maximumf>, %9, %cst_10 [1] : vector<64x128xf32> to vector<64xf32>
    %13 = vector.shape_cast %12 : vector<64xf32> to vector<64x1xf32>
    %14 = arith.maximumf %11, %13 : vector<64x1xf32>
    %c0_11 = arith.constant 0 : index
    %c0_12 = arith.constant 0 : index
    %15 = vector.load %arg8[%c0_11, %c0_12] : memref<64x1xf32, #tpu.memory_space<vmem>>, vector<64x1xf32>
    %16 = arith.subf %11, %14 : vector<64x1xf32>
    %17 = math.exp %16 : vector<64x1xf32>
    %18 = arith.mulf %15, %17 : vector<64x1xf32>
    %19 = vector.broadcast %14 : vector<64x1xf32> to vector<64x128xf32>
    %20 = arith.subf %9, %19 : vector<64x128xf32>
    %21 = math.exp %20 : vector<64x128xf32>
    %cst_13 = arith.constant dense<0.000000e+00> : vector<64xf32>
    %22 = vector.multi_reduction <add>, %21, %cst_13 [1] : vector<64x128xf32> to vector<64xf32>
    %23 = vector.shape_cast %22 : vector<64xf32> to vector<64x1xf32>
    %24 = arith.addf %18, %23 : vector<64x1xf32>
    %c0_14 = arith.constant 0 : index
    %c0_15 = arith.constant 0 : index
    %25 = vector.load %arg8[%c0_14, %c0_15] : memref<64x1xf32, #tpu.memory_space<vmem>>, vector<64x1xf32>
    tpu.vector_store %arg8[%c0_14, %c0_15], %24 {strides = array<i32>} : memref<64x1xf32, #tpu.memory_space<vmem>>, vector<64x1xf32>,
    %c0_16 = arith.constant 0 : index
    %c0_17 = arith.constant 0 : index
    %26 = vector.load %arg7[%c0_16, %c0_17] : memref<64x1xf32, #tpu.memory_space<vmem>>, vector<64x1xf32>
    tpu.vector_store %arg7[%c0_16, %c0_17], %14 {strides = array<i32>} : memref<64x1xf32, #tpu.memory_space<vmem>>, vector<64x1xf32>,
    %c0_i32_18 = arith.constant 0 : i32
    %27 = arith.cmpi eq, %arg1, %c0_i32_18 : i32
    %28 = arith.extui %27 : i1 to i32
    %c0_i32_19 = arith.constant 0 : i32
    %29 = arith.cmpi ne, %28, %c0_i32_19 : i32
    scf.if %29 {
      %c0_20 = arith.constant 0 : index
      %c0_21 = arith.constant 0 : index
      %30 = vector.load %arg7[%c0_20, %c0_21] : memref<64x1xf32, #tpu.memory_space<vmem>>, vector<64x1xf32>
      %c0_22 = arith.constant 0 : index
      %c0_23 = arith.constant 0 : index
      %31 = vector.load %arg8[%c0_22, %c0_23] : memref<64x1xf32, #tpu.memory_space<vmem>>, vector<64x1xf32>
      %32 = math.log %31 : vector<64x1xf32>
      %33 = arith.addf %30, %32 : vector<64x1xf32>
      %c0_24 = arith.constant 0 : index
      %c0_25 = arith.constant 0 : index
      %34 = vector.load %arg6[%c0_24, %c0_25] : memref<64x1xf32, #tpu.memory_space<vmem>>, vector<64x1xf32>
      tpu.vector_store %arg6[%c0_24, %c0_25], %33 {strides = array<i32>} : memref<64x1xf32, #tpu.memory_space<vmem>>, vector<64x1xf32>,
    } else {
    }
    return
  }
  func.func @transform_0(%arg0: i32, %arg1: i32) -> (i32, i32) {
    %c0_i32 = arith.constant 0 : i32
    %c0_i32_0 = arith.constant 0 : i32
    return %arg0, %c0_i32 : i32, i32
  }
  func.func @transform_1(%arg0: i32, %arg1: i32) -> (i32, i32) {
    %c0_i32 = arith.constant 0 : i32
    %c0_i32_0 = arith.constant 0 : i32
    return %c0_i32, %arg1 : i32, i32
  }
  func.func @transform_2(%arg0: i32, %arg1: i32) -> (i32, i32) {
    %c0_i32 = arith.constant 0 : i32
    %c0_i32_0 = arith.constant 0 : i32
    return %c0_i32, %arg1 : i32, i32
  }
  func.func @transform_3(%arg0: i32, %arg1: i32) -> (i32, i32) {
    %c0_i32 = arith.constant 0 : i32
    return %arg0, %arg1 : i32, i32
  }
  func.func @transform_4(%arg0: i32, %arg1: i32) -> (i32, i32) {
    %c0_i32 = arith.constant 0 : i32
    %c0_i32_0 = arith.constant 0 : i32
    return %arg0, %c0_i32 : i32, i32
  }
}

module attributes {stable_mosaic.version = 11 : i64} {
  func.func @_logsoftmax_finalize_kernel(%arg0: i32, %arg1: i32, %arg2: memref<64x128xf32, #tpu.memory_space<vmem>>, %arg3: memref<64x1xf32, #tpu.memory_space<vmem>>, %arg4: memref<64x128xf32, #tpu.memory_space<vmem>>) attributes {dimension_semantics = [#tpu.dimension_semantics<parallel>, #tpu.dimension_semantics<parallel>], iteration_bounds = array<i64: 1, 1>, scalar_prefetch = 0 : i64, scratch_operands = 0 : i64, tpu.core_type = #tpu.core_type<tc>, window_params = [{transform_indices = @transform_0, window_bounds = array<i64: 64, 128>}, {transform_indices = @transform_1, window_bounds = array<i64: 64, 1>}, {transform_indices = @transform_2, window_bounds = array<i64: 64, 128>}]} {
    %c0 = arith.constant 0 : index
    %c0_0 = arith.constant 0 : index
    %0 = vector.load %arg2[%c0, %c0_0] : memref<64x128xf32, #tpu.memory_space<vmem>>, vector<64x128xf32>
    %c0_1 = arith.constant 0 : index
    %c0_2 = arith.constant 0 : index
    %1 = vector.load %arg3[%c0_1, %c0_2] : memref<64x1xf32, #tpu.memory_space<vmem>>, vector<64x1xf32>
    %2 = vector.broadcast %1 : vector<64x1xf32> to vector<64x128xf32>
    %3 = arith.subf %0, %2 : vector<64x128xf32>
    %c0_3 = arith.constant 0 : index
    %c0_4 = arith.constant 0 : index
    %4 = vector.load %arg4[%c0_3, %c0_4] : memref<64x128xf32, #tpu.memory_space<vmem>>, vector<64x128xf32>
    tpu.vector_store %arg4[%c0_3, %c0_4], %3 {strides = array<i32>} : memref<64x128xf32, #tpu.memory_space<vmem>>, vector<64x128xf32>,
    return
  }
  func.func @transform_0(%arg0: i32, %arg1: i32) -> (i32, i32) {
    %c0_i32 = arith.constant 0 : i32
    return %arg0, %arg1 : i32, i32
  }
  func.func @transform_1(%arg0: i32, %arg1: i32) -> (i32, i32) {
    %c0_i32 = arith.constant 0 : i32
    %c0_i32_0 = arith.constant 0 : i32
    return %arg0, %c0_i32 : i32, i32
  }
  func.func @transform_2(%arg0: i32, %arg1: i32) -> (i32, i32) {
    %c0_i32 = arith.constant 0 : i32
    return %arg0, %arg1 : i32, i32
  }
}

module attributes {stable_mosaic.version = 11 : i64} {
  func.func @_lstm_chunk_kernel(%arg0: i32, %arg1: memref<8x8x512xf32, #tpu.memory_space<vmem>>, %arg2: memref<128x512xbf16, #tpu.memory_space<vmem>>, %arg3: memref<1x512xf32, #tpu.memory_space<vmem>>, %arg4: memref<8x8x128xf32, #tpu.memory_space<vmem>>, %arg5: memref<8x128xf32, #tpu.memory_space<vmem>>, %arg6: memref<8x128xf32, #tpu.memory_space<vmem>>) attributes {dimension_semantics = [#tpu.dimension_semantics<arbitrary>], iteration_bounds = array<i64: 1>, scalar_prefetch = 0 : i64, scratch_operands = 2 : i64, tpu.core_type = #tpu.core_type<tc>, window_params = [{transform_indices = @transform_0, window_bounds = array<i64: 8, 8, 512>}, {pipeline_mode = #tpu.pipeline_mode<synchronous>, transform_indices = @transform_1, window_bounds = array<i64: 128, 512>}, {pipeline_mode = #tpu.pipeline_mode<synchronous>, transform_indices = @transform_2, window_bounds = array<i64: 1, 512>}, {transform_indices = @transform_3, window_bounds = array<i64: 8, 8, 128>}]} {
    %c0_i32 = arith.constant 0 : i32
    %0 = arith.cmpi eq, %arg0, %c0_i32 : i32
    %1 = arith.extui %0 : i1 to i32
    %c0_i32_0 = arith.constant 0 : i32
    %2 = arith.cmpi ne, %1, %c0_i32_0 : i32
    scf.if %2 {
      %cst_104 = arith.constant 0.000000e+00 : f32
      %319 = vector.broadcast %cst_104 : f32 to vector<8x128xf32>
      %c0_105 = arith.constant 0 : index
      %c0_106 = arith.constant 0 : index
      %320 = vector.load %arg5[%c0_105, %c0_106] : memref<8x128xf32, #tpu.memory_space<vmem>>, vector<8x128xf32>
      tpu.vector_store %arg5[%c0_105, %c0_106], %319 {strides = array<i32>} : memref<8x128xf32, #tpu.memory_space<vmem>>, vector<8x128xf32>,
      %cst_107 = arith.constant 0.000000e+00 : f32
      %321 = vector.broadcast %cst_107 : f32 to vector<8x128xf32>
      %c0_108 = arith.constant 0 : index
      %c0_109 = arith.constant 0 : index
      %322 = vector.load %arg6[%c0_108, %c0_109] : memref<8x128xf32, #tpu.memory_space<vmem>>, vector<8x128xf32>
      tpu.vector_store %arg6[%c0_108, %c0_109], %321 {strides = array<i32>} : memref<8x128xf32, #tpu.memory_space<vmem>>, vector<8x128xf32>,
    } else {
    }
    %c0 = arith.constant 0 : index
    %c0_1 = arith.constant 0 : index
    %3 = vector.load %arg5[%c0, %c0_1] : memref<8x128xf32, #tpu.memory_space<vmem>>, vector<8x128xf32>
    %c0_2 = arith.constant 0 : index
    %c0_3 = arith.constant 0 : index
    %4 = vector.load %arg6[%c0_2, %c0_3] : memref<8x128xf32, #tpu.memory_space<vmem>>, vector<8x128xf32>
    %c0_i32_4 = arith.constant 0 : i32
    %5 = arith.index_cast %c0_i32_4 : i32 to index
    %c0_5 = arith.constant 0 : index
    %c0_6 = arith.constant 0 : index
    %6 = vector.load %arg1[%5, %c0_5, %c0_6] : memref<8x8x512xf32, #tpu.memory_space<vmem>>, vector<1x8x512xf32>
    %7 = vector.shape_cast %6 : vector<1x8x512xf32> to vector<8x512xf32>
    %8 = arith.truncf %3 : vector<8x128xf32> to vector<8x128xbf16>
    %c0_7 = arith.constant 0 : index
    %c0_8 = arith.constant 0 : index
    %9 = vector.load %arg2[%c0_7, %c0_8] : memref<128x512xbf16, #tpu.memory_space<vmem>>, vector<128x512xbf16>
    %cst = arith.constant dense<0.000000e+00> : vector<8x512xf32>
    %10 = tpu.matmul %8, %9, %cst {dimension_numbers = #tpu.dot_dimension_numbers<[1], [0], [0], [1], [0, 0, 1, 1], [], []>} : vector<8x128xbf16>, vector<128x512xbf16>, vector<8x512xf32> -> vector<8x512xf32>
    %11 = arith.addf %7, %10 : vector<8x512xf32>
    %c0_9 = arith.constant 0 : index
    %c0_10 = arith.constant 0 : index
    %12 = vector.load %arg3[%c0_9, %c0_10] : memref<1x512xf32, #tpu.memory_space<vmem>>, vector<1x512xf32>
    %13 = vector.broadcast %12 : vector<1x512xf32> to vector<8x512xf32>
    %14 = arith.addf %11, %13 : vector<8x512xf32>
    %15 = vector.extract_strided_slice %14 {offsets = [0, 0], sizes = [8, 128], strides = [1, 1]} : vector<8x512xf32> to vector<8x128xf32>
    %16 = arith.negf %15 : vector<8x128xf32>
    %17 = math.exp %16 : vector<8x128xf32>
    %cst_11 = arith.constant 1.000000e+00 : f32
    %18 = vector.broadcast %cst_11 : f32 to vector<8x128xf32>
    %19 = arith.addf %18, %17 : vector<8x128xf32>
    %20 = arith.divf %18, %19 : vector<8x128xf32>
    %21 = vector.extract_strided_slice %14 {offsets = [0, 128], sizes = [8, 128], strides = [1, 1]} : vector<8x512xf32> to vector<8x128xf32>
    %22 = arith.negf %21 : vector<8x128xf32>
    %23 = math.exp %22 : vector<8x128xf32>
    %cst_12 = arith.constant 1.000000e+00 : f32
    %24 = vector.broadcast %cst_12 : f32 to vector<8x128xf32>
    %25 = arith.addf %24, %23 : vector<8x128xf32>
    %26 = arith.divf %24, %25 : vector<8x128xf32>
    %27 = vector.extract_strided_slice %14 {offsets = [0, 256], sizes = [8, 128], strides = [1, 1]} : vector<8x512xf32> to vector<8x128xf32>
    %28 = math.tanh %27 : vector<8x128xf32>
    %29 = vector.extract_strided_slice %14 {offsets = [0, 384], sizes = [8, 128], strides = [1, 1]} : vector<8x512xf32> to vector<8x128xf32>
    %30 = arith.negf %29 : vector<8x128xf32>
    %31 = math.exp %30 : vector<8x128xf32>
    %cst_13 = arith.constant 1.000000e+00 : f32
    %32 = vector.broadcast %cst_13 : f32 to vector<8x128xf32>
    %33 = arith.addf %32, %31 : vector<8x128xf32>
    %34 = arith.divf %32, %33 : vector<8x128xf32>
    %35 = arith.mulf %26, %4 : vector<8x128xf32>
    %36 = arith.mulf %20, %28 : vector<8x128xf32>
    %37 = arith.addf %35, %36 : vector<8x128xf32>
    %38 = math.tanh %37 : vector<8x128xf32>
    %39 = arith.mulf %34, %38 : vector<8x128xf32>
    %40 = arith.index_cast %c0_i32_4 : i32 to index
    %c0_14 = arith.constant 0 : index
    %c0_15 = arith.constant 0 : index
    %41 = vector.load %arg4[%40, %c0_14, %c0_15] : memref<8x8x128xf32, #tpu.memory_space<vmem>>, vector<1x8x128xf32>
    %42 = vector.shape_cast %41 : vector<1x8x128xf32> to vector<8x128xf32>
    %43 = vector.shape_cast %39 : vector<8x128xf32> to vector<1x8x128xf32>
    tpu.vector_store %arg4[%40, %c0_14, %c0_15], %43 {strides = array<i32>} : memref<8x8x128xf32, #tpu.memory_space<vmem>>, vector<1x8x128xf32>,
    %c1_i32 = arith.constant 1 : i32
    %44 = arith.index_cast %c1_i32 : i32 to index
    %c0_16 = arith.constant 0 : index
    %c0_17 = arith.constant 0 : index
    %45 = vector.load %arg1[%44, %c0_16, %c0_17] : memref<8x8x512xf32, #tpu.memory_space<vmem>>, vector<1x8x512xf32>
    %46 = vector.shape_cast %45 : vector<1x8x512xf32> to vector<8x512xf32>
    %47 = arith.truncf %39 : vector<8x128xf32> to vector<8x128xbf16>
    %c0_18 = arith.constant 0 : index
    %c0_19 = arith.constant 0 : index
    %48 = vector.load %arg2[%c0_18, %c0_19] : memref<128x512xbf16, #tpu.memory_space<vmem>>, vector<128x512xbf16>
    %cst_20 = arith.constant dense<0.000000e+00> : vector<8x512xf32>
    %49 = tpu.matmul %47, %48, %cst_20 {dimension_numbers = #tpu.dot_dimension_numbers<[1], [0], [0], [1], [0, 0, 1, 1], [], []>} : vector<8x128xbf16>, vector<128x512xbf16>, vector<8x512xf32> -> vector<8x512xf32>
    %50 = arith.addf %46, %49 : vector<8x512xf32>
    %c0_21 = arith.constant 0 : index
    %c0_22 = arith.constant 0 : index
    %51 = vector.load %arg3[%c0_21, %c0_22] : memref<1x512xf32, #tpu.memory_space<vmem>>, vector<1x512xf32>
    %52 = vector.broadcast %51 : vector<1x512xf32> to vector<8x512xf32>
    %53 = arith.addf %50, %52 : vector<8x512xf32>
    %54 = vector.extract_strided_slice %53 {offsets = [0, 0], sizes = [8, 128], strides = [1, 1]} : vector<8x512xf32> to vector<8x128xf32>
    %55 = arith.negf %54 : vector<8x128xf32>
    %56 = math.exp %55 : vector<8x128xf32>
    %cst_23 = arith.constant 1.000000e+00 : f32
    %57 = vector.broadcast %cst_23 : f32 to vector<8x128xf32>
    %58 = arith.addf %57, %56 : vector<8x128xf32>
    %59 = arith.divf %57, %58 : vector<8x128xf32>
    %60 = vector.extract_strided_slice %53 {offsets = [0, 128], sizes = [8, 128], strides = [1, 1]} : vector<8x512xf32> to vector<8x128xf32>
    %61 = arith.negf %60 : vector<8x128xf32>
    %62 = math.exp %61 : vector<8x128xf32>
    %cst_24 = arith.constant 1.000000e+00 : f32
    %63 = vector.broadcast %cst_24 : f32 to vector<8x128xf32>
    %64 = arith.addf %63, %62 : vector<8x128xf32>
    %65 = arith.divf %63, %64 : vector<8x128xf32>
    %66 = vector.extract_strided_slice %53 {offsets = [0, 256], sizes = [8, 128], strides = [1, 1]} : vector<8x512xf32> to vector<8x128xf32>
    %67 = math.tanh %66 : vector<8x128xf32>
    %68 = vector.extract_strided_slice %53 {offsets = [0, 384], sizes = [8, 128], strides = [1, 1]} : vector<8x512xf32> to vector<8x128xf32>
    %69 = arith.negf %68 : vector<8x128xf32>
    %70 = math.exp %69 : vector<8x128xf32>
    %cst_25 = arith.constant 1.000000e+00 : f32
    %71 = vector.broadcast %cst_25 : f32 to vector<8x128xf32>
    %72 = arith.addf %71, %70 : vector<8x128xf32>
    %73 = arith.divf %71, %72 : vector<8x128xf32>
    %74 = arith.mulf %65, %37 : vector<8x128xf32>
    %75 = arith.mulf %59, %67 : vector<8x128xf32>
    %76 = arith.addf %74, %75 : vector<8x128xf32>
    %77 = math.tanh %76 : vector<8x128xf32>
    %78 = arith.mulf %73, %77 : vector<8x128xf32>
    %79 = arith.index_cast %c1_i32 : i32 to index
    %c0_26 = arith.constant 0 : index
    %c0_27 = arith.constant 0 : index
    %80 = vector.load %arg4[%79, %c0_26, %c0_27] : memref<8x8x128xf32, #tpu.memory_space<vmem>>, vector<1x8x128xf32>
    %81 = vector.shape_cast %80 : vector<1x8x128xf32> to vector<8x128xf32>
    %82 = vector.shape_cast %78 : vector<8x128xf32> to vector<1x8x128xf32>
    tpu.vector_store %arg4[%79, %c0_26, %c0_27], %82 {strides = array<i32>} : memref<8x8x128xf32, #tpu.memory_space<vmem>>, vector<1x8x128xf32>,
    %c2_i32 = arith.constant 2 : i32
    %83 = arith.index_cast %c2_i32 : i32 to index
    %c0_28 = arith.constant 0 : index
    %c0_29 = arith.constant 0 : index
    %84 = vector.load %arg1[%83, %c0_28, %c0_29] : memref<8x8x512xf32, #tpu.memory_space<vmem>>, vector<1x8x512xf32>
    %85 = vector.shape_cast %84 : vector<1x8x512xf32> to vector<8x512xf32>
    %86 = arith.truncf %78 : vector<8x128xf32> to vector<8x128xbf16>
    %c0_30 = arith.constant 0 : index
    %c0_31 = arith.constant 0 : index
    %87 = vector.load %arg2[%c0_30, %c0_31] : memref<128x512xbf16, #tpu.memory_space<vmem>>, vector<128x512xbf16>
    %cst_32 = arith.constant dense<0.000000e+00> : vector<8x512xf32>
    %88 = tpu.matmul %86, %87, %cst_32 {dimension_numbers = #tpu.dot_dimension_numbers<[1], [0], [0], [1], [0, 0, 1, 1], [], []>} : vector<8x128xbf16>, vector<128x512xbf16>, vector<8x512xf32> -> vector<8x512xf32>
    %89 = arith.addf %85, %88 : vector<8x512xf32>
    %c0_33 = arith.constant 0 : index
    %c0_34 = arith.constant 0 : index
    %90 = vector.load %arg3[%c0_33, %c0_34] : memref<1x512xf32, #tpu.memory_space<vmem>>, vector<1x512xf32>
    %91 = vector.broadcast %90 : vector<1x512xf32> to vector<8x512xf32>
    %92 = arith.addf %89, %91 : vector<8x512xf32>
    %93 = vector.extract_strided_slice %92 {offsets = [0, 0], sizes = [8, 128], strides = [1, 1]} : vector<8x512xf32> to vector<8x128xf32>
    %94 = arith.negf %93 : vector<8x128xf32>
    %95 = math.exp %94 : vector<8x128xf32>
    %cst_35 = arith.constant 1.000000e+00 : f32
    %96 = vector.broadcast %cst_35 : f32 to vector<8x128xf32>
    %97 = arith.addf %96, %95 : vector<8x128xf32>
    %98 = arith.divf %96, %97 : vector<8x128xf32>
    %99 = vector.extract_strided_slice %92 {offsets = [0, 128], sizes = [8, 128], strides = [1, 1]} : vector<8x512xf32> to vector<8x128xf32>
    %100 = arith.negf %99 : vector<8x128xf32>
    %101 = math.exp %100 : vector<8x128xf32>
    %cst_36 = arith.constant 1.000000e+00 : f32
    %102 = vector.broadcast %cst_36 : f32 to vector<8x128xf32>
    %103 = arith.addf %102, %101 : vector<8x128xf32>
    %104 = arith.divf %102, %103 : vector<8x128xf32>
    %105 = vector.extract_strided_slice %92 {offsets = [0, 256], sizes = [8, 128], strides = [1, 1]} : vector<8x512xf32> to vector<8x128xf32>
    %106 = math.tanh %105 : vector<8x128xf32>
    %107 = vector.extract_strided_slice %92 {offsets = [0, 384], sizes = [8, 128], strides = [1, 1]} : vector<8x512xf32> to vector<8x128xf32>
    %108 = arith.negf %107 : vector<8x128xf32>
    %109 = math.exp %108 : vector<8x128xf32>
    %cst_37 = arith.constant 1.000000e+00 : f32
    %110 = vector.broadcast %cst_37 : f32 to vector<8x128xf32>
    %111 = arith.addf %110, %109 : vector<8x128xf32>
    %112 = arith.divf %110, %111 : vector<8x128xf32>
    %113 = arith.mulf %104, %76 : vector<8x128xf32>
    %114 = arith.mulf %98, %106 : vector<8x128xf32>
    %115 = arith.addf %113, %114 : vector<8x128xf32>
    %116 = math.tanh %115 : vector<8x128xf32>
    %117 = arith.mulf %112, %116 : vector<8x128xf32>
    %118 = arith.index_cast %c2_i32 : i32 to index
    %c0_38 = arith.constant 0 : index
    %c0_39 = arith.constant 0 : index
    %119 = vector.load %arg4[%118, %c0_38, %c0_39] : memref<8x8x128xf32, #tpu.memory_space<vmem>>, vector<1x8x128xf32>
    %120 = vector.shape_cast %119 : vector<1x8x128xf32> to vector<8x128xf32>
    %121 = vector.shape_cast %117 : vector<8x128xf32> to vector<1x8x128xf32>
    tpu.vector_store %arg4[%118, %c0_38, %c0_39], %121 {strides = array<i32>} : memref<8x8x128xf32, #tpu.memory_space<vmem>>, vector<1x8x128xf32>,
    %c3_i32 = arith.constant 3 : i32
    %122 = arith.index_cast %c3_i32 : i32 to index
    %c0_40 = arith.constant 0 : index
    %c0_41 = arith.constant 0 : index
    %123 = vector.load %arg1[%122, %c0_40, %c0_41] : memref<8x8x512xf32, #tpu.memory_space<vmem>>, vector<1x8x512xf32>
    %124 = vector.shape_cast %123 : vector<1x8x512xf32> to vector<8x512xf32>
    %125 = arith.truncf %117 : vector<8x128xf32> to vector<8x128xbf16>
    %c0_42 = arith.constant 0 : index
    %c0_43 = arith.constant 0 : index
    %126 = vector.load %arg2[%c0_42, %c0_43] : memref<128x512xbf16, #tpu.memory_space<vmem>>, vector<128x512xbf16>
    %cst_44 = arith.constant dense<0.000000e+00> : vector<8x512xf32>
    %127 = tpu.matmul %125, %126, %cst_44 {dimension_numbers = #tpu.dot_dimension_numbers<[1], [0], [0], [1], [0, 0, 1, 1], [], []>} : vector<8x128xbf16>, vector<128x512xbf16>, vector<8x512xf32> -> vector<8x512xf32>
    %128 = arith.addf %124, %127 : vector<8x512xf32>
    %c0_45 = arith.constant 0 : index
    %c0_46 = arith.constant 0 : index
    %129 = vector.load %arg3[%c0_45, %c0_46] : memref<1x512xf32, #tpu.memory_space<vmem>>, vector<1x512xf32>
    %130 = vector.broadcast %129 : vector<1x512xf32> to vector<8x512xf32>
    %131 = arith.addf %128, %130 : vector<8x512xf32>
    %132 = vector.extract_strided_slice %131 {offsets = [0, 0], sizes = [8, 128], strides = [1, 1]} : vector<8x512xf32> to vector<8x128xf32>
    %133 = arith.negf %132 : vector<8x128xf32>
    %134 = math.exp %133 : vector<8x128xf32>
    %cst_47 = arith.constant 1.000000e+00 : f32
    %135 = vector.broadcast %cst_47 : f32 to vector<8x128xf32>
    %136 = arith.addf %135, %134 : vector<8x128xf32>
    %137 = arith.divf %135, %136 : vector<8x128xf32>
    %138 = vector.extract_strided_slice %131 {offsets = [0, 128], sizes = [8, 128], strides = [1, 1]} : vector<8x512xf32> to vector<8x128xf32>
    %139 = arith.negf %138 : vector<8x128xf32>
    %140 = math.exp %139 : vector<8x128xf32>
    %cst_48 = arith.constant 1.000000e+00 : f32
    %141 = vector.broadcast %cst_48 : f32 to vector<8x128xf32>
    %142 = arith.addf %141, %140 : vector<8x128xf32>
    %143 = arith.divf %141, %142 : vector<8x128xf32>
    %144 = vector.extract_strided_slice %131 {offsets = [0, 256], sizes = [8, 128], strides = [1, 1]} : vector<8x512xf32> to vector<8x128xf32>
    %145 = math.tanh %144 : vector<8x128xf32>
    %146 = vector.extract_strided_slice %131 {offsets = [0, 384], sizes = [8, 128], strides = [1, 1]} : vector<8x512xf32> to vector<8x128xf32>
    %147 = arith.negf %146 : vector<8x128xf32>
    %148 = math.exp %147 : vector<8x128xf32>
    %cst_49 = arith.constant 1.000000e+00 : f32
    %149 = vector.broadcast %cst_49 : f32 to vector<8x128xf32>
    %150 = arith.addf %149, %148 : vector<8x128xf32>
    %151 = arith.divf %149, %150 : vector<8x128xf32>
    %152 = arith.mulf %143, %115 : vector<8x128xf32>
    %153 = arith.mulf %137, %145 : vector<8x128xf32>
    %154 = arith.addf %152, %153 : vector<8x128xf32>
    %155 = math.tanh %154 : vector<8x128xf32>
    %156 = arith.mulf %151, %155 : vector<8x128xf32>
    %157 = arith.index_cast %c3_i32 : i32 to index
    %c0_50 = arith.constant 0 : index
    %c0_51 = arith.constant 0 : index
    %158 = vector.load %arg4[%157, %c0_50, %c0_51] : memref<8x8x128xf32, #tpu.memory_space<vmem>>, vector<1x8x128xf32>
    %159 = vector.shape_cast %158 : vector<1x8x128xf32> to vector<8x128xf32>
    %160 = vector.shape_cast %156 : vector<8x128xf32> to vector<1x8x128xf32>
    tpu.vector_store %arg4[%157, %c0_50, %c0_51], %160 {strides = array<i32>} : memref<8x8x128xf32, #tpu.memory_space<vmem>>, vector<1x8x128xf32>,
    %c4_i32 = arith.constant 4 : i32
    %161 = arith.index_cast %c4_i32 : i32 to index
    %c0_52 = arith.constant 0 : index
    %c0_53 = arith.constant 0 : index
    %162 = vector.load %arg1[%161, %c0_52, %c0_53] : memref<8x8x512xf32, #tpu.memory_space<vmem>>, vector<1x8x512xf32>
    %163 = vector.shape_cast %162 : vector<1x8x512xf32> to vector<8x512xf32>
    %164 = arith.truncf %156 : vector<8x128xf32> to vector<8x128xbf16>
    %c0_54 = arith.constant 0 : index
    %c0_55 = arith.constant 0 : index
    %165 = vector.load %arg2[%c0_54, %c0_55] : memref<128x512xbf16, #tpu.memory_space<vmem>>, vector<128x512xbf16>
    %cst_56 = arith.constant dense<0.000000e+00> : vector<8x512xf32>
    %166 = tpu.matmul %164, %165, %cst_56 {dimension_numbers = #tpu.dot_dimension_numbers<[1], [0], [0], [1], [0, 0, 1, 1], [], []>} : vector<8x128xbf16>, vector<128x512xbf16>, vector<8x512xf32> -> vector<8x512xf32>
    %167 = arith.addf %163, %166 : vector<8x512xf32>
    %c0_57 = arith.constant 0 : index
    %c0_58 = arith.constant 0 : index
    %168 = vector.load %arg3[%c0_57, %c0_58] : memref<1x512xf32, #tpu.memory_space<vmem>>, vector<1x512xf32>
    %169 = vector.broadcast %168 : vector<1x512xf32> to vector<8x512xf32>
    %170 = arith.addf %167, %169 : vector<8x512xf32>
    %171 = vector.extract_strided_slice %170 {offsets = [0, 0], sizes = [8, 128], strides = [1, 1]} : vector<8x512xf32> to vector<8x128xf32>
    %172 = arith.negf %171 : vector<8x128xf32>
    %173 = math.exp %172 : vector<8x128xf32>
    %cst_59 = arith.constant 1.000000e+00 : f32
    %174 = vector.broadcast %cst_59 : f32 to vector<8x128xf32>
    %175 = arith.addf %174, %173 : vector<8x128xf32>
    %176 = arith.divf %174, %175 : vector<8x128xf32>
    %177 = vector.extract_strided_slice %170 {offsets = [0, 128], sizes = [8, 128], strides = [1, 1]} : vector<8x512xf32> to vector<8x128xf32>
    %178 = arith.negf %177 : vector<8x128xf32>
    %179 = math.exp %178 : vector<8x128xf32>
    %cst_60 = arith.constant 1.000000e+00 : f32
    %180 = vector.broadcast %cst_60 : f32 to vector<8x128xf32>
    %181 = arith.addf %180, %179 : vector<8x128xf32>
    %182 = arith.divf %180, %181 : vector<8x128xf32>
    %183 = vector.extract_strided_slice %170 {offsets = [0, 256], sizes = [8, 128], strides = [1, 1]} : vector<8x512xf32> to vector<8x128xf32>
    %184 = math.tanh %183 : vector<8x128xf32>
    %185 = vector.extract_strided_slice %170 {offsets = [0, 384], sizes = [8, 128], strides = [1, 1]} : vector<8x512xf32> to vector<8x128xf32>
    %186 = arith.negf %185 : vector<8x128xf32>
    %187 = math.exp %186 : vector<8x128xf32>
    %cst_61 = arith.constant 1.000000e+00 : f32
    %188 = vector.broadcast %cst_61 : f32 to vector<8x128xf32>
    %189 = arith.addf %188, %187 : vector<8x128xf32>
    %190 = arith.divf %188, %189 : vector<8x128xf32>
    %191 = arith.mulf %182, %154 : vector<8x128xf32>
    %192 = arith.mulf %176, %184 : vector<8x128xf32>
    %193 = arith.addf %191, %192 : vector<8x128xf32>
    %194 = math.tanh %193 : vector<8x128xf32>
    %195 = arith.mulf %190, %194 : vector<8x128xf32>
    %196 = arith.index_cast %c4_i32 : i32 to index
    %c0_62 = arith.constant 0 : index
    %c0_63 = arith.constant 0 : index
    %197 = vector.load %arg4[%196, %c0_62, %c0_63] : memref<8x8x128xf32, #tpu.memory_space<vmem>>, vector<1x8x128xf32>
    %198 = vector.shape_cast %197 : vector<1x8x128xf32> to vector<8x128xf32>
    %199 = vector.shape_cast %195 : vector<8x128xf32> to vector<1x8x128xf32>
    tpu.vector_store %arg4[%196, %c0_62, %c0_63], %199 {strides = array<i32>} : memref<8x8x128xf32, #tpu.memory_space<vmem>>, vector<1x8x128xf32>,
    %c5_i32 = arith.constant 5 : i32
    %200 = arith.index_cast %c5_i32 : i32 to index
    %c0_64 = arith.constant 0 : index
    %c0_65 = arith.constant 0 : index
    %201 = vector.load %arg1[%200, %c0_64, %c0_65] : memref<8x8x512xf32, #tpu.memory_space<vmem>>, vector<1x8x512xf32>
    %202 = vector.shape_cast %201 : vector<1x8x512xf32> to vector<8x512xf32>
    %203 = arith.truncf %195 : vector<8x128xf32> to vector<8x128xbf16>
    %c0_66 = arith.constant 0 : index
    %c0_67 = arith.constant 0 : index
    %204 = vector.load %arg2[%c0_66, %c0_67] : memref<128x512xbf16, #tpu.memory_space<vmem>>, vector<128x512xbf16>
    %cst_68 = arith.constant dense<0.000000e+00> : vector<8x512xf32>
    %205 = tpu.matmul %203, %204, %cst_68 {dimension_numbers = #tpu.dot_dimension_numbers<[1], [0], [0], [1], [0, 0, 1, 1], [], []>} : vector<8x128xbf16>, vector<128x512xbf16>, vector<8x512xf32> -> vector<8x512xf32>
    %206 = arith.addf %202, %205 : vector<8x512xf32>
    %c0_69 = arith.constant 0 : index
    %c0_70 = arith.constant 0 : index
    %207 = vector.load %arg3[%c0_69, %c0_70] : memref<1x512xf32, #tpu.memory_space<vmem>>, vector<1x512xf32>
    %208 = vector.broadcast %207 : vector<1x512xf32> to vector<8x512xf32>
    %209 = arith.addf %206, %208 : vector<8x512xf32>
    %210 = vector.extract_strided_slice %209 {offsets = [0, 0], sizes = [8, 128], strides = [1, 1]} : vector<8x512xf32> to vector<8x128xf32>
    %211 = arith.negf %210 : vector<8x128xf32>
    %212 = math.exp %211 : vector<8x128xf32>
    %cst_71 = arith.constant 1.000000e+00 : f32
    %213 = vector.broadcast %cst_71 : f32 to vector<8x128xf32>
    %214 = arith.addf %213, %212 : vector<8x128xf32>
    %215 = arith.divf %213, %214 : vector<8x128xf32>
    %216 = vector.extract_strided_slice %209 {offsets = [0, 128], sizes = [8, 128], strides = [1, 1]} : vector<8x512xf32> to vector<8x128xf32>
    %217 = arith.negf %216 : vector<8x128xf32>
    %218 = math.exp %217 : vector<8x128xf32>
    %cst_72 = arith.constant 1.000000e+00 : f32
    %219 = vector.broadcast %cst_72 : f32 to vector<8x128xf32>
    %220 = arith.addf %219, %218 : vector<8x128xf32>
    %221 = arith.divf %219, %220 : vector<8x128xf32>
    %222 = vector.extract_strided_slice %209 {offsets = [0, 256], sizes = [8, 128], strides = [1, 1]} : vector<8x512xf32> to vector<8x128xf32>
    %223 = math.tanh %222 : vector<8x128xf32>
    %224 = vector.extract_strided_slice %209 {offsets = [0, 384], sizes = [8, 128], strides = [1, 1]} : vector<8x512xf32> to vector<8x128xf32>
    %225 = arith.negf %224 : vector<8x128xf32>
    %226 = math.exp %225 : vector<8x128xf32>
    %cst_73 = arith.constant 1.000000e+00 : f32
    %227 = vector.broadcast %cst_73 : f32 to vector<8x128xf32>
    %228 = arith.addf %227, %226 : vector<8x128xf32>
    %229 = arith.divf %227, %228 : vector<8x128xf32>
    %230 = arith.mulf %221, %193 : vector<8x128xf32>
    %231 = arith.mulf %215, %223 : vector<8x128xf32>
    %232 = arith.addf %230, %231 : vector<8x128xf32>
    %233 = math.tanh %232 : vector<8x128xf32>
    %234 = arith.mulf %229, %233 : vector<8x128xf32>
    %235 = arith.index_cast %c5_i32 : i32 to index
    %c0_74 = arith.constant 0 : index
    %c0_75 = arith.constant 0 : index
    %236 = vector.load %arg4[%235, %c0_74, %c0_75] : memref<8x8x128xf32, #tpu.memory_space<vmem>>, vector<1x8x128xf32>
    %237 = vector.shape_cast %236 : vector<1x8x128xf32> to vector<8x128xf32>
    %238 = vector.shape_cast %234 : vector<8x128xf32> to vector<1x8x128xf32>
    tpu.vector_store %arg4[%235, %c0_74, %c0_75], %238 {strides = array<i32>} : memref<8x8x128xf32, #tpu.memory_space<vmem>>, vector<1x8x128xf32>,
    %c6_i32 = arith.constant 6 : i32
    %239 = arith.index_cast %c6_i32 : i32 to index
    %c0_76 = arith.constant 0 : index
    %c0_77 = arith.constant 0 : index
    %240 = vector.load %arg1[%239, %c0_76, %c0_77] : memref<8x8x512xf32, #tpu.memory_space<vmem>>, vector<1x8x512xf32>
    %241 = vector.shape_cast %240 : vector<1x8x512xf32> to vector<8x512xf32>
    %242 = arith.truncf %234 : vector<8x128xf32> to vector<8x128xbf16>
    %c0_78 = arith.constant 0 : index
    %c0_79 = arith.constant 0 : index
    %243 = vector.load %arg2[%c0_78, %c0_79] : memref<128x512xbf16, #tpu.memory_space<vmem>>, vector<128x512xbf16>
    %cst_80 = arith.constant dense<0.000000e+00> : vector<8x512xf32>
    %244 = tpu.matmul %242, %243, %cst_80 {dimension_numbers = #tpu.dot_dimension_numbers<[1], [0], [0], [1], [0, 0, 1, 1], [], []>} : vector<8x128xbf16>, vector<128x512xbf16>, vector<8x512xf32> -> vector<8x512xf32>
    %245 = arith.addf %241, %244 : vector<8x512xf32>
    %c0_81 = arith.constant 0 : index
    %c0_82 = arith.constant 0 : index
    %246 = vector.load %arg3[%c0_81, %c0_82] : memref<1x512xf32, #tpu.memory_space<vmem>>, vector<1x512xf32>
    %247 = vector.broadcast %246 : vector<1x512xf32> to vector<8x512xf32>
    %248 = arith.addf %245, %247 : vector<8x512xf32>
    %249 = vector.extract_strided_slice %248 {offsets = [0, 0], sizes = [8, 128], strides = [1, 1]} : vector<8x512xf32> to vector<8x128xf32>
    %250 = arith.negf %249 : vector<8x128xf32>
    %251 = math.exp %250 : vector<8x128xf32>
    %cst_83 = arith.constant 1.000000e+00 : f32
    %252 = vector.broadcast %cst_83 : f32 to vector<8x128xf32>
    %253 = arith.addf %252, %251 : vector<8x128xf32>
    %254 = arith.divf %252, %253 : vector<8x128xf32>
    %255 = vector.extract_strided_slice %248 {offsets = [0, 128], sizes = [8, 128], strides = [1, 1]} : vector<8x512xf32> to vector<8x128xf32>
    %256 = arith.negf %255 : vector<8x128xf32>
    %257 = math.exp %256 : vector<8x128xf32>
    %cst_84 = arith.constant 1.000000e+00 : f32
    %258 = vector.broadcast %cst_84 : f32 to vector<8x128xf32>
    %259 = arith.addf %258, %257 : vector<8x128xf32>
    %260 = arith.divf %258, %259 : vector<8x128xf32>
    %261 = vector.extract_strided_slice %248 {offsets = [0, 256], sizes = [8, 128], strides = [1, 1]} : vector<8x512xf32> to vector<8x128xf32>
    %262 = math.tanh %261 : vector<8x128xf32>
    %263 = vector.extract_strided_slice %248 {offsets = [0, 384], sizes = [8, 128], strides = [1, 1]} : vector<8x512xf32> to vector<8x128xf32>
    %264 = arith.negf %263 : vector<8x128xf32>
    %265 = math.exp %264 : vector<8x128xf32>
    %cst_85 = arith.constant 1.000000e+00 : f32
    %266 = vector.broadcast %cst_85 : f32 to vector<8x128xf32>
    %267 = arith.addf %266, %265 : vector<8x128xf32>
    %268 = arith.divf %266, %267 : vector<8x128xf32>
    %269 = arith.mulf %260, %232 : vector<8x128xf32>
    %270 = arith.mulf %254, %262 : vector<8x128xf32>
    %271 = arith.addf %269, %270 : vector<8x128xf32>
    %272 = math.tanh %271 : vector<8x128xf32>
    %273 = arith.mulf %268, %272 : vector<8x128xf32>
    %274 = arith.index_cast %c6_i32 : i32 to index
    %c0_86 = arith.constant 0 : index
    %c0_87 = arith.constant 0 : index
    %275 = vector.load %arg4[%274, %c0_86, %c0_87] : memref<8x8x128xf32, #tpu.memory_space<vmem>>, vector<1x8x128xf32>
    %276 = vector.shape_cast %275 : vector<1x8x128xf32> to vector<8x128xf32>
    %277 = vector.shape_cast %273 : vector<8x128xf32> to vector<1x8x128xf32>
    tpu.vector_store %arg4[%274, %c0_86, %c0_87], %277 {strides = array<i32>} : memref<8x8x128xf32, #tpu.memory_space<vmem>>, vector<1x8x128xf32>,
    %c7_i32 = arith.constant 7 : i32
    %278 = arith.index_cast %c7_i32 : i32 to index
    %c0_88 = arith.constant 0 : index
    %c0_89 = arith.constant 0 : index
    %279 = vector.load %arg1[%278, %c0_88, %c0_89] : memref<8x8x512xf32, #tpu.memory_space<vmem>>, vector<1x8x512xf32>
    %280 = vector.shape_cast %279 : vector<1x8x512xf32> to vector<8x512xf32>
    %281 = arith.truncf %273 : vector<8x128xf32> to vector<8x128xbf16>
    %c0_90 = arith.constant 0 : index
    %c0_91 = arith.constant 0 : index
    %282 = vector.load %arg2[%c0_90, %c0_91] : memref<128x512xbf16, #tpu.memory_space<vmem>>, vector<128x512xbf16>
    %cst_92 = arith.constant dense<0.000000e+00> : vector<8x512xf32>
    %283 = tpu.matmul %281, %282, %cst_92 {dimension_numbers = #tpu.dot_dimension_numbers<[1], [0], [0], [1], [0, 0, 1, 1], [], []>} : vector<8x128xbf16>, vector<128x512xbf16>, vector<8x512xf32> -> vector<8x512xf32>
    %284 = arith.addf %280, %283 : vector<8x512xf32>
    %c0_93 = arith.constant 0 : index
    %c0_94 = arith.constant 0 : index
    %285 = vector.load %arg3[%c0_93, %c0_94] : memref<1x512xf32, #tpu.memory_space<vmem>>, vector<1x512xf32>
    %286 = vector.broadcast %285 : vector<1x512xf32> to vector<8x512xf32>
    %287 = arith.addf %284, %286 : vector<8x512xf32>
    %288 = vector.extract_strided_slice %287 {offsets = [0, 0], sizes = [8, 128], strides = [1, 1]} : vector<8x512xf32> to vector<8x128xf32>
    %289 = arith.negf %288 : vector<8x128xf32>
    %290 = math.exp %289 : vector<8x128xf32>
    %cst_95 = arith.constant 1.000000e+00 : f32
    %291 = vector.broadcast %cst_95 : f32 to vector<8x128xf32>
    %292 = arith.addf %291, %290 : vector<8x128xf32>
    %293 = arith.divf %291, %292 : vector<8x128xf32>
    %294 = vector.extract_strided_slice %287 {offsets = [0, 128], sizes = [8, 128], strides = [1, 1]} : vector<8x512xf32> to vector<8x128xf32>
    %295 = arith.negf %294 : vector<8x128xf32>
    %296 = math.exp %295 : vector<8x128xf32>
    %cst_96 = arith.constant 1.000000e+00 : f32
    %297 = vector.broadcast %cst_96 : f32 to vector<8x128xf32>
    %298 = arith.addf %297, %296 : vector<8x128xf32>
    %299 = arith.divf %297, %298 : vector<8x128xf32>
    %300 = vector.extract_strided_slice %287 {offsets = [0, 256], sizes = [8, 128], strides = [1, 1]} : vector<8x512xf32> to vector<8x128xf32>
    %301 = math.tanh %300 : vector<8x128xf32>
    %302 = vector.extract_strided_slice %287 {offsets = [0, 384], sizes = [8, 128], strides = [1, 1]} : vector<8x512xf32> to vector<8x128xf32>
    %303 = arith.negf %302 : vector<8x128xf32>
    %304 = math.exp %303 : vector<8x128xf32>
    %cst_97 = arith.constant 1.000000e+00 : f32
    %305 = vector.broadcast %cst_97 : f32 to vector<8x128xf32>
    %306 = arith.addf %305, %304 : vector<8x128xf32>
    %307 = arith.divf %305, %306 : vector<8x128xf32>
    %308 = arith.mulf %299, %271 : vector<8x128xf32>
    %309 = arith.mulf %293, %301 : vector<8x128xf32>
    %310 = arith.addf %308, %309 : vector<8x128xf32>
    %311 = math.tanh %310 : vector<8x128xf32>
    %312 = arith.mulf %307, %311 : vector<8x128xf32>
    %313 = arith.index_cast %c7_i32 : i32 to index
    %c0_98 = arith.constant 0 : index
    %c0_99 = arith.constant 0 : index
    %314 = vector.load %arg4[%313, %c0_98, %c0_99] : memref<8x8x128xf32, #tpu.memory_space<vmem>>, vector<1x8x128xf32>
    %315 = vector.shape_cast %314 : vector<1x8x128xf32> to vector<8x128xf32>
    %316 = vector.shape_cast %312 : vector<8x128xf32> to vector<1x8x128xf32>
    tpu.vector_store %arg4[%313, %c0_98, %c0_99], %316 {strides = array<i32>} : memref<8x8x128xf32, #tpu.memory_space<vmem>>, vector<1x8x128xf32>,
    %c8_i32 = arith.constant 8 : i32
    %c0_100 = arith.constant 0 : index
    %c0_101 = arith.constant 0 : index
    %317 = vector.load %arg5[%c0_100, %c0_101] : memref<8x128xf32, #tpu.memory_space<vmem>>, vector<8x128xf32>
    tpu.vector_store %arg5[%c0_100, %c0_101], %312 {strides = array<i32>} : memref<8x128xf32, #tpu.memory_space<vmem>>, vector<8x128xf32>,
    %c0_102 = arith.constant 0 : index
    %c0_103 = arith.constant 0 : index
    %318 = vector.load %arg6[%c0_102, %c0_103] : memref<8x128xf32, #tpu.memory_space<vmem>>, vector<8x128xf32>
    tpu.vector_store %arg6[%c0_102, %c0_103], %310 {strides = array<i32>} : memref<8x128xf32, #tpu.memory_space<vmem>>, vector<8x128xf32>,
    return
  }
  func.func @transform_0(%arg0: i32) -> (i32, i32, i32) {
    %c0_i32 = arith.constant 0 : i32
    %c0_i32_0 = arith.constant 0 : i32
    %c0_i32_1 = arith.constant 0 : i32
    return %arg0, %c0_i32, %c0_i32_0 : i32, i32, i32
  }
  func.func @transform_1(%arg0: i32) -> (i32, i32) {
    %c0_i32 = arith.constant 0 : i32
    %c0_i32_0 = arith.constant 0 : i32
    %c0_i32_1 = arith.constant 0 : i32
    return %c0_i32, %c0_i32_0 : i32, i32
  }
  func.func @transform_2(%arg0: i32) -> (i32, i32) {
    %c0_i32 = arith.constant 0 : i32
    %c0_i32_0 = arith.constant 0 : i32
    %c0_i32_1 = arith.constant 0 : i32
    return %c0_i32, %c0_i32_0 : i32, i32
  }
  func.func @transform_3(%arg0: i32) -> (i32, i32, i32) {
    %c0_i32 = arith.constant 0 : i32
    %c0_i32_0 = arith.constant 0 : i32
    %c0_i32_1 = arith.constant 0 : i32
    return %arg0, %c0_i32, %c0_i32_0 : i32, i32, i32
  }
}

</mosaic_0001>

<llo_original>
// kernel: lm_forward.7
$region0: #{lm_forward.7}
  #allocation0 [shape = 'u32[]', space=smem, size = 0x4, offset = 0x4, fixed_abs, tag = 'smem constant byte address 0x4 - core index']
  #allocation1 [shape = 'u32[144,128]{1,0:T(1,128)}', space=vmem, size = 0x12000, scoped, tag = 'internal scratch']
  %s0 = inlined_call_operand.vmem [shape: f32[64,128], index: 0, kind: input, shape index: {}, may-alias: {0,2}]
  %s1 = inlined_call_operand.vmem [shape: f32[64,1], index: 1, kind: input, shape index: {}]
  %s2 = inlined_call_operand.vmem [shape: f32[64,128], index: 2, kind: output, shape index: {}, may-alias: {0,2}]
  %s3 = sld [smem:[#allocation0]]
  $region18: #{lm_forward.7} parent=0
    _
  %s5 = ssub.s32 1, %s3
  %s6 = scalar_select 0, %s5, %s3
  // Predicated region
  $region2: #{lm_forward.7} parent=0 // pred_check
    _
  $region3: #{lm_forward.7} parent=0 // pred_check_branch
    %8 = sbr.rel (0) target = $region5
  $region4: #{lm_forward.7} parent=0 // pred_region
    _
  $region5: #{lm_forward.7} parent=0 // pred_fallthru
    _
  // Predicated region
  $region6: #{lm_forward.7} parent=0 // pred_check
    _
  $region7: #{lm_forward.7} parent=0 // pred_check_branch
    %10 = sbr.rel (0) target = $region9
  $region8: #{lm_forward.7} parent=0 // pred_region
    _
  $region9: #{lm_forward.7} parent=0 // pred_fallthru
    _
  %v11 = vld [vmem:[%s0] sm:$0xff]
  %v12 = vld [vmem:[%s0 + $0x8] sm:$0xff]
  %v13 = vld [vmem:[%s0 + $0x10] sm:$0xff]
  %v14 = vld [vmem:[%s0 + $0x18] sm:$0xff]
  %v15 = vld [vmem:[%s0 + $0x20] sm:$0xff]
  %v16 = vld [vmem:[%s0 + $0x28] sm:$0xff]
  %v17 = vld [vmem:[%s0 + $0x30] sm:$0xff]
  %v18 = vld [vmem:[%s0 + $0x38] sm:$0xff]
  %v19 = vld [vmem:[%s1] sm:$0xff]
  %v20 = vld [vmem:[%s1 + $0x8] sm:$0xff]
  %v21 = vld [vmem:[%s1 + $0x10] sm:$0xff]
  %v22 = vld [vmem:[%s1 + $0x18] sm:$0xff]
  %v23 = vld [vmem:[%s1 + $0x20] sm:$0xff]
  %v24 = vld [vmem:[%s1 + $0x28] sm:$0xff]
  %v25 = vld [vmem:[%s1 + $0x30] sm:$0xff]
  %v26 = vld [vmem:[%s1 + $0x38] sm:$0xff]
  %28 = vset.pattern.permute.xlu0 0
  %29 = vperm.xlu0 %28, %v19
  %v30 = vpop.permute.xlu0 %29
  %33 = vset.pattern.permute.xlu0 0
  %34 = vperm.xlu0 %33, %v20
  %v35 = vpop.permute.xlu0 %34
  %38 = vset.pattern.permute.xlu0 0
  %39 = vperm.xlu0 %38, %v21
  %v40 = vpop.permute.xlu0 %39
  %43 = vset.pattern.permute.xlu0 0
  %44 = vperm.xlu0 %43, %v22
  %v45 = vpop.permute.xlu0 %44
  %48 = vset.pattern.permute.xlu0 0
  %49 = vperm.xlu0 %48, %v23
  %v50 = vpop.permute.xlu0 %49
  %53 = vset.pattern.permute.xlu0 0
  %54 = vperm.xlu0 %53, %v24
  %v55 = vpop.permute.xlu0 %54
  %58 = vset.pattern.permute.xlu0 0
  %59 = vperm.xlu0 %58, %v25
  %v60 = vpop.permute.xlu0 %59
  %63 = vset.pattern.permute.xlu0 0
  %64 = vperm.xlu0 %63, %v26
  %v65 = vpop.permute.xlu0 %64
  %v67 = vsub.f32 %v11, %v30
  %v68 = vsub.f32 %v12, %v35
  %v69 = vsub.f32 %v13, %v40
  %v70 = vsub.f32 %v14, %v45
  %v71 = vsub.f32 %v15, %v50
  %v72 = vsub.f32 %v16, %v55
  %v73 = vsub.f32 %v17, %v60
  %v74 = vsub.f32 %v18, %v65
  %75 = vst [vmem:[%s2] sm:$0xff] %v67
  %76 = vst [vmem:[%s2 + $0x8] sm:$0xff] %v68
  %77 = vst [vmem:[%s2 + $0x10] sm:$0xff] %v69
  %78 = vst [vmem:[%s2 + $0x18] sm:$0xff] %v70
  %79 = vst [vmem:[%s2 + $0x20] sm:$0xff] %v71
  %80 = vst [vmem:[%s2 + $0x28] sm:$0xff] %v72
  %81 = vst [vmem:[%s2 + $0x30] sm:$0xff] %v73
  %82 = vst [vmem:[%s2 + $0x38] sm:$0xff] %v74
  // Predicated region
  $region10: #{lm_forward.7} parent=0 // pred_check
    _
  $region11: #{lm_forward.7} parent=0 // pred_check_branch
    %84 = sbr.rel (0) target = $region13
  $region12: #{lm_forward.7} parent=0 // pred_region
    _
  $region13: #{lm_forward.7} parent=0 // pred_fallthru
    _
  // Predicated region
  $region14: #{lm_forward.7} parent=0 // pred_check
    _
  $region15: #{lm_forward.7} parent=0 // pred_check_branch
    %86 = sbr.rel (0) target = $region17
  $region16: #{lm_forward.7} parent=0 // pred_region
    _
  $region17: #{lm_forward.7} parent=0 // pred_fallthru
    _

// kernel: lm_forward.6
$region0: #{lm_forward.6}
  #allocation0 [shape = 'u32[]', space=smem, size = 0x4, offset = 0x4, fixed_abs, tag = 'smem constant byte address 0x4 - core index']
  #allocation1 [shape = 'u32[144,128]{1,0:T(1,128)}', space=vmem, size = 0x12000, scoped, tag = 'internal scratch']
  #allocation2 [shape = 'f32[64,1]{1,0:T(8,128)}', space=vmem, size = 0x8000, scoped, tag = 'scratch operand']
  #allocation3 [shape = 'f32[64,1]{1,0:T(8,128)}', space=vmem, size = 0x8000, scoped, tag = 'scratch operand']
  %s0 = inlined_call_operand.vmem [shape: f32[64,128], index: 0, kind: input, shape index: {}]
  %s1 = inlined_call_operand.vmem [shape: bf16[128,128], index: 1, kind: input, shape index: {}]
  %s2 = inlined_call_operand.vmem [shape: f32[1,128], index: 2, kind: input, shape index: {}]
  %s3 = inlined_call_operand.vmem [shape: f32[64,128], index: 3, kind: output, shape index: {0}]
  %s4 = inlined_call_operand.vmem [shape: f32[64,1], index: 4, kind: output, shape index: {1}]
  %5 = xla_tuple %s3, %s4
  %s6 = sld [smem:[#allocation0]]
  $region38: #{lm_forward.6} parent=0
    _
  %s8 = ssub.s32 1, %s6
  %s9 = scalar_select 0, %s8, %s6
  // Predicated region
  $region2: #{lm_forward.6} parent=0 // pred_check
    _
  $region3: #{lm_forward.6} parent=0 // pred_check_branch
    %11 = sbr.rel (0) target = $region5
  $region4: #{lm_forward.6} parent=0 // pred_region
    _
  $region5: #{lm_forward.6} parent=0 // pred_fallthru
    _
  // Predicated region
  $region6: #{lm_forward.6} parent=0 // pred_check
    _
  $region7: #{lm_forward.6} parent=0 // pred_check_branch
    %13 = sbr.rel (0) target = $region9
  $region8: #{lm_forward.6} parent=0 // pred_region
    _
  $region9: #{lm_forward.6} parent=0 // pred_fallthru
    _
  // Predicated region
  $region10: #{lm_forward.6} parent=0 // pred_check
    _
  $region11: #{lm_forward.6} parent=0 // pred_check_branch
    %15 = sbr.rel (0) target = $region13
  $region12: #{lm_forward.6} parent=0 // pred_region
    _
  $region13: #{lm_forward.6} parent=0 // pred_fallthru
    _
  %p17 = scmp.eq.s32.totalorder 0, 0
  // Predicated region
  $region14: #{lm_forward.6} parent=0 // pred_check
    %p18 = pneg %p17
  $region15: #{lm_forward.6} parent=0 // pred_check_branch
    %20 = sbr.rel (%p18) target = $region17
  $region16: #{lm_forward.6} parent=0 // pred_region
    %vm21 = vcmask 7168
    %22 = vst.msk [vmem:[#allocation2] sm:$0xff] %vm21, -inf
    %23 = vst.msk [vmem:[#allocation2 + $0x8] sm:$0xff] %vm21, -inf
    %24 = vst.msk [vmem:[#allocation2 + $0x10] sm:$0xff] %vm21, -inf
    %25 = vst.msk [vmem:[#allocation2 + $0x18] sm:$0xff] %vm21, -inf
    %26 = vst.msk [vmem:[#allocation2 + $0x20] sm:$0xff] %vm21, -inf
    %27 = vst.msk [vmem:[#allocation2 + $0x28] sm:$0xff] %vm21, -inf
    %28 = vst.msk [vmem:[#allocation2 + $0x30] sm:$0xff] %vm21, -inf
    %29 = vst.msk [vmem:[#allocation2 + $0x38] sm:$0xff] %vm21, -inf
    %30 = vst.msk [vmem:[#allocation3] sm:$0xff] %vm21, 0.0
    %31 = vst.msk [vmem:[#allocation3 + $0x8] sm:$0xff] %vm21, 0.0
    %32 = vst.msk [vmem:[#allocation3 + $0x10] sm:$0xff] %vm21, 0.0
    %33 = vst.msk [vmem:[#allocation3 + $0x18] sm:$0xff] %vm21, 0.0
    %34 = vst.msk [vmem:[#allocation3 + $0x20] sm:$0xff] %vm21, 0.0
    %35 = vst.msk [vmem:[#allocation3 + $0x28] sm:$0xff] %vm21, 0.0
    %36 = vst.msk [vmem:[#allocation3 + $0x30] sm:$0xff] %vm21, 0.0
    %37 = vst.msk [vmem:[#allocation3 + $0x38] sm:$0xff] %vm21, 0.0
  $region17: #{lm_forward.6} parent=0 // pred_fallthru
    _
  %v38 = vld [vmem:[%s0] sm:$0xff]
  %v39 = vld [vmem:[%s0 + $0x8] sm:$0xff]
  %v40 = vld [vmem:[%s0 + $0x10] sm:$0xff]
  %v41 = vld [vmem:[%s0 + $0x18] sm:$0xff]
  %v42 = vld [vmem:[%s0 + $0x20] sm:$0xff]
  %v43 = vld [vmem:[%s0 + $0x28] sm:$0xff]
  %v44 = vld [vmem:[%s0 + $0x30] sm:$0xff]
  %v45 = vld [vmem:[%s0 + $0x38] sm:$0xff]
  %v46 = vpack.c.bf16 %v39, %v38
  %v47 = vpack.c.bf16 %v41, %v40
  %v48 = vpack.c.bf16 %v43, %v42
  %v49 = vpack.c.bf16 %v45, %v44
  %v50 = vld [vmem:[%s1] sm:$0xf]
  %v51 = vld [vmem:[%s1 + $0x4] sm:$0xf]
  %v52 = vld [vmem:[%s1 + $0x8] sm:$0xf]
  %v53 = vld [vmem:[%s1 + $0xc] sm:$0xf]
  %v54 = vld [vmem:[%s1 + $0x10] sm:$0xf]
  %v55 = vld [vmem:[%s1 + $0x14] sm:$0xf]
  %v56 = vld [vmem:[%s1 + $0x18] sm:$0xf]
  %v57 = vld [vmem:[%s1 + $0x1c] sm:$0xf]
  %v58 = vld [vmem:[%s1 + $0x20] sm:$0xf]
  %v59 = vld [vmem:[%s1 + $0x24] sm:$0xf]
  %v60 = vld [vmem:[%s1 + $0x28] sm:$0xf]
  %v61 = vld [vmem:[%s1 + $0x2c] sm:$0xf]
  %v62 = vld [vmem:[%s1 + $0x30] sm:$0xf]
  %v63 = vld [vmem:[%s1 + $0x34] sm:$0xf]
  %v64 = vld [vmem:[%s1 + $0x38] sm:$0xf]
  %v65 = vld [vmem:[%s1 + $0x3c] sm:$0xf]
  %v66 = vld [vmem:[%s2] sm:$0x1]
  %v68 = vlaneseq
  %v69 = vshrl.u32 %v68, 7
  %v70 = vsub.s32 0, %v69
  %v71 = vrot.slane %v66, %v70
  %v89 = vunpack.c.l.b16 %v50
  %v90 = vunpack.c.l.b16 %v51
  %v91 = vunpack.c.l.b16 %v52
  %v92 = vunpack.c.l.b16 %v53
  %v93 = vunpack.c.l.b16 %v54
  %v94 = vunpack.c.l.b16 %v55
  %v95 = vunpack.c.l.b16 %v56
  %v96 = vunpack.c.l.b16 %v57
  %v97 = vunpack.c.l.b16 %v58
  %v98 = vunpack.c.l.b16 %v59
  %v99 = vunpack.c.l.b16 %v60
  %v100 = vunpack.c.l.b16 %v61
  %v101 = vunpack.c.l.b16 %v62
  %v102 = vunpack.c.l.b16 %v63
  %v103 = vunpack.c.l.b16 %v64
  %v104 = vunpack.c.l.b16 %v65
  %v105 = vpack.c.b16 %v90, %v89
  %v106 = vpack.c.b16 %v92, %v91
  %v107 = vpack.c.b16 %v94, %v93
  %v108 = vpack.c.b16 %v96, %v95
  %v109 = vpack.c.b16 %v98, %v97
  %v110 = vpack.c.b16 %v100, %v99
  %v111 = vpack.c.b16 %v102, %v101
  %v112 = vpack.c.b16 %v104, %v103
  %121 = vmatprep.subr.bf16.mxu0 0
  %122 = vmatpush1.bf16.msra.mxu0 %v112
  %123 = vmatprep.subr.bf16.mxu0 0
  %124 = vmatpush1.bf16.msra.mxu0 %v111
  %125 = vmatprep.subr.bf16.mxu0 0
  %126 = vmatpush1.bf16.msra.mxu0 %v110
  %127 = vmatprep.subr.bf16.mxu0 0
  %128 = vmatpush1.bf16.msra.mxu0 %v109
  %129 = vmatprep.subr.bf16.mxu0 0
  %130 = vmatpush1.bf16.msra.mxu0 %v108
  %131 = vmatprep.subr.bf16.mxu0 0
  %132 = vmatpush1.bf16.msra.mxu0 %v107
  %133 = vmatprep.subr.bf16.mxu0 0
  %134 = vmatpush1.bf16.msra.mxu0 %v106
  %135 = vmatprep.subr.bf16.mxu0 0
  %136 = vmatpush1.bf16.msra.mxu0 %v105
  %137 = vmatprep.subr.bf16.mxu0 0
  %138 = vmatpush2.bf16.msra.mxu0 0
  %139 = vmatprep.subr.bf16.mxu0 0
  %140 = vmatpush2.bf16.msra.mxu0 0
  %141 = vmatprep.subr.bf16.mxu0 0
  %142 = vmatpush2.bf16.msra.mxu0 0
  %143 = vmatprep.subr.bf16.mxu0 0
  %144 = vmatpush2.bf16.msra.mxu0 0
  %145 = vmatprep.subr.bf16.mxu0 0
  %146 = vmatpush2.bf16.msra.mxu0 0
  %147 = vmatprep.subr.bf16.mxu0 0
  %148 = vmatpush2.bf16.msra.mxu0 0
  %149 = vmatprep.subr.bf16.mxu0 0
  %150 = vmatpush2.bf16.msra.mxu0 0
  %151 = vmatprep.subr.bf16.mxu0 0
  %152 = vmatpush2.bf16.msra.mxu0 0
  %153 = vmatprep.mubr.bf16.mxu0 0
  %154 = vmatmul.mubr.bf16.gmra.mxu0 %v46
  %v155 = vpop.f32.mrf.mxu0
  %v156 = vadd.f32 %v71, %v155
  %v157 = vpop.f32.mrf.mxu0
  %v158 = vpop.f32.mrf.mxu0
  %v159 = vadd.f32 %v71, %v158
  %v160 = vpop.f32.mrf.mxu0
  %161 = vmatprep.mubr.bf16.mxu0 0
  %162 = vmatmul.mubr.bf16.gmra.mxu0 %v47
  %v163 = vpop.f32.mrf.mxu0
  %v164 = vadd.f32 %v71, %v163
  %v165 = vpop.f32.mrf.mxu0
  %v166 = vpop.f32.mrf.mxu0
  %v167 = vadd.f32 %v71, %v166
  %v168 = vpop.f32.mrf.mxu0
  %169 = vmatprep.mubr.bf16.mxu0 0
  %170 = vmatmul.mubr.bf16.gmra.mxu0 %v48
  %v171 = vpop.f32.mrf.mxu0
  %v172 = vadd.f32 %v71, %v171
  %v173 = vpop.f32.mrf.mxu0
  %v174 = vpop.f32.mrf.mxu0
  %v175 = vadd.f32 %v71, %v174
  %v176 = vpop.f32.mrf.mxu0
  %177 = vmatprep.mubr.bf16.mxu0 0
  %178 = vmatmul.mubr.bf16.gmra.mxu0 %v49
  %v179 = vpop.f32.mrf.mxu0
  %v180 = vadd.f32 %v71, %v179
  %v181 = vpop.f32.mrf.mxu0
  %v182 = vpop.f32.mrf.mxu0
  %v183 = vadd.f32 %v71, %v182
  %v184 = vpop.f32.mrf.mxu0
  %185 = vdwg.mxu0
  %186 = vst [vmem:[%s3] sm:$0xff] %v156
  %187 = vst [vmem:[%s3 + $0x8] sm:$0xff] %v159
  %188 = vst [vmem:[%s3 + $0x10] sm:$0xff] %v164
  %189 = vst [vmem:[%s3 + $0x18] sm:$0xff] %v167
  %190 = vst [vmem:[%s3 + $0x20] sm:$0xff] %v172
  %191 = vst [vmem:[%s3 + $0x28] sm:$0xff] %v175
  %192 = vst [vmem:[%s3 + $0x30] sm:$0xff] %v180
  %193 = vst [vmem:[%s3 + $0x38] sm:$0xff] %v183
  %v194 = vld [vmem:[#allocation2] sm:$0xff]
  %v195 = vld [vmem:[#allocation2 + $0x8] sm:$0xff]
  %v196 = vld [vmem:[#allocation2 + $0x10] sm:$0xff]
  %v197 = vld [vmem:[#allocation2 + $0x18] sm:$0xff]
  %v198 = vld [vmem:[#allocation2 + $0x20] sm:$0xff]
  %v199 = vld [vmem:[#allocation2 + $0x28] sm:$0xff]
  %v200 = vld [vmem:[#allocation2 + $0x30] sm:$0xff]
  %v201 = vld [vmem:[#allocation2 + $0x38] sm:$0xff]
  %202 = vmax.xlane.f32.xlu0 %v156
  %v203 = vpop.xlane.xlu0 %202
  %204 = vmax.xlane.f32.xlu0 %v159
  %v205 = vpop.xlane.xlu0 %204
  %206 = vmax.xlane.f32.xlu0 %v164
  %v207 = vpop.xlane.xlu0 %206
  %208 = vmax.xlane.f32.xlu0 %v167
  %v209 = vpop.xlane.xlu0 %208
  %210 = vmax.xlane.f32.xlu0 %v172
  %v211 = vpop.xlane.xlu0 %210
  %212 = vmax.xlane.f32.xlu0 %v175
  %v213 = vpop.xlane.xlu0 %212
  %214 = vmax.xlane.f32.xlu0 %v180
  %v215 = vpop.xlane.xlu0 %214
  %216 = vmax.xlane.f32.xlu0 %v183
  %v217 = vpop.xlane.xlu0 %216
  %v218 = vmax.f32 %v194, %v203
  %v219 = vmax.f32 %v195, %v205
  %v220 = vmax.f32 %v196, %v207
  %v221 = vmax.f32 %v197, %v209
  %v222 = vmax.f32 %v198, %v211
  %v223 = vmax.f32 %v199, %v213
  %v224 = vmax.f32 %v200, %v215
  %v225 = vmax.f32 %v201, %v217
  %v226 = vld [vmem:[#allocation3] sm:$0xff]
  %v227 = vld [vmem:[#allocation3 + $0x8] sm:$0xff]
  %v228 = vld [vmem:[#allocation3 + $0x10] sm:$0xff]
  %v229 = vld [vmem:[#allocation3 + $0x18] sm:$0xff]
  %v230 = vld [vmem:[#allocation3 + $0x20] sm:$0xff]
  %v231 = vld [vmem:[#allocation3 + $0x28] sm:$0xff]
  %v232 = vld [vmem:[#allocation3 + $0x30] sm:$0xff]
  %v233 = vld [vmem:[#allocation3 + $0x38] sm:$0xff]
  %v234 = vsub.f32 %v194, %v218
  %v235 = vsub.f32 %v195, %v219
  %v236 = vsub.f32 %v196, %v220
  %v237 = vsub.f32 %v197, %v221
  %v238 = vsub.f32 %v198, %v222
  %v239 = vsub.f32 %v199, %v223
  %v240 = vsub.f32 %v200, %v224
  %v241 = vsub.f32 %v201, %v225
  %v242 = vmul.f32 %v234, 1.442695
  %v243 = vpow.pop %v242
  %v244 = vmul.f32 %v235, 1.442695
  %v245 = vpow.pop %v244
  %v246 = vmul.f32 %v236, 1.442695
  %v247 = vpow.pop %v246
  %v248 = vmul.f32 %v237, 1.442695
  %v249 = vpow.pop %v248
  %v250 = vmul.f32 %v238, 1.442695
  %v251 = vpow.pop %v250
  %v252 = vmul.f32 %v239, 1.442695
  %v253 = vpow.pop %v252
  %v254 = vmul.f32 %v240, 1.442695
  %v255 = vpow.pop %v254
  %v256 = vmul.f32 %v241, 1.442695
  %v257 = vpow.pop %v256
  %v258 = vmul.f32 %v226, %v243
  %v259 = vmul.f32 %v227, %v245
  %v260 = vmul.f32 %v228, %v247
  %v261 = vmul.f32 %v229, %v249
  %v262 = vmul.f32 %v230, %v251
  %v263 = vmul.f32 %v231, %v253
  %v264 = vmul.f32 %v232, %v255
  %v265 = vmul.f32 %v233, %v257
  %267 = vset.pattern.permute.xlu0 0
  %268 = vperm.xlu0 %267, %v218
  %v269 = vpop.permute.xlu0 %268
  %272 = vset.pattern.permute.xlu0 0
  %273 = vperm.xlu0 %272, %v219
  %v274 = vpop.permute.xlu0 %273
  %277 = vset.pattern.permute.xlu0 0
  %278 = vperm.xlu0 %277, %v220
  %v279 = vpop.permute.xlu0 %278
  %282 = vset.pattern.permute.xlu0 0
  %283 = vperm.xlu0 %282, %v221
  %v284 = vpop.permute.xlu0 %283
  %287 = vset.pattern.permute.xlu0 0
  %288 = vperm.xlu0 %287, %v222
  %v289 = vpop.permute.xlu0 %288
  %292 = vset.pattern.permute.xlu0 0
  %293 = vperm.xlu0 %292, %v223
  %v294 = vpop.permute.xlu0 %293
  %297 = vset.pattern.permute.xlu0 0
  %298 = vperm.xlu0 %297, %v224
  %v299 = vpop.permute.xlu0 %298
  %302 = vset.pattern.permute.xlu0 0
  %303 = vperm.xlu0 %302, %v225
  %v304 = vpop.permute.xlu0 %303
  %v306 = vsub.f32 %v156, %v269
  %v307 = vsub.f32 %v159, %v274
  %v308 = vsub.f32 %v164, %v279
  %v309 = vsub.f32 %v167, %v284
  %v310 = vsub.f32 %v172, %v289
  %v311 = vsub.f32 %v175, %v294
  %v312 = vsub.f32 %v180, %v299
  %v313 = vsub.f32 %v183, %v304
  %v314 = vmul.f32 %v306, 1.442695
  %v315 = vpow.pop %v314
  %v316 = vmul.f32 %v307, 1.442695
  %v317 = vpow.pop %v316
  %v318 = vmul.f32 %v308, 1.442695
  %v319 = vpow.pop %v318
  %v320 = vmul.f32 %v309, 1.442695
  %v321 = vpow.pop %v320
  %v322 = vmul.f32 %v310, 1.442695
  %v323 = vpow.pop %v322
  %v324 = vmul.f32 %v311, 1.442695
  %v325 = vpow.pop %v324
  %v326 = vmul.f32 %v312, 1.442695
  %v327 = vpow.pop %v326
  %v328 = vmul.f32 %v313, 1.442695
  %v329 = vpow.pop %v328
  %330 = vadd.xlane.f32.xlu0 %v315
  %v331 = vpop.xlane.xlu0 %330
  %332 = vadd.xlane.f32.xlu0 %v317
  %v333 = vpop.xlane.xlu0 %332
  %334 = vadd.xlane.f32.xlu0 %v319
  %v335 = vpop.xlane.xlu0 %334
  %336 = vadd.xlane.f32.xlu0 %v321
  %v337 = vpop.xlane.xlu0 %336
  %338 = vadd.xlane.f32.xlu0 %v323
  %v339 = vpop.xlane.xlu0 %338
  %340 = vadd.xlane.f32.xlu0 %v325
  %v341 = vpop.xlane.xlu0 %340
  %342 = vadd.xlane.f32.xlu0 %v327
  %v343 = vpop.xlane.xlu0 %342
  %344 = vadd.xlane.f32.xlu0 %v329
  %v345 = vpop.xlane.xlu0 %344
  %v346 = vadd.f32 %v258, %v331
  %v347 = vadd.f32 %v259, %v333
  %v348 = vadd.f32 %v260, %v335
  %v349 = vadd.f32 %v261, %v337
  %v350 = vadd.f32 %v262, %v339
  %v351 = vadd.f32 %v263, %v341
  %v352 = vadd.f32 %v264, %v343
  %v353 = vadd.f32 %v265, %v345
  %vm354 = vcmask 7168
  %355 = vst.msk [vmem:[#allocation3] sm:$0xff] %vm354, %v346
  %356 = vst.msk [vmem:[#allocation3 + $0x8] sm:$0xff] %vm354, %v347
  %357 = vst.msk [vmem:[#allocation3 + $0x10] sm:$0xff] %vm354, %v348
  %358 = vst.msk [vmem:[#allocation3 + $0x18] sm:$0xff] %vm354, %v349
  %359 = vst.msk [vmem:[#allocation3 + $0x20] sm:$0xff] %vm354, %v350
  %360 = vst.msk [vmem:[#allocation3 + $0x28] sm:$0xff] %vm354, %v351
  %361 = vst.msk [vmem:[#allocation3 + $0x30] sm:$0xff] %vm354, %v352
  %362 = vst.msk [vmem:[#allocation3 + $0x38] sm:$0xff] %vm354, %v353
  %363 = vst.msk [vmem:[#allocation2] sm:$0xff] %vm354, %v218
  %364 = vst.msk [vmem:[#allocation2 + $0x8] sm:$0xff] %vm354, %v219
  %365 = vst.msk [vmem:[#allocation2 + $0x10] sm:$0xff] %vm354, %v220
  %366 = vst.msk [vmem:[#allocation2 + $0x18] sm:$0xff] %vm354, %v221
  %367 = vst.msk [vmem:[#allocation2 + $0x20] sm:$0xff] %vm354, %v222
  %368 = vst.msk [vmem:[#allocation2 + $0x28] sm:$0xff] %vm354, %v223
  %369 = vst.msk [vmem:[#allocation2 + $0x30] sm:$0xff] %vm354, %v224
  %370 = vst.msk [vmem:[#allocation2 + $0x38] sm:$0xff] %vm354, %v225
  // Predicated region
  $region18: #{lm_forward.6} parent=0 // pred_check
    %p371 = pneg %p17
  $region19: #{lm_forward.6} parent=0 // pred_check_branch
    %373 = sbr.rel (%p371) target = $region21
  $region20: #{lm_forward.6} parent=0 // pred_region
    %v374 = vld [vmem:[#allocation2] sm:$0xff]
    %v375 = vld [vmem:[#allocation2 + $0x8] sm:$0xff]
    %v376 = vld [vmem:[#allocation2 + $0x10] sm:$0xff]
    %v377 = vld [vmem:[#allocation2 + $0x18] sm:$0xff]
    %v378 = vld [vmem:[#allocation2 + $0x20] sm:$0xff]
    %v379 = vld [vmem:[#allocation2 + $0x28] sm:$0xff]
    %v380 = vld [vmem:[#allocation2 + $0x30] sm:$0xff]
    %v381 = vld [vmem:[#allocation2 + $0x38] sm:$0xff]
    %v382 = vld [vmem:[#allocation3] sm:$0xff]
    %v383 = vld [vmem:[#allocation3 + $0x8] sm:$0xff]
    %v384 = vld [vmem:[#allocation3 + $0x10] sm:$0xff]
    %v385 = vld [vmem:[#allocation3 + $0x18] sm:$0xff]
    %v386 = vld [vmem:[#allocation3 + $0x20] sm:$0xff]
    %v387 = vld [vmem:[#allocation3 + $0x28] sm:$0xff]
    %v388 = vld [vmem:[#allocation3 + $0x30] sm:$0xff]
    %v389 = vld [vmem:[#allocation3 + $0x38] sm:$0xff]
    %v390 = vlog2.pop %v382
    %v391 = vmul.f32 %v390, 0.6931472
    %v392 = vlog2.pop %v383
    %v393 = vmul.f32 %v392, 0.6931472
    %v394 = vlog2.pop %v384
    %v395 = vmul.f32 %v394, 0.6931472
    %v396 = vlog2.pop %v385
    %v397 = vmul.f32 %v396, 0.6931472
    %v398 = vlog2.pop %v386
    %v399 = vmul.f32 %v398, 0.6931472
    %v400 = vlog2.pop %v387
    %v401 = vmul.f32 %v400, 0.6931472
    %v402 = vlog2.pop %v388
    %v403 = vmul.f32 %v402, 0.6931472
    %v404 = vlog2.pop %v389
    %v405 = vmul.f32 %v404, 0.6931472
    %v406 = vadd.f32 %v374, %v391
    %v407 = vadd.f32 %v375, %v393
    %v408 = vadd.f32 %v376, %v395
    %v409 = vadd.f32 %v377, %v397
    %v410 = vadd.f32 %v378, %v399
    %v411 = vadd.f32 %v379, %v401
    %v412 = vadd.f32 %v380, %v403
    %v413 = vadd.f32 %v381, %v405
    %414 = vst.msk [vmem:[%s4] sm:$0xff] %vm354, %v406
    %415 = vst.msk [vmem:[%s4 + $0x8] sm:$0xff] %vm354, %v407
    %416 = vst.msk [vmem:[%s4 + $0x10] sm:$0xff] %vm354, %v408
    %417 = vst.msk [vmem:[%s4 + $0x18] sm:$0xff] %vm354, %v409
    %418 = vst.msk [vmem:[%s4 + $0x20] sm:$0xff] %vm354, %v410
    %419 = vst.msk [vmem:[%s4 + $0x28] sm:$0xff] %vm354, %v411
    %420 = vst.msk [vmem:[%s4 + $0x30] sm:$0xff] %vm354, %v412
    %421 = vst.msk [vmem:[%s4 + $0x38] sm:$0xff] %vm354, %v413
  $region21: #{lm_forward.6} parent=0 // pred_fallthru
    _
  // Predicated region
  $region22: #{lm_forward.6} parent=0 // pred_check
    _
  $region23: #{lm_forward.6} parent=0 // pred_check_branch
    %423 = sbr.rel (0) target = $region25
  $region24: #{lm_forward.6} parent=0 // pred_region
    _
  $region25: #{lm_forward.6} parent=0 // pred_fallthru
    _
  // Predicated region
  $region26: #{lm_forward.6} parent=0 // pred_check
    _
  $region27: #{lm_forward.6} parent=0 // pred_check_branch
    %425 = sbr.rel (0) target = $region29
  $region28: #{lm_forward.6} parent=0 // pred_region
    _
  $region29: #{lm_forward.6} parent=0 // pred_fallthru
    _
  // Predicated region
  $region30: #{lm_forward.6} parent=0 // pred_check
    _
  $region31: #{lm_forward.6} parent=0 // pred_check_branch
    %427 = sbr.rel (0) target = $region33
  $region32: #{lm_forward.6} parent=0 // pred_region
    _
  $region33: #{lm_forward.6} parent=0 // pred_fallthru
    _
  // Predicated region
  $region34: #{lm_forward.6} parent=0 // pred_check
    _
  $region35: #{lm_forward.6} parent=0 // pred_check_branch
    %429 = sbr.rel (0) target = $region37
  $region36: #{lm_forward.6} parent=0 // pred_region
    _
  $region37: #{lm_forward.6} parent=0 // pred_fallthru
    _

// kernel: lm_forward.4
$region0: #{lm_forward.4}
  #allocation0 [shape = 'u32[]', space=smem, size = 0x4, offset = 0x4, fixed_abs, tag = 'smem constant byte address 0x4 - core index']
  #allocation1 [shape = 'u32[144,128]{1,0:T(1,128)}', space=vmem, size = 0x12000, scoped, tag = 'internal scratch']
  #allocation2 [shape = 'f32[8,128]{1,0:T(8,128)}', space=vmem, size = 0x1000, scoped, tag = 'scratch operand']
  #allocation3 [shape = 'f32[8,128]{1,0:T(8,128)}', space=vmem, size = 0x1000, scoped, tag = 'scratch operand']
  %s0 = inlined_call_operand.vmem [shape: f32[8,8,512], index: 0, kind: input, shape index: {}]
  %s1 = inlined_call_operand.vmem [shape: bf16[128,512], index: 1, kind: input, shape index: {}]
  %s2 = inlined_call_operand.vmem [shape: f32[1,512], index: 2, kind: input, shape index: {}]
  %s3 = inlined_call_operand.vmem [shape: f32[8,8,128], index: 3, kind: output, shape index: {}]
  %s4 = sld [smem:[#allocation0]]
  $region26: #{lm_forward.4} parent=0
    _
  %s6 = ssub.s32 1, %s4
  %s7 = scalar_select 0, %s6, %s4
  // Predicated region
  $region2: #{lm_forward.4} parent=0 // pred_check
    _
  $region3: #{lm_forward.4} parent=0 // pred_check_branch
    %9 = sbr.rel (0) target = $region5
  $region4: #{lm_forward.4} parent=0 // pred_region
    _
  $region5: #{lm_forward.4} parent=0 // pred_fallthru
    _
  // Predicated region
  $region6: #{lm_forward.4} parent=0 // pred_check
    _
  $region7: #{lm_forward.4} parent=0 // pred_check_branch
    %11 = sbr.rel (0) target = $region9
  $region8: #{lm_forward.4} parent=0 // pred_region
    _
  $region9: #{lm_forward.4} parent=0 // pred_fallthru
    _
  // Predicated region
  $region10: #{lm_forward.4} parent=0 // pred_check
    _
  $region11: #{lm_forward.4} parent=0 // pred_check_branch
    %13 = sbr.rel (0) target = $region13
  $region12: #{lm_forward.4} parent=0 // pred_region
    _
  $region13: #{lm_forward.4} parent=0 // pred_fallthru
    _
  %p15 = scmp.eq.s32.totalorder 0, 0
  // Predicated region
  $region14: #{lm_forward.4} parent=0 // pred_check
    %p16 = pneg %p15
  $region15: #{lm_forward.4} parent=0 // pred_check_branch
    %18 = sbr.rel (%p16) target = $region17
  $region16: #{lm_forward.4} parent=0 // pred_region
    %19 = vst [vmem:[#allocation2] sm:$0xff] 0.0
    %20 = vst [vmem:[#allocation3] sm:$0xff] 0.0
  $region17: #{lm_forward.4} parent=0 // pred_fallthru
    _
  %v21 = vld [vmem:[#allocation2] sm:$0xff]
  %v22 = vld [vmem:[#allocation3] sm:$0xff]
  %v23 = vld [vmem:[%s0] sm:$0xff]
  %v24 = vld [vmem:[%s0 + $0x8] sm:$0xff]
  %v25 = vld [vmem:[%s0 + $0x10] sm:$0xff]
  %v26 = vld [vmem:[%s0 + $0x18] sm:$0xff]
  %v27 = vpack.c.bf16 %v21, %v21
  %v28 = vld [vmem:[%s1] sm:$0xff]
  %v29 = vld [vmem:[%s1 + $0x8] sm:$0xff]
  %v30 = vld [vmem:[%s1 + $0x10] sm:$0xff]
  %v31 = vld [vmem:[%s1 + $0x18] sm:$0xff]
  %v32 = vld [vmem:[%s1 + $0x20] sm:$0xff]
  %v33 = vld [vmem:[%s1 + $0x28] sm:$0xff]
  %v34 = vld [vmem:[%s1 + $0x30] sm:$0xff]
  %v35 = vld [vmem:[%s1 + $0x38] sm:$0xff]
  %v36 = vld [vmem:[%s1 + $0x40] sm:$0xff]
  %v37 = vld [vmem:[%s1 + $0x48] sm:$0xff]
  %v38 = vld [vmem:[%s1 + $0x50] sm:$0xff]
  %v39 = vld [vmem:[%s1 + $0x58] sm:$0xff]
  %v40 = vld [vmem:[%s1 + $0x60] sm:$0xff]
  %v41 = vld [vmem:[%s1 + $0x68] sm:$0xff]
  %v42 = vld [vmem:[%s1 + $0x70] sm:$0xff]
  %v43 = vld [vmem:[%s1 + $0x78] sm:$0xff]
  %v44 = vld [vmem:[%s1 + $0x80] sm:$0xff]
  %v45 = vld [vmem:[%s1 + $0x88] sm:$0xff]
  %v46 = vld [vmem:[%s1 + $0x90] sm:$0xff]
  %v47 = vld [vmem:[%s1 + $0x98] sm:$0xff]
  %v48 = vld [vmem:[%s1 + $0xa0] sm:$0xff]
  %v49 = vld [vmem:[%s1 + $0xa8] sm:$0xff]
  %v50 = vld [vmem:[%s1 + $0xb0] sm:$0xff]
  %v51 = vld [vmem:[%s1 + $0xb8] sm:$0xff]
  %v52 = vld [vmem:[%s1 + $0xc0] sm:$0xff]
  %v53 = vld [vmem:[%s1 + $0xc8] sm:$0xff]
  %v54 = vld [vmem:[%s1 + $0xd0] sm:$0xff]
  %v55 = vld [vmem:[%s1 + $0xd8] sm:$0xff]
  %v56 = vld [vmem:[%s1 + $0xe0] sm:$0xff]
  %v57 = vld [vmem:[%s1 + $0xe8] sm:$0xff]
  %v58 = vld [vmem:[%s1 + $0xf0] sm:$0xff]
  %v59 = vld [vmem:[%s1 + $0xf8] sm:$0xff]
  %v92 = vunpack.c.l.b16 %v28
  %v93 = vunpack.c.h.b16 %v28
  %v94 = vunpack.c.l.b16 %v29
  %v95 = vunpack.c.h.b16 %v29
  %v96 = vunpack.c.l.b16 %v30
  %v97 = vunpack.c.h.b16 %v30
  %v98 = vunpack.c.l.b16 %v31
  %v99 = vunpack.c.h.b16 %v31
  %v100 = vunpack.c.l.b16 %v32
  %v101 = vunpack.c.h.b16 %v32
  %v102 = vunpack.c.l.b16 %v33
  %v103 = vunpack.c.h.b16 %v33
  %v104 = vunpack.c.l.b16 %v34
  %v105 = vunpack.c.h.b16 %v34
  %v106 = vunpack.c.l.b16 %v35
  %v107 = vunpack.c.h.b16 %v35
  %v108 = vunpack.c.l.b16 %v36
  %v109 = vunpack.c.h.b16 %v36
  %v110 = vunpack.c.l.b16 %v37
  %v111 = vunpack.c.h.b16 %v37
  %v112 = vunpack.c.l.b16 %v38
  %v113 = vunpack.c.h.b16 %v38
  %v114 = vunpack.c.l.b16 %v39
  %v115 = vunpack.c.h.b16 %v39
  %v116 = vunpack.c.l.b16 %v40
  %v117 = vunpack.c.h.b16 %v40
  %v118 = vunpack.c.l.b16 %v41
  %v119 = vunpack.c.h.b16 %v41
  %v120 = vunpack.c.l.b16 %v42
  %v121 = vunpack.c.h.b16 %v42
  %v122 = vunpack.c.l.b16 %v43
  %v123 = vunpack.c.h.b16 %v43
  %v124 = vunpack.c.l.b16 %v44
  %v125 = vunpack.c.h.b16 %v44
  %v126 = vunpack.c.l.b16 %v45
  %v127 = vunpack.c.h.b16 %v45
  %v128 = vunpack.c.l.b16 %v46
  %v129 = vunpack.c.h.b16 %v46
  %v130 = vunpack.c.l.b16 %v47
  %v131 = vunpack.c.h.b16 %v47
  %v132 = vunpack.c.l.b16 %v48
  %v133 = vunpack.c.h.b16 %v48
  %v134 = vunpack.c.l.b16 %v49
  %v135 = vunpack.c.h.b16 %v49
  %v136 = vunpack.c.l.b16 %v50
  %v137 = vunpack.c.h.b16 %v50
  %v138 = vunpack.c.l.b16 %v51
  %v139 = vunpack.c.h.b16 %v51
  %v140 = vunpack.c.l.b16 %v52
  %v141 = vunpack.c.h.b16 %v52
  %v142 = vunpack.c.l.b16 %v53
  %v143 = vunpack.c.h.b16 %v53
  %v144 = vunpack.c.l.b16 %v54
  %v145 = vunpack.c.h.b16 %v54
  %v146 = vunpack.c.l.b16 %v55
  %v147 = vunpack.c.h.b16 %v55
  %v148 = vunpack.c.l.b16 %v56
  %v149 = vunpack.c.h.b16 %v56
  %v150 = vunpack.c.l.b16 %v57
  %v151 = vunpack.c.h.b16 %v57
  %v152 = vunpack.c.l.b16 %v58
  %v153 = vunpack.c.h.b16 %v58
  %v154 = vunpack.c.l.b16 %v59
  %v155 = vunpack.c.h.b16 %v59
  %v156 = vpack.c.b16 %v96, %v92
  %v157 = vpack.c.b16 %v97, %v93
  %v158 = vpack.c.b16 %v98, %v94
  %v159 = vpack.c.b16 %v99, %v95
  %v160 = vpack.c.b16 %v104, %v100
  %v161 = vpack.c.b16 %v105, %v101
  %v162 = vpack.c.b16 %v106, %v102
  %v163 = vpack.c.b16 %v107, %v103
  %v164 = vpack.c.b16 %v112, %v108
  %v165 = vpack.c.b16 %v113, %v109
  %v166 = vpack.c.b16 %v114, %v110
  %v167 = vpack.c.b16 %v115, %v111
  %v168 = vpack.c.b16 %v120, %v116
  %v169 = vpack.c.b16 %v121, %v117
  %v170 = vpack.c.b16 %v122, %v118
  %v171 = vpack.c.b16 %v123, %v119
  %v172 = vpack.c.b16 %v128, %v124
  %v173 = vpack.c.b16 %v129, %v125
  %v174 = vpack.c.b16 %v130, %v126
  %v175 = vpack.c.b16 %v131, %v127
  %v176 = vpack.c.b16 %v136, %v132
  %v177 = vpack.c.b16 %v137, %v133
  %v178 = vpack.c.b16 %v138, %v134
  %v179 = vpack.c.b16 %v139, %v135
  %v180 = vpack.c.b16 %v144, %v140
  %v181 = vpack.c.b16 %v145, %v141
  %v182 = vpack.c.b16 %v146, %v142
  %v183 = vpack.c.b16 %v147, %v143
  %v184 = vpack.c.b16 %v152, %v148
  %v185 = vpack.c.b16 %v153, %v149
  %v186 = vpack.c.b16 %v154, %v150
  %v187 = vpack.c.b16 %v155, %v151
  %220 = vmatprep.subr.bf16.mxu0 %v185
  %221 = vmatpush1.bf16.msra.mxu0 %v184
  %222 = vmatprep.subr.bf16.mxu0 %v181
  %223 = vmatpush1.bf16.msra.mxu0 %v180
  %224 = vmatprep.subr.bf16.mxu0 %v177
  %225 = vmatpush1.bf16.msra.mxu0 %v176
  %226 = vmatprep.subr.bf16.mxu0 %v173
  %227 = vmatpush1.bf16.msra.mxu0 %v172
  %228 = vmatprep.subr.bf16.mxu0 %v169
  %229 = vmatpush1.bf16.msra.mxu0 %v168
  %230 = vmatprep.subr.bf16.mxu0 %v165
  %231 = vmatpush1.bf16.msra.mxu0 %v164
  %232 = vmatprep.subr.bf16.mxu0 %v161
  %233 = vmatpush1.bf16.msra.mxu0 %v160
  %234 = vmatprep.subr.bf16.mxu0 %v157
  %235 = vmatpush1.bf16.msra.mxu0 %v156
  %236 = vmatprep.subr.bf16.mxu0 0
  %237 = vmatpush2.bf16.msra.mxu0 0
  %238 = vmatprep.subr.bf16.mxu0 0
  %239 = vmatpush2.bf16.msra.mxu0 0
  %240 = vmatprep.subr.bf16.mxu0 0
  %241 = vmatpush2.bf16.msra.mxu0 0
  %242 = vmatprep.subr.bf16.mxu0 0
  %243 = vmatpush2.bf16.msra.mxu0 0
  %244 = vmatprep.subr.bf16.mxu0 0
  %245 = vmatpush2.bf16.msra.mxu0 0
  %246 = vmatprep.subr.bf16.mxu0 0
  %247 = vmatpush2.bf16.msra.mxu0 0
  %248 = vmatprep.subr.bf16.mxu0 0
  %249 = vmatpush2.bf16.msra.mxu0 0
  %250 = vmatprep.subr.bf16.mxu0 0
  %251 = vmatpush2.bf16.msra.mxu0 0
  %252 = vmatprep.mubr.bf16.mxu0 0
  %253 = vmatmul.mubr.bf16.gmra.mxu0 %v27
  %v254 = vpop.f32.mrf.mxu0
  %v255 = vadd.f32 0.0, %v254
  %v256 = vpop.f32.mrf.mxu0
  %v257 = vadd.f32 0.0, %v256
  %v258 = vpop.f32.mrf.mxu0
  %v259 = vpop.f32.mrf.mxu0
  %260 = vdwg.mxu0
  %261 = vmatprep.subr.bf16.mxu0 %v187
  %262 = vmatpush1.bf16.msra.mxu0 %v186
  %263 = vmatprep.subr.bf16.mxu0 %v183
  %264 = vmatpush1.bf16.msra.mxu0 %v182
  %265 = vmatprep.subr.bf16.mxu0 %v179
  %266 = vmatpush1.bf16.msra.mxu0 %v178
  %267 = vmatprep.subr.bf16.mxu0 %v175
  %268 = vmatpush1.bf16.msra.mxu0 %v174
  %269 = vmatprep.subr.bf16.mxu0 %v171
  %270 = vmatpush1.bf16.msra.mxu0 %v170
  %271 = vmatprep.subr.bf16.mxu0 %v167
  %272 = vmatpush1.bf16.msra.mxu0 %v166
  %273 = vmatprep.subr.bf16.mxu0 %v163
  %274 = vmatpush1.bf16.msra.mxu0 %v162
  %275 = vmatprep.subr.bf16.mxu0 %v159
  %276 = vmatpush1.bf16.msra.mxu0 %v158
  %277 = vmatprep.subr.bf16.mxu0 0
  %278 = vmatpush2.bf16.msra.mxu0 0
  %279 = vmatprep.subr.bf16.mxu0 0
  %280 = vmatpush2.bf16.msra.mxu0 0
  %281 = vmatprep.subr.bf16.mxu0 0
  %282 = vmatpush2.bf16.msra.mxu0 0
  %283 = vmatprep.subr.bf16.mxu0 0
  %284 = vmatpush2.bf16.msra.mxu0 0
  %285 = vmatprep.subr.bf16.mxu0 0
  %286 = vmatpush2.bf16.msra.mxu0 0
  %287 = vmatprep.subr.bf16.mxu0 0
  %288 = vmatpush2.bf16.msra.mxu0 0
  %289 = vmatprep.subr.bf16.mxu0 0
  %290 = vmatpush2.bf16.msra.mxu0 0
  %291 = vmatprep.subr.bf16.mxu0 0
  %292 = vmatpush2.bf16.msra.mxu0 0
  %293 = vmatprep.mubr.bf16.mxu0 0
  %294 = vmatmul.mubr.bf16.gmra.mxu0 %v27
  %v295 = vpop.f32.mrf.mxu0
  %v296 = vadd.f32 0.0, %v295
  %v297 = vpop.f32.mrf.mxu0
  %v298 = vadd.f32 0.0, %v297
  %v299 = vpop.f32.mrf.mxu0
  %v300 = vpop.f32.mrf.mxu0
  %301 = vdwg.mxu0
  %v302 = vadd.f32 %v23, %v255
  %v303 = vadd.f32 %v24, %v257
  %v304 = vadd.f32 %v25, %v296
  %v305 = vadd.f32 %v26, %v298
  %v306 = vld [vmem:[%s2] sm:$0xf]
  %v308 = vlaneseq
  %v309 = vshrl.u32 %v308, 7
  %v310 = vsub.s32 0, %v309
  %v311 = vrot.slane %v306, %v310
  %v312 = vlaneseq
  %v313 = vshrl.u32 %v312, 7
  %v314 = vsub.s32 1, %v313
  %v315 = vrot.slane %v306, %v314
  %v316 = vlaneseq
  %v317 = vshrl.u32 %v316, 7
  %v318 = vsub.s32 2, %v317
  %v319 = vrot.slane %v306, %v318
  %v320 = vlaneseq
  %v321 = vshrl.u32 %v320, 7
  %v322 = vsub.s32 3, %v321
  %v323 = vrot.slane %v306, %v322
  %v328 = vadd.f32 %v302, %v311
  %v329 = vadd.f32 %v303, %v315
  %v330 = vadd.f32 %v304, %v319
  %v331 = vadd.f32 %v305, %v323
  %v332 = vxor.u32 %v328, 2147483648
  %v333 = vmul.f32 %v332, 1.442695
  %v334 = vpow.pop %v333
  %v335 = vadd.f32 %v334, 1.0
  %v336 = vrcp.pop %v335
  %v337 = vmul.f32 1.0, %v336
  %v338 = vxor.u32 %v329, 2147483648
  %v339 = vmul.f32 %v338, 1.442695
  %v340 = vpow.pop %v339
  %v341 = vadd.f32 %v340, 1.0
  %v342 = vrcp.pop %v341
  %v343 = vmul.f32 1.0, %v342
  %v344 = vtanh.pop %v330
  %v345 = vxor.u32 %v331, 2147483648
  %v346 = vmul.f32 %v345, 1.442695
  %v347 = vpow.pop %v346
  %v348 = vadd.f32 %v347, 1.0
  %v349 = vrcp.pop %v348
  %v350 = vmul.f32 1.0, %v349
  %v351 = vmul.f32 %v343, %v22
  %v352 = vmul.f32 %v337, %v344
  %v353 = vadd.f32 %v351, %v352
  %v354 = vtanh.pop %v353
  %v355 = vmul.f32 %v350, %v354
  %356 = vst [vmem:[%s3] sm:$0xff] %v355
  %s357 = scalar_lea.vmem %s0, 32
  %v358 = vld [vmem:[%s357] sm:$0xff]
  %v359 = vld [vmem:[%s357 + $0x8] sm:$0xff]
  %v360 = vld [vmem:[%s357 + $0x10] sm:$0xff]
  %v361 = vld [vmem:[%s357 + $0x18] sm:$0xff]
  %v362 = vpack.c.bf16 %v355, %v355
  %v363 = vld [vmem:[%s1] sm:$0xff]
  %v364 = vld [vmem:[%s1 + $0x8] sm:$0xff]
  %v365 = vld [vmem:[%s1 + $0x10] sm:$0xff]
  %v366 = vld [vmem:[%s1 + $0x18] sm:$0xff]
  %v367 = vld [vmem:[%s1 + $0x20] sm:$0xff]
  %v368 = vld [vmem:[%s1 + $0x28] sm:$0xff]
  %v369 = vld [vmem:[%s1 + $0x30] sm:$0xff]
  %v370 = vld [vmem:[%s1 + $0x38] sm:$0xff]
  %v371 = vld [vmem:[%s1 + $0x40] sm:$0xff]
  %v372 = vld [vmem:[%s1 + $0x48] sm:$0xff]
  %v373 = vld [vmem:[%s1 + $0x50] sm:$0xff]
  %v374 = vld [vmem:[%s1 + $0x58] sm:$0xff]
  %v375 = vld [vmem:[%s1 + $0x60] sm:$0xff]
  %v376 = vld [vmem:[%s1 + $0x68] sm:$0xff]
  %v377 = vld [vmem:[%s1 + $0x70] sm:$0xff]
  %v378 = vld [vmem:[%s1 + $0x78] sm:$0xff]
  %v379 = vld [vmem:[%s1 + $0x80] sm:$0xff]
  %v380 = vld [vmem:[%s1 + $0x88] sm:$0xff]
  %v381 = vld [vmem:[%s1 + $0x90] sm:$0xff]
  %v382 = vld [vmem:[%s1 + $0x98] sm:$0xff]
  %v383 = vld [vmem:[%s1 + $0xa0] sm:$0xff]
  %v384 = vld [vmem:[%s1 + $0xa8] sm:$0xff]
  %v385 = vld [vmem:[%s1 + $0xb0] sm:$0xff]
  %v386 = vld [vmem:[%s1 + $0xb8] sm:$0xff]
  %v387 = vld [vmem:[%s1 + $0xc0] sm:$0xff]
  %v388 = vld [vmem:[%s1 + $0xc8] sm:$0xff]
  %v389 = vld [vmem:[%s1 + $0xd0] sm:$0xff]
  %v390 = vld [vmem:[%s1 + $0xd8] sm:$0xff]
  %v391 = vld [vmem:[%s1 + $0xe0] sm:$0xff]
  %v392 = vld [vmem:[%s1 + $0xe8] sm:$0xff]
  %v393 = vld [vmem:[%s1 + $0xf0] sm:$0xff]
  %v394 = vld [vmem:[%s1 + $0xf8] sm:$0xff]
  %v427 = vunpack.c.l.b16 %v363
  %v428 = vunpack.c.h.b16 %v363
  %v429 = vunpack.c.l.b16 %v364
  %v430 = vunpack.c.h.b16 %v364
  %v431 = vunpack.c.l.b16 %v365
  %v432 = vunpack.c.h.b16 %v365
  %v433 = vunpack.c.l.b16 %v366
  %v434 = vunpack.c.h.b16 %v366
  %v435 = vunpack.c.l.b16 %v367
  %v436 = vunpack.c.h.b16 %v367
  %v437 = vunpack.c.l.b16 %v368
  %v438 = vunpack.c.h.b16 %v368
  %v439 = vunpack.c.l.b16 %v369
  %v440 = vunpack.c.h.b16 %v369
  %v441 = vunpack.c.l.b16 %v370
  %v442 = vunpack.c.h.b16 %v370
  %v443 = vunpack.c.l.b16 %v371
  %v444 = vunpack.c.h.b16 %v371
  %v445 = vunpack.c.l.b16 %v372
  %v446 = vunpack.c.h.b16 %v372
  %v447 = vunpack.c.l.b16 %v373
  %v448 = vunpack.c.h.b16 %v373
  %v449 = vunpack.c.l.b16 %v374
  %v450 = vunpack.c.h.b16 %v374
  %v451 = vunpack.c.l.b16 %v375
  %v452 = vunpack.c.h.b16 %v375
  %v453 = vunpack.c.l.b16 %v376
  %v454 = vunpack.c.h.b16 %v376
  %v455 = vunpack.c.l.b16 %v377
  %v456 = vunpack.c.h.b16 %v377
  %v457 = vunpack.c.l.b16 %v378
  %v458 = vunpack.c.h.b16 %v378
  %v459 = vunpack.c.l.b16 %v379
  %v460 = vunpack.c.h.b16 %v379
  %v461 = vunpack.c.l.b16 %v380
  %v462 = vunpack.c.h.b16 %v380
  %v463 = vunpack.c.l.b16 %v381
  %v464 = vunpack.c.h.b16 %v381
  %v465 = vunpack.c.l.b16 %v382
  %v466 = vunpack.c.h.b16 %v382
  %v467 = vunpack.c.l.b16 %v383
  %v468 = vunpack.c.h.b16 %v383
  %v469 = vunpack.c.l.b16 %v384
  %v470 = vunpack.c.h.b16 %v384
  %v471 = vunpack.c.l.b16 %v385
  %v472 = vunpack.c.h.b16 %v385
  %v473 = vunpack.c.l.b16 %v386
  %v474 = vunpack.c.h.b16 %v386
  %v475 = vunpack.c.l.b16 %v387
  %v476 = vunpack.c.h.b16 %v387
  %v477 = vunpack.c.l.b16 %v388
  %v478 = vunpack.c.h.b16 %v388
  %v479 = vunpack.c.l.b16 %v389
  %v480 = vunpack.c.h.b16 %v389
  %v481 = vunpack.c.l.b16 %v390
  %v482 = vunpack.c.h.b16 %v390
  %v483 = vunpack.c.l.b16 %v391
  %v484 = vunpack.c.h.b16 %v391
  %v485 = vunpack.c.l.b16 %v392
  %v486 = vunpack.c.h.b16 %v392
  %v487 = vunpack.c.l.b16 %v393
  %v488 = vunpack.c.h.b16 %v393
  %v489 = vunpack.c.l.b16 %v394
  %v490 = vunpack.c.h.b16 %v394
  %v491 = vpack.c.b16 %v431, %v427
  %v492 = vpack.c.b16 %v432, %v428
  %v493 = vpack.c.b16 %v433, %v429
  %v494 = vpack.c.b16 %v434, %v430
  %v495 = vpack.c.b16 %v439, %v435
  %v496 = vpack.c.b16 %v440, %v436
  %v497 = vpack.c.b16 %v441, %v437
  %v498 = vpack.c.b16 %v442, %v438
  %v499 = vpack.c.b16 %v447, %v443
  %v500 = vpack.c.b16 %v448, %v444
  %v501 = vpack.c.b16 %v449, %v445
  %v502 = vpack.c.b16 %v450, %v446
  %v503 = vpack.c.b16 %v455, %v451
  %v504 = vpack.c.b16 %v456, %v452
  %v505 = vpack.c.b16 %v457, %v453
  %v506 = vpack.c.b16 %v458, %v454
  %v507 = vpack.c.b16 %v463, %v459
  %v508 = vpack.c.b16 %v464, %v460
  %v509 = vpack.c.b16 %v465, %v461
  %v510 = vpack.c.b16 %v466, %v462
  %v511 = vpack.c.b16 %v471, %v467
  %v512 = vpack.c.b16 %v472, %v468
  %v513 = vpack.c.b16 %v473, %v469
  %v514 = vpack.c.b16 %v474, %v470
  %v515 = vpack.c.b16 %v479, %v475
  %v516 = vpack.c.b16 %v480, %v476
  %v517 = vpack.c.b16 %v481, %v477
  %v518 = vpack.c.b16 %v482, %v478
  %v519 = vpack.c.b16 %v487, %v483
  %v520 = vpack.c.b16 %v488, %v484
  %v521 = vpack.c.b16 %v489, %v485
  %v522 = vpack.c.b16 %v490, %v486
  %555 = vmatprep.subr.bf16.mxu0 %v520
  %556 = vmatpush1.bf16.msra.mxu0 %v519
  %557 = vmatprep.subr.bf16.mxu0 %v516
  %558 = vmatpush1.bf16.msra.mxu0 %v515
  %559 = vmatprep.subr.bf16.mxu0 %v512
  %560 = vmatpush1.bf16.msra.mxu0 %v511
  %561 = vmatprep.subr.bf16.mxu0 %v508
  %562 = vmatpush1.bf16.msra.mxu0 %v507
  %563 = vmatprep.subr.bf16.mxu0 %v504
  %564 = vmatpush1.bf16.msra.mxu0 %v503
  %565 = vmatprep.subr.bf16.mxu0 %v500
  %566 = vmatpush1.bf16.msra.mxu0 %v499
  %567 = vmatprep.subr.bf16.mxu0 %v496
  %568 = vmatpush1.bf16.msra.mxu0 %v495
  %569 = vmatprep.subr.bf16.mxu0 %v492
  %570 = vmatpush1.bf16.msra.mxu0 %v491
  %571 = vmatprep.subr.bf16.mxu0 0
  %572 = vmatpush2.bf16.msra.mxu0 0
  %573 = vmatprep.subr.bf16.mxu0 0
  %574 = vmatpush2.bf16.msra.mxu0 0
  %575 = vmatprep.subr.bf16.mxu0 0
  %576 = vmatpush2.bf16.msra.mxu0 0
  %577 = vmatprep.subr.bf16.mxu0 0
  %578 = vmatpush2.bf16.msra.mxu0 0
  %579 = vmatprep.subr.bf16.mxu0 0
  %580 = vmatpush2.bf16.msra.mxu0 0
  %581 = vmatprep.subr.bf16.mxu0 0
  %582 = vmatpush2.bf16.msra.mxu0 0
  %583 = vmatprep.subr.bf16.mxu0 0
  %584 = vmatpush2.bf16.msra.mxu0 0
  %585 = vmatprep.subr.bf16.mxu0 0
  %586 = vmatpush2.bf16.msra.mxu0 0
  %587 = vmatprep.mubr.bf16.mxu0 0
  %588 = vmatmul.mubr.bf16.gmra.mxu0 %v362
  %v589 = vpop.f32.mrf.mxu0
  %v590 = vadd.f32 0.0, %v589
  %v591 = vpop.f32.mrf.mxu0
  %v592 = vadd.f32 0.0, %v591
  %v593 = vpop.f32.mrf.mxu0
  %v594 = vpop.f32.mrf.mxu0
  %595 = vdwg.mxu0
  %596 = vmatprep.subr.bf16.mxu0 %v522
  %597 = vmatpush1.bf16.msra.mxu0 %v521
  %598 = vmatprep.subr.bf16.mxu0 %v518
  %599 = vmatpush1.bf16.msra.mxu0 %v517
  %600 = vmatprep.subr.bf16.mxu0 %v514
  %601 = vmatpush1.bf16.msra.mxu0 %v513
  %602 = vmatprep.subr.bf16.mxu0 %v510
  %603 = vmatpush1.bf16.msra.mxu0 %v509
  %604 = vmatprep.subr.bf16.mxu0 %v506
  %605 = vmatpush1.bf16.msra.mxu0 %v505
  %606 = vmatprep.subr.bf16.mxu0 %v502
  %607 = vmatpush1.bf16.msra.mxu0 %v501
  %608 = vmatprep.subr.bf16.mxu0 %v498
  %609 = vmatpush1.bf16.msra.mxu0 %v497
  %610 = vmatprep.subr.bf16.mxu0 %v494
  %611 = vmatpush1.bf16.msra.mxu0 %v493
  %612 = vmatprep.subr.bf16.mxu0 0
  %613 = vmatpush2.bf16.msra.mxu0 0
  %614 = vmatprep.subr.bf16.mxu0 0
  %615 = vmatpush2.bf16.msra.mxu0 0
  %616 = vmatprep.subr.bf16.mxu0 0
  %617 = vmatpush2.bf16.msra.mxu0 0
  %618 = vmatprep.subr.bf16.mxu0 0
  %619 = vmatpush2.bf16.msra.mxu0 0
  %620 = vmatprep.subr.bf16.mxu0 0
  %621 = vmatpush2.bf16.msra.mxu0 0
  %622 = vmatprep.subr.bf16.mxu0 0
  %623 = vmatpush2.bf16.msra.mxu0 0
  %624 = vmatprep.subr.bf16.mxu0 0
  %625 = vmatpush2.bf16.msra.mxu0 0
  %626 = vmatprep.subr.bf16.mxu0 0
  %627 = vmatpush2.bf16.msra.mxu0 0
  %628 = vmatprep.mubr.bf16.mxu0 0
  %629 = vmatmul.mubr.bf16.gmra.mxu0 %v362
  %v630 = vpop.f32.mrf.mxu0
  %v631 = vadd.f32 0.0, %v630
  %v632 = vpop.f32.mrf.mxu0
  %v633 = vadd.f32 0.0, %v632
  %v634 = vpop.f32.mrf.mxu0
  %v635 = vpop.f32.mrf.mxu0
  %636 = vdwg.mxu0
  %v637 = vadd.f32 %v358, %v590
  %v638 = vadd.f32 %v359, %v592
  %v639 = vadd.f32 %v360, %v631
  %v640 = vadd.f32 %v361, %v633
  %v641 = vld [vmem:[%s2] sm:$0xf]
  %v643 = vlaneseq
  %v644 = vshrl.u32 %v643, 7
  %v645 = vsub.s32 0, %v644
  %v646 = vrot.slane %v641, %v645
  %v647 = vlaneseq
  %v648 = vshrl.u32 %v647, 7
  %v649 = vsub.s32 1, %v648
  %v650 = vrot.slane %v641, %v649
  %v651 = vlaneseq
  %v652 = vshrl.u32 %v651, 7
  %v653 = vsub.s32 2, %v652
  %v654 = vrot.slane %v641, %v653
  %v655 = vlaneseq
  %v656 = vshrl.u32 %v655, 7
  %v657 = vsub.s32 3, %v656
  %v658 = vrot.slane %v641, %v657
  %v663 = vadd.f32 %v637, %v646
  %v664 = vadd.f32 %v638, %v650
  %v665 = vadd.f32 %v639, %v654
  %v666 = vadd.f32 %v640, %v658
  %v667 = vxor.u32 %v663, 2147483648
  %v668 = vmul.f32 %v667, 1.442695
  %v669 = vpow.pop %v668
  %v670 = vadd.f32 %v669, 1.0
  %v671 = vrcp.pop %v670
  %v672 = vmul.f32 1.0, %v671
  %v673 = vxor.u32 %v664, 2147483648
  %v674 = vmul.f32 %v673, 1.442695
  %v675 = vpow.pop %v674
  %v676 = vadd.f32 %v675, 1.0
  %v677 = vrcp.pop %v676
  %v678 = vmul.f32 1.0, %v677
  %v679 = vtanh.pop %v665
  %v680 = vxor.u32 %v666, 2147483648
  %v681 = vmul.f32 %v680, 1.442695
  %v682 = vpow.pop %v681
  %v683 = vadd.f32 %v682, 1.0
  %v684 = vrcp.pop %v683
  %v685 = vmul.f32 1.0, %v684
  %v686 = vmul.f32 %v678, %v353
  %v687 = vmul.f32 %v672, %v679
  %v688 = vadd.f32 %v686, %v687
  %v689 = vtanh.pop %v688
  %v690 = vmul.f32 %v685, %v689
  %s691 = scalar_lea.vmem %s3, 8
  %692 = vst [vmem:[%s691] sm:$0xff] %v690
  %s693 = scalar_lea.vmem %s0, 64
  %v694 = vld [vmem:[%s693] sm:$0xff]
  %v695 = vld [vmem:[%s693 + $0x8] sm:$0xff]
  %v696 = vld [vmem:[%s693 + $0x10] sm:$0xff]
  %v697 = vld [vmem:[%s693 + $0x18] sm:$0xff]
  %v698 = vpack.c.bf16 %v690, %v690
  %v699 = vld [vmem:[%s1] sm:$0xff]
  %v700 = vld [vmem:[%s1 + $0x8] sm:$0xff]
  %v701 = vld [vmem:[%s1 + $0x10] sm:$0xff]
  %v702 = vld [vmem:[%s1 + $0x18] sm:$0xff]
  %v703 = vld [vmem:[%s1 + $0x20] sm:$0xff]
  %v704 = vld [vmem:[%s1 + $0x28] sm:$0xff]
  %v705 = vld [vmem:[%s1 + $0x30] sm:$0xff]
  %v706 = vld [vmem:[%s1 + $0x38] sm:$0xff]
  %v707 = vld [vmem:[%s1 + $0x40] sm:$0xff]
  %v708 = vld [vmem:[%s1 + $0x48] sm:$0xff]
  %v709 = vld [vmem:[%s1 + $0x50] sm:$0xff]
  %v710 = vld [vmem:[%s1 + $0x58] sm:$0xff]
  %v711 = vld [vmem:[%s1 + $0x60] sm:$0xff]
  %v712 = vld [vmem:[%s1 + $0x68] sm:$0xff]
  %v713 = vld [vmem:[%s1 + $0x70] sm:$0xff]
  %v714 = vld [vmem:[%s1 + $0x78] sm:$0xff]
  %v715 = vld [vmem:[%s1 + $0x80] sm:$0xff]
  %v716 = vld [vmem:[%s1 + $0x88] sm:$0xff]
  %v717 = vld [vmem:[%s1 + $0x90] sm:$0xff]
  %v718 = vld [vmem:[%s1 + $0x98] sm:$0xff]
  %v719 = vld [vmem:[%s1 + $0xa0] sm:$0xff]
  %v720 = vld [vmem:[%s1 + $0xa8] sm:$0xff]
  %v721 = vld [vmem:[%s1 + $0xb0] sm:$0xff]
  %v722 = vld [vmem:[%s1 + $0xb8] sm:$0xff]
  %v723 = vld [vmem:[%s1 + $0xc0] sm:$0xff]
  %v724 = vld [vmem:[%s1 + $0xc8] sm:$0xff]
  %v725 = vld [vmem:[%s1 + $0xd0] sm:$0xff]
  %v726 = vld [vmem:[%s1 + $0xd8] sm:$0xff]
  %v727 = vld [vmem:[%s1 + $0xe0] sm:$0xff]
  %v728 = vld [vmem:[%s1 + $0xe8] sm:$0xff]
  %v729 = vld [vmem:[%s1 + $0xf0] sm:$0xff]
  %v730 = vld [vmem:[%s1 + $0xf8] sm:$0xff]
  %v763 = vunpack.c.l.b16 %v699
  %v764 = vunpack.c.h.b16 %v699
  %v765 = vunpack.c.l.b16 %v700
  %v766 = vunpack.c.h.b16 %v700
  %v767 = vunpack.c.l.b16 %v701
  %v768 = vunpack.c.h.b16 %v701
  %v769 = vunpack.c.l.b16 %v702
  %v770 = vunpack.c.h.b16 %v702
  %v771 = vunpack.c.l.b16 %v703
  %v772 = vunpack.c.h.b16 %v703
  %v773 = vunpack.c.l.b16 %v704
  %v774 = vunpack.c.h.b16 %v704
  %v775 = vunpack.c.l.b16 %v705
  %v776 = vunpack.c.h.b16 %v705
  %v777 = vunpack.c.l.b16 %v706
  %v778 = vunpack.c.h.b16 %v706
  %v779 = vunpack.c.l.b16 %v707
  %v780 = vunpack.c.h.b16 %v707
  %v781 = vunpack.c.l.b16 %v708
  %v782 = vunpack.c.h.b16 %v708
  %v783 = vunpack.c.l.b16 %v709
  %v784 = vunpack.c.h.b16 %v709
  %v785 = vunpack.c.l.b16 %v710
  %v786 = vunpack.c.h.b16 %v710
  %v787 = vunpack.c.l.b16 %v711
  %v788 = vunpack.c.h.b16 %v711
  %v789 = vunpack.c.l.b16 %v712
  %v790 = vunpack.c.h.b16 %v712
  %v791 = vunpack.c.l.b16 %v713
  %v792 = vunpack.c.h.b16 %v713
  %v793 = vunpack.c.l.b16 %v714
  %v794 = vunpack.c.h.b16 %v714
  %v795 = vunpack.c.l.b16 %v715
  %v796 = vunpack.c.h.b16 %v715
  %v797 = vunpack.c.l.b16 %v716
  %v798 = vunpack.c.h.b16 %v716
  %v799 = vunpack.c.l.b16 %v717
  %v800 = vunpack.c.h.b16 %v717
  %v801 = vunpack.c.l.b16 %v718
  %v802 = vunpack.c.h.b16 %v718
  %v803 = vunpack.c.l.b16 %v719
  %v804 = vunpack.c.h.b16 %v719
  %v805 = vunpack.c.l.b16 %v720
  %v806 = vunpack.c.h.b16 %v720
  %v807 = vunpack.c.l.b16 %v721
  %v808 = vunpack.c.h.b16 %v721
  %v809 = vunpack.c.l.b16 %v722
  %v810 = vunpack.c.h.b16 %v722
  %v811 = vunpack.c.l.b16 %v723
  %v812 = vunpack.c.h.b16 %v723
  %v813 = vunpack.c.l.b16 %v724
  %v814 = vunpack.c.h.b16 %v724
  %v815 = vunpack.c.l.b16 %v725
  %v816 = vunpack.c.h.b16 %v725
  %v817 = vunpack.c.l.b16 %v726
  %v818 = vunpack.c.h.b16 %v726
  %v819 = vunpack.c.l.b16 %v727
  %v820 = vunpack.c.h.b16 %v727
  %v821 = vunpack.c.l.b16 %v728
  %v822 = vunpack.c.h.b16 %v728
  %v823 = vunpack.c.l.b16 %v729
  %v824 = vunpack.c.h.b16 %v729
  %v825 = vunpack.c.l.b16 %v730
  %v826 = vunpack.c.h.b16 %v730
  %v827 = vpack.c.b16 %v767, %v763
  %v828 = vpack.c.b16 %v768, %v764
  %v829 = vpack.c.b16 %v769, %v765
  %v830 = vpack.c.b16 %v770, %v766
  %v831 = vpack.c.b16 %v775, %v771
  %v832 = vpack.c.b16 %v776, %v772
  %v833 = vpack.c.b16 %v777, %v773
  %v834 = vpack.c.b16 %v778, %v774
  %v835 = vpack.c.b16 %v783, %v779
  %v836 = vpack.c.b16 %v784, %v780
  %v837 = vpack.c.b16 %v785, %v781
  %v838 = vpack.c.b16 %v786, %v782
  %v839 = vpack.c.b16 %v791, %v787
  %v840 = vpack.c.b16 %v792, %v788
  %v841 = vpack.c.b16 %v793, %v789
  %v842 = vpack.c.b16 %v794, %v790
  %v843 = vpack.c.b16 %v799, %v795
  %v844 = vpack.c.b16 %v800, %v796
  %v845 = vpack.c.b16 %v801, %v797
  %v846 = vpack.c.b16 %v802, %v798
  %v847 = vpack.c.b16 %v807, %v803
  %v848 = vpack.c.b16 %v808, %v804
  %v849 = vpack.c.b16 %v809, %v805
  %v850 = vpack.c.b16 %v810, %v806
  %v851 = vpack.c.b16 %v815, %v811
  %v852 = vpack.c.b16 %v816, %v812
  %v853 = vpack.c.b16 %v817, %v813
  %v854 = vpack.c.b16 %v818, %v814
  %v855 = vpack.c.b16 %v823, %v819
  %v856 = vpack.c.b16 %v824, %v820
  %v857 = vpack.c.b16 %v825, %v821
  %v858 = vpack.c.b16 %v826, %v822
  %891 = vmatprep.subr.bf16.mxu0 %v856
  %892 = vmatpush1.bf16.msra.mxu0 %v855
  %893 = vmatprep.subr.bf16.mxu0 %v852
  %894 = vmatpush1.bf16.msra.mxu0 %v851
  %895 = vmatprep.subr.bf16.mxu0 %v848
  %896 = vmatpush1.bf16.msra.mxu0 %v847
  %897 = vmatprep.subr.bf16.mxu0 %v844
  %898 = vmatpush1.bf16.msra.mxu0 %v843
  %899 = vmatprep.subr.bf16.mxu0 %v840
  %900 = vmatpush1.bf16.msra.mxu0 %v839
  %901 = vmatprep.subr.bf16.mxu0 %v836
  %902 = vmatpush1.bf16.msra.mxu0 %v835
  %903 = vmatprep.subr.bf16.mxu0 %v832
  %904 = vmatpush1.bf16.msra.mxu0 %v831
  %905 = vmatprep.subr.bf16.mxu0 %v828
  %906 = vmatpush1.bf16.msra.mxu0 %v827
  %907 = vmatprep.subr.bf16.mxu0 0
  %908 = vmatpush2.bf16.msra.mxu0 0
  %909 = vmatprep.subr.bf16.mxu0 0
  %910 = vmatpush2.bf16.msra.mxu0 0
  %911 = vmatprep.subr.bf16.mxu0 0
  %912 = vmatpush2.bf16.msra.mxu0 0
  %913 = vmatprep.subr.bf16.mxu0 0
  %914 = vmatpush2.bf16.msra.mxu0 0
  %915 = vmatprep.subr.bf16.mxu0 0
  %916 = vmatpush2.bf16.msra.mxu0 0
  %917 = vmatprep.subr.bf16.mxu0 0
  %918 = vmatpush2.bf16.msra.mxu0 0
  %919 = vmatprep.subr.bf16.mxu0 0
  %920 = vmatpush2.bf16.msra.mxu0 0
  %921 = vmatprep.subr.bf16.mxu0 0
  %922 = vmatpush2.bf16.msra.mxu0 0
  %923 = vmatprep.mubr.bf16.mxu0 0
  %924 = vmatmul.mubr.bf16.gmra.mxu0 %v698
  %v925 = vpop.f32.mrf.mxu0
  %v926 = vadd.f32 0.0, %v925
  %v927 = vpop.f32.mrf.mxu0
  %v928 = vadd.f32 0.0, %v927
  %v929 = vpop.f32.mrf.mxu0
  %v930 = vpop.f32.mrf.mxu0
  %931 = vdwg.mxu0
  %932 = vmatprep.subr.bf16.mxu0 %v858
  %933 = vmatpush1.bf16.msra.mxu0 %v857
  %934 = vmatprep.subr.bf16.mxu0 %v854
  %935 = vmatpush1.bf16.msra.mxu0 %v853
  %936 = vmatprep.subr.bf16.mxu0 %v850
  %937 = vmatpush1.bf16.msra.mxu0 %v849
  %938 = vmatprep.subr.bf16.mxu0 %v846
  %939 = vmatpush1.bf16.msra.mxu0 %v845
  %940 = vmatprep.subr.bf16.mxu0 %v842
  %941 = vmatpush1.bf16.msra.mxu0 %v841
  %942 = vmatprep.subr.bf16.mxu0 %v838
  %943 = vmatpush1.bf16.msra.mxu0 %v837
  %944 = vmatprep.subr.bf16.mxu0 %v834
  %945 = vmatpush1.bf16.msra.mxu0 %v833
  %946 = vmatprep.subr.bf16.mxu0 %v830
  %947 = vmatpush1.bf16.msra.mxu0 %v829
  %948 = vmatprep.subr.bf16.mxu0 0
  %949 = vmatpush2.bf16.msra.mxu0 0
  %950 = vmatprep.subr.bf16.mxu0 0
  %951 = vmatpush2.bf16.msra.mxu0 0
  %952 = vmatprep.subr.bf16.mxu0 0
  %953 = vmatpush2.bf16.msra.mxu0 0
  %954 = vmatprep.subr.bf16.mxu0 0
  %955 = vmatpush2.bf16.msra.mxu0 0
  %956 = vmatprep.subr.bf16.mxu0 0
  %957 = vmatpush2.bf16.msra.mxu0 0
  %958 = vmatprep.subr.bf16.mxu0 0
  %959 = vmatpush2.bf16.msra.mxu0 0
  %960 = vmatprep.subr.bf16.mxu0 0
  %961 = vmatpush2.bf16.msra.mxu0 0
  %962 = vmatprep.subr.bf16.mxu0 0
  %963 = vmatpush2.bf16.msra.mxu0 0
  %964 = vmatprep.mubr.bf16.mxu0 0
  %965 = vmatmul.mubr.bf16.gmra.mxu0 %v698
  %v966 = vpop.f32.mrf.mxu0
  %v967 = vadd.f32 0.0, %v966
  %v968 = vpop.f32.mrf.mxu0
  %v969 = vadd.f32 0.0, %v968
  %v970 = vpop.f32.mrf.mxu0
  %v971 = vpop.f32.mrf.mxu0
  %972 = vdwg.mxu0
  %v973 = vadd.f32 %v694, %v926
  %v974 = vadd.f32 %v695, %v928
  %v975 = vadd.f32 %v696, %v967
  %v976 = vadd.f32 %v697, %v969
  %v977 = vld [vmem:[%s2] sm:$0xf]
  %v979 = vlaneseq
  %v980 = vshrl.u32 %v979, 7
  %v981 = vsub.s32 0, %v980
  %v982 = vrot.slane %v977, %v981
  %v983 = vlaneseq
  %v984 = vshrl.u32 %v983, 7
  %v985 = vsub.s32 1, %v984
  %v986 = vrot.slane %v977, %v985
  %v987 = vlaneseq
  %v988 = vshrl.u32 %v987, 7
  %v989 = vsub.s32 2, %v988
  %v990 = vrot.slane %v977, %v989
  %v991 = vlaneseq
  %v992 = vshrl.u32 %v991, 7
  %v993 = vsub.s32 3, %v992
  %v994 = vrot.slane %v977, %v993
  %v999 = vadd.f32 %v973, %v982
  %v1000 = vadd.f32 %v974, %v986
  %v1001 = vadd.f32 %v975, %v990
  %v1002 = vadd.f32 %v976, %v994
  %v1003 = vxor.u32 %v999, 2147483648
  %v1004 = vmul.f32 %v1003, 1.442695
  %v1005 = vpow.pop %v1004
  %v1006 = vadd.f32 %v1005, 1.0
  %v1007 = vrcp.pop %v1006
  %v1008 = vmul.f32 1.0, %v1007
  %v1009 = vxor.u32 %v1000, 2147483648
  %v1010 = vmul.f32 %v1009, 1.442695
  %v1011 = vpow.pop %v1010
  %v1012 = vadd.f32 %v1011, 1.0
  %v1013 = vrcp.pop %v1012
  %v1014 = vmul.f32 1.0, %v1013
  %v1015 = vtanh.pop %v1001
  %v1016 = vxor.u32 %v1002, 2147483648
  %v1017 = vmul.f32 %v1016, 1.442695
  %v1018 = vpow.pop %v1017
  %v1019 = vadd.f32 %v1018, 1.0
  %v1020 = vrcp.pop %v1019
  %v1021 = vmul.f32 1.0, %v1020
  %v1022 = vmul.f32 %v1014, %v688
  %v1023 = vmul.f32 %v1008, %v1015
  %v1024 = vadd.f32 %v1022, %v1023
  %v1025 = vtanh.pop %v1024
  %v1026 = vmul.f32 %v1021, %v1025
  %s1027 = scalar_lea.vmem %s3, 16
  %1028 = vst [vmem:[%s1027] sm:$0xff] %v1026
  %s1029 = scalar_lea.vmem %s0, 96
  %v1030 = vld [vmem:[%s1029] sm:$0xff]
  %v1031 = vld [vmem:[%s1029 + $0x8] sm:$0xff]
  %v1032 = vld [vmem:[%s1029 + $0x10] sm:$0xff]
  %v1033 = vld [vmem:[%s1029 + $0x18] sm:$0xff]
  %v1034 = vpack.c.bf16 %v1026, %v1026
  %v1035 = vld [vmem:[%s1] sm:$0xff]
  %v1036 = vld [vmem:[%s1 + $0x8] sm:$0xff]
  %v1037 = vld [vmem:[%s1 + $0x10] sm:$0xff]
  %v1038 = vld [vmem:[%s1 + $0x18] sm:$0xff]
  %v1039 = vld [vmem:[%s1 + $0x20] sm:$0xff]
  %v1040 = vld [vmem:[%s1 + $0x28] sm:$0xff]
  %v1041 = vld [vmem:[%s1 + $0x30] sm:$0xff]
  %v1042 = vld [vmem:[%s1 + $0x38] sm:$0xff]
  %v1043 = vld [vmem:[%s1 + $0x40] sm:$0xff]
  %v1044 = vld [vmem:[%s1 + $0x48] sm:$0xff]
  %v1045 = vld [vmem:[%s1 + $0x50] sm:$0xff]
  %v1046 = vld [vmem:[%s1 + $0x58] sm:$0xff]
  %v1047 = vld [vmem:[%s1 + $0x60] sm:$0xff]
  %v1048 = vld [vmem:[%s1 + $0x68] sm:$0xff]
  %v1049 = vld [vmem:[%s1 + $0x70] sm:$0xff]
  %v1050 = vld [vmem:[%s1 + $0x78] sm:$0xff]
  %v1051 = vld [vmem:[%s1 + $0x80] sm:$0xff]
  %v1052 = vld [vmem:[%s1 + $0x88] sm:$0xff]
  %v1053 = vld [vmem:[%s1 + $0x90] sm:$0xff]
  %v1054 = vld [vmem:[%s1 + $0x98] sm:$0xff]
  %v1055 = vld [vmem:[%s1 + $0xa0] sm:$0xff]
  %v1056 = vld [vmem:[%s1 + $0xa8] sm:$0xff]
  %v1057 = vld [vmem:[%s1 + $0xb0] sm:$0xff]
  %v1058 = vld [vmem:[%s1 + $0xb8] sm:$0xff]
  %v1059 = vld [vmem:[%s1 + $0xc0] sm:$0xff]
  %v1060 = vld [vmem:[%s1 + $0xc8] sm:$0xff]
  %v1061 = vld [vmem:[%s1 + $0xd0] sm:$0xff]
  %v1062 = vld [vmem:[%s1 + $0xd8] sm:$0xff]
  %v1063 = vld [vmem:[%s1 + $0xe0] sm:$0xff]
  %v1064 = vld [vmem:[%s1 + $0xe8] sm:$0xff]
  %v1065 = vld [vmem:[%s1 + $0xf0] sm:$0xff]
  %v1066 = vld [vmem:[%s1 + $0xf8] sm:$0xff]
  %v1099 = vunpack.c.l.b16 %v1035
  %v1100 = vunpack.c.h.b16 %v1035
  %v1101 = vunpack.c.l.b16 %v1036
  %v1102 = vunpack.c.h.b16 %v1036
  %v1103 = vunpack.c.l.b16 %v1037
  %v1104 = vunpack.c.h.b16 %v1037
  %v1105 = vunpack.c.l.b16 %v1038
  %v1106 = vunpack.c.h.b16 %v1038
  %v1107 = vunpack.c.l.b16 %v1039
  %v1108 = vunpack.c.h.b16 %v1039
  %v1109 = vunpack.c.l.b16 %v1040
  %v1110 = vunpack.c.h.b16 %v1040
  %v1111 = vunpack.c.l.b16 %v1041
  %v1112 = vunpack.c.h.b16 %v1041
  %v1113 = vunpack.c.l.b16 %v1042
  %v1114 = vunpack.c.h.b16 %v1042
  %v1115 = vunpack.c.l.b16 %v1043
  %v1116 = vunpack.c.h.b16 %v1043
  %v1117 = vunpack.c.l.b16 %v1044
  %v1118 = vunpack.c.h.b16 %v1044
  %v1119 = vunpack.c.l.b16 %v1045
  %v1120 = vunpack.c.h.b16 %v1045
  %v1121 = vunpack.c.l.b16 %v1046
  %v1122 = vunpack.c.h.b16 %v1046
  %v1123 = vunpack.c.l.b16 %v1047
  %v1124 = vunpack.c.h.b16 %v1047
  %v1125 = vunpack.c.l.b16 %v1048
  %v1126 = vunpack.c.h.b16 %v1048
  %v1127 = vunpack.c.l.b16 %v1049
  %v1128 = vunpack.c.h.b16 %v1049
  %v1129 = vunpack.c.l.b16 %v1050
  %v1130 = vunpack.c.h.b16 %v1050
  %v1131 = vunpack.c.l.b16 %v1051
  %v1132 = vunpack.c.h.b16 %v1051
  %v1133 = vunpack.c.l.b16 %v1052
  %v1134 = vunpack.c.h.b16 %v1052
  %v1135 = vunpack.c.l.b16 %v1053
  %v1136 = vunpack.c.h.b16 %v1053
  %v1137 = vunpack.c.l.b16 %v1054
  %v1138 = vunpack.c.h.b16 %v1054
  %v1139 = vunpack.c.l.b16 %v1055
  %v1140 = vunpack.c.h.b16 %v1055
  %v1141 = vunpack.c.l.b16 %v1056
  %v1142 = vunpack.c.h.b16 %v1056
  %v1143 = vunpack.c.l.b16 %v1057
  %v1144 = vunpack.c.h.b16 %v1057
  %v1145 = vunpack.c.l.b16 %v1058
  %v1146 = vunpack.c.h.b16 %v1058
  %v1147 = vunpack.c.l.b16 %v1059
  %v1148 = vunpack.c.h.b16 %v1059
  %v1149 = vunpack.c.l.b16 %v1060
  %v1150 = vunpack.c.h.b16 %v1060
  %v1151 = vunpack.c.l.b16 %v1061
  %v1152 = vunpack.c.h.b16 %v1061
  %v1153 = vunpack.c.l.b16 %v1062
  %v1154 = vunpack.c.h.b16 %v1062
  %v1155 = vunpack.c.l.b16 %v1063
  %v1156 = vunpack.c.h.b16 %v1063
  %v1157 = vunpack.c.l.b16 %v1064
  %v1158 = vunpack.c.h.b16 %v1064
  %v1159 = vunpack.c.l.b16 %v1065
  %v1160 = vunpack.c.h.b16 %v1065
  %v1161 = vunpack.c.l.b16 %v1066
  %v1162 = vunpack.c.h.b16 %v1066
  %v1163 = vpack.c.b16 %v1103, %v1099
  %v1164 = vpack.c.b16 %v1104, %v1100
  %v1165 = vpack.c.b16 %v1105, %v1101
  %v1166 = vpack.c.b16 %v1106, %v1102
  %v1167 = vpack.c.b16 %v1111, %v1107
  %v1168 = vpack.c.b16 %v1112, %v1108
  %v1169 = vpack.c.b16 %v1113, %v1109
  %v1170 = vpack.c.b16 %v1114, %v1110
  %v1171 = vpack.c.b16 %v1119, %v1115
  %v1172 = vpack.c.b16 %v1120, %v1116
  %v1173 = vpack.c.b16 %v1121, %v1117
  %v1174 = vpack.c.b16 %v1122, %v1118
  %v1175 = vpack.c.b16 %v1127, %v1123
  %v1176 = vpack.c.b16 %v1128, %v1124
  %v1177 = vpack.c.b16 %v1129, %v1125
  %v1178 = vpack.c.b16 %v1130, %v1126
  %v1179 = vpack.c.b16 %v1135, %v1131
  %v1180 = vpack.c.b16 %v1136, %v1132
  %v1181 = vpack.c.b16 %v1137, %v1133
  %v1182 = vpack.c.b16 %v1138, %v1134
  %v1183 = vpack.c.b16 %v1143, %v1139
  %v1184 = vpack.c.b16 %v1144, %v1140
  %v1185 = vpack.c.b16 %v1145, %v1141
  %v1186 = vpack.c.b16 %v1146, %v1142
  %v1187 = vpack.c.b16 %v1151, %v1147
  %v1188 = vpack.c.b16 %v1152, %v1148
  %v1189 = vpack.c.b16 %v1153, %v1149
  %v1190 = vpack.c.b16 %v1154, %v1150
  %v1191 = vpack.c.b16 %v1159, %v1155
  %v1192 = vpack.c.b16 %v1160, %v1156
  %v1193 = vpack.c.b16 %v1161, %v1157
  %v1194 = vpack.c.b16 %v1162, %v1158
  %1227 = vmatprep.subr.bf16.mxu0 %v1192
  %1228 = vmatpush1.bf16.msra.mxu0 %v1191
  %1229 = vmatprep.subr.bf16.mxu0 %v1188
  %1230 = vmatpush1.bf16.msra.mxu0 %v1187
  %1231 = vmatprep.subr.bf16.mxu0 %v1184
  %1232 = vmatpush1.bf16.msra.mxu0 %v1183
  %1233 = vmatprep.subr.bf16.mxu0 %v1180
  %1234 = vmatpush1.bf16.msra.mxu0 %v1179
  %1235 = vmatprep.subr.bf16.mxu0 %v1176
  %1236 = vmatpush1.bf16.msra.mxu0 %v1175
  %1237 = vmatprep.subr.bf16.mxu0 %v1172
  %1238 = vmatpush1.bf16.msra.mxu0 %v1171
  %1239 = vmatprep.subr.bf16.mxu0 %v1168
  %1240 = vmatpush1.bf16.msra.mxu0 %v1167
  %1241 = vmatprep.subr.bf16.mxu0 %v1164
  %1242 = vmatpush1.bf16.msra.mxu0 %v1163
  %1243 = vmatprep.subr.bf16.mxu0 0
  %1244 = vmatpush2.bf16.msra.mxu0 0
  %1245 = vmatprep.subr.bf16.mxu0 0
  %1246 = vmatpush2.bf16.msra.mxu0 0
  %1247 = vmatprep.subr.bf16.mxu0 0
  %1248 = vmatpush2.bf16.msra.mxu0 0
  %1249 = vmatprep.subr.bf16.mxu0 0
  %1250 = vmatpush2.bf16.msra.mxu0 0
  %1251 = vmatprep.subr.bf16.mxu0 0
  %1252 = vmatpush2.bf16.msra.mxu0 0
  %1253 = vmatprep.subr.bf16.mxu0 0
  %1254 = vmatpush2.bf16.msra.mxu0 0
  %1255 = vmatprep.subr.bf16.mxu0 0
  %1256 = vmatpush2.bf16.msra.mxu0 0
  %1257 = vmatprep.subr.bf16.mxu0 0
  %1258 = vmatpush2.bf16.msra.mxu0 0
  %1259 = vmatprep.mubr.bf16.mxu0 0
  %1260 = vmatmul.mubr.bf16.gmra.mxu0 %v1034
  %v1261 = vpop.f32.mrf.mxu0
  %v1262 = vadd.f32 0.0, %v1261
  %v1263 = vpop.f32.mrf.mxu0
  %v1264 = vadd.f32 0.0, %v1263
  %v1265 = vpop.f32.mrf.mxu0
  %v1266 = vpop.f32.mrf.mxu0
  %1267 = vdwg.mxu0
  %1268 = vmatprep.subr.bf16.mxu0 %v1194
  %1269 = vmatpush1.bf16.msra.mxu0 %v1193
  %1270 = vmatprep.subr.bf16.mxu0 %v1190
  %1271 = vmatpush1.bf16.msra.mxu0 %v1189
  %1272 = vmatprep.subr.bf16.mxu0 %v1186
  %1273 = vmatpush1.bf16.msra.mxu0 %v1185
  %1274 = vmatprep.subr.bf16.mxu0 %v1182
  %1275 = vmatpush1.bf16.msra.mxu0 %v1181
  %1276 = vmatprep.subr.bf16.mxu0 %v1178
  %1277 = vmatpush1.bf16.msra.mxu0 %v1177
  %1278 = vmatprep.subr.bf16.mxu0 %v1174
  %1279 = vmatpush1.bf16.msra.mxu0 %v1173
  %1280 = vmatprep.subr.bf16.mxu0 %v1170
  %1281 = vmatpush1.bf16.msra.mxu0 %v1169
  %1282 = vmatprep.subr.bf16.mxu0 %v1166
  %1283 = vmatpush1.bf16.msra.mxu0 %v1165
  %1284 = vmatprep.subr.bf16.mxu0 0
  %1285 = vmatpush2.bf16.msra.mxu0 0
  %1286 = vmatprep.subr.bf16.mxu0 0
  %1287 = vmatpush2.bf16.msra.mxu0 0
  %1288 = vmatprep.subr.bf16.mxu0 0
  %1289 = vmatpush2.bf16.msra.mxu0 0
  %1290 = vmatprep.subr.bf16.mxu0 0
  %1291 = vmatpush2.bf16.msra.mxu0 0
  %1292 = vmatprep.subr.bf16.mxu0 0
  %1293 = vmatpush2.bf16.msra.mxu0 0
  %1294 = vmatprep.subr.bf16.mxu0 0
  %1295 = vmatpush2.bf16.msra.mxu0 0
  %1296 = vmatprep.subr.bf16.mxu0 0
  %1297 = vmatpush2.bf16.msra.mxu0 0
  %1298 = vmatprep.subr.bf16.mxu0 0
  %1299 = vmatpush2.bf16.msra.mxu0 0
  %1300 = vmatprep.mubr.bf16.mxu0 0
  %1301 = vmatmul.mubr.bf16.gmra.mxu0 %v1034
  %v1302 = vpop.f32.mrf.mxu0
  %v1303 = vadd.f32 0.0, %v1302
  %v1304 = vpop.f32.mrf.mxu0
  %v1305 = vadd.f32 0.0, %v1304
  %v1306 = vpop.f32.mrf.mxu0
  %v1307 = vpop.f32.mrf.mxu0
  %1308 = vdwg.mxu0
  %v1309 = vadd.f32 %v1030, %v1262
  %v1310 = vadd.f32 %v1031, %v1264
  %v1311 = vadd.f32 %v1032, %v1303
  %v1312 = vadd.f32 %v1033, %v1305
  %v1313 = vld [vmem:[%s2] sm:$0xf]
  %v1315 = vlaneseq
  %v1316 = vshrl.u32 %v1315, 7
  %v1317 = vsub.s32 0, %v1316
  %v1318 = vrot.slane %v1313, %v1317
  %v1319 = vlaneseq
  %v1320 = vshrl.u32 %v1319, 7
  %v1321 = vsub.s32 1, %v1320
  %v1322 = vrot.slane %v1313, %v1321
  %v1323 = vlaneseq
  %v1324 = vshrl.u32 %v1323, 7
  %v1325 = vsub.s32 2, %v1324
  %v1326 = vrot.slane %v1313, %v1325
  %v1327 = vlaneseq
  %v1328 = vshrl.u32 %v1327, 7
  %v1329 = vsub.s32 3, %v1328
  %v1330 = vrot.slane %v1313, %v1329
  %v1335 = vadd.f32 %v1309, %v1318
  %v1336 = vadd.f32 %v1310, %v1322
  %v1337 = vadd.f32 %v1311, %v1326
  %v1338 = vadd.f32 %v1312, %v1330
  %v1339 = vxor.u32 %v1335, 2147483648
  %v1340 = vmul.f32 %v1339, 1.442695
  %v1341 = vpow.pop %v1340
  %v1342 = vadd.f32 %v1341, 1.0
  %v1343 = vrcp.pop %v1342
  %v1344 = vmul.f32 1.0, %v1343
  %v1345 = vxor.u32 %v1336, 2147483648
  %v1346 = vmul.f32 %v1345, 1.442695
  %v1347 = vpow.pop %v1346
  %v1348 = vadd.f32 %v1347, 1.0
  %v1349 = vrcp.pop %v1348
  %v1350 = vmul.f32 1.0, %v1349
  %v1351 = vtanh.pop %v1337
  %v1352 = vxor.u32 %v1338, 2147483648
  %v1353 = vmul.f32 %v1352, 1.442695
  %v1354 = vpow.pop %v1353
  %v1355 = vadd.f32 %v1354, 1.0
  %v1356 = vrcp.pop %v1355
  %v1357 = vmul.f32 1.0, %v1356
  %v1358 = vmul.f32 %v1350, %v1024
  %v1359 = vmul.f32 %v1344, %v1351
  %v1360 = vadd.f32 %v1358, %v1359
  %v1361 = vtanh.pop %v1360
  %v1362 = vmul.f32 %v1357, %v1361
  %s1363 = scalar_lea.vmem %s3, 24
  %1364 = vst [vmem:[%s1363] sm:$0xff] %v1362
  %s1365 = scalar_lea.vmem %s0, 128
  %v1366 = vld [vmem:[%s1365] sm:$0xff]
  %v1367 = vld [vmem:[%s1365 + $0x8] sm:$0xff]
  %v1368 = vld [vmem:[%s1365 + $0x10] sm:$0xff]
  %v1369 = vld [vmem:[%s1365 + $0x18] sm:$0xff]
  %v1370 = vpack.c.bf16 %v1362, %v1362
  %v1371 = vld [vmem:[%s1] sm:$0xff]
  %v1372 = vld [vmem:[%s1 + $0x8] sm:$0xff]
  %v1373 = vld [vmem:[%s1 + $0x10] sm:$0xff]
  %v1374 = vld [vmem:[%s1 + $0x18] sm:$0xff]
  %v1375 = vld [vmem:[%s1 + $0x20] sm:$0xff]
  %v1376 = vld [vmem:[%s1 + $0x28] sm:$0xff]
  %v1377 = vld [vmem:[%s1 + $0x30] sm:$0xff]
  %v1378 = vld [vmem:[%s1 + $0x38] sm:$0xff]
  %v1379 = vld [vmem:[%s1 + $0x40] sm:$0xff]
  %v1380 = vld [vmem:[%s1 + $0x48] sm:$0xff]
  %v1381 = vld [vmem:[%s1 + $0x50] sm:$0xff]
  %v1382 = vld [vmem:[%s1 + $0x58] sm:$0xff]
  %v1383 = vld [vmem:[%s1 + $0x60] sm:$0xff]
  %v1384 = vld [vmem:[%s1 + $0x68] sm:$0xff]
  %v1385 = vld [vmem:[%s1 + $0x70] sm:$0xff]
  %v1386 = vld [vmem:[%s1 + $0x78] sm:$0xff]
  %v1387 = vld [vmem:[%s1 + $0x80] sm:$0xff]
  %v1388 = vld [vmem:[%s1 + $0x88] sm:$0xff]
  %v1389 = vld [vmem:[%s1 + $0x90] sm:$0xff]
  %v1390 = vld [vmem:[%s1 + $0x98] sm:$0xff]
  %v1391 = vld [vmem:[%s1 + $0xa0] sm:$0xff]
  %v1392 = vld [vmem:[%s1 + $0xa8] sm:$0xff]
  %v1393 = vld [vmem:[%s1 + $0xb0] sm:$0xff]
  %v1394 = vld [vmem:[%s1 + $0xb8] sm:$0xff]
  %v1395 = vld [vmem:[%s1 + $0xc0] sm:$0xff]
  %v1396 = vld [vmem:[%s1 + $0xc8] sm:$0xff]
  %v1397 = vld [vmem:[%s1 + $0xd0] sm:$0xff]
  %v1398 = vld [vmem:[%s1 + $0xd8] sm:$0xff]
  %v1399 = vld [vmem:[%s1 + $0xe0] sm:$0xff]
  %v1400 = vld [vmem:[%s1 + $0xe8] sm:$0xff]
  %v1401 = vld [vmem:[%s1 + $0xf0] sm:$0xff]
  %v1402 = vld [vmem:[%s1 + $0xf8] sm:$0xff]
  %v1435 = vunpack.c.l.b16 %v1371
  %v1436 = vunpack.c.h.b16 %v1371
  %v1437 = vunpack.c.l.b16 %v1372
  %v1438 = vunpack.c.h.b16 %v1372
  %v1439 = vunpack.c.l.b16 %v1373
  %v1440 = vunpack.c.h.b16 %v1373
  %v1441 = vunpack.c.l.b16 %v1374
  %v1442 = vunpack.c.h.b16 %v1374
  %v1443 = vunpack.c.l.b16 %v1375
  %v1444 = vunpack.c.h.b16 %v1375
  %v1445 = vunpack.c.l.b16 %v1376
  %v1446 = vunpack.c.h.b16 %v1376
  %v1447 = vunpack.c.l.b16 %v1377
  %v1448 = vunpack.c.h.b16 %v1377
  %v1449 = vunpack.c.l.b16 %v1378
  %v1450 = vunpack.c.h.b16 %v1378
  %v1451 = vunpack.c.l.b16 %v1379
  %v1452 = vunpack.c.h.b16 %v1379
  %v1453 = vunpack.c.l.b16 %v1380
  %v1454 = vunpack.c.h.b16 %v1380
  %v1455 = vunpack.c.l.b16 %v1381
  %v1456 = vunpack.c.h.b16 %v1381
  %v1457 = vunpack.c.l.b16 %v1382
  %v1458 = vunpack.c.h.b16 %v1382
  %v1459 = vunpack.c.l.b16 %v1383
  %v1460 = vunpack.c.h.b16 %v1383
  %v1461 = vunpack.c.l.b16 %v1384
  %v1462 = vunpack.c.h.b16 %v1384
  %v1463 = vunpack.c.l.b16 %v1385
  %v1464 = vunpack.c.h.b16 %v1385
  %v1465 = vunpack.c.l.b16 %v1386
  %v1466 = vunpack.c.h.b16 %v1386
  %v1467 = vunpack.c.l.b16 %v1387
  %v1468 = vunpack.c.h.b16 %v1387
  %v1469 = vunpack.c.l.b16 %v1388
  %v1470 = vunpack.c.h.b16 %v1388
  %v1471 = vunpack.c.l.b16 %v1389
  %v1472 = vunpack.c.h.b16 %v1389
  %v1473 = vunpack.c.l.b16 %v1390
  %v1474 = vunpack.c.h.b16 %v1390
  %v1475 = vunpack.c.l.b16 %v1391
  %v1476 = vunpack.c.h.b16 %v1391
  %v1477 = vunpack.c.l.b16 %v1392
  %v1478 = vunpack.c.h.b16 %v1392
  %v1479 = vunpack.c.l.b16 %v1393
  %v1480 = vunpack.c.h.b16 %v1393
  %v1481 = vunpack.c.l.b16 %v1394
  %v1482 = vunpack.c.h.b16 %v1394
  %v1483 = vunpack.c.l.b16 %v1395
  %v1484 = vunpack.c.h.b16 %v1395
  %v1485 = vunpack.c.l.b16 %v1396
  %v1486 = vunpack.c.h.b16 %v1396
  %v1487 = vunpack.c.l.b16 %v1397
  %v1488 = vunpack.c.h.b16 %v1397
  %v1489 = vunpack.c.l.b16 %v1398
  %v1490 = vunpack.c.h.b16 %v1398
  %v1491 = vunpack.c.l.b16 %v1399
  %v1492 = vunpack.c.h.b16 %v1399
  %v1493 = vunpack.c.l.b16 %v1400
  %v1494 = vunpack.c.h.b16 %v1400
  %v1495 = vunpack.c.l.b16 %v1401
  %v1496 = vunpack.c.h.b16 %v1401
  %v1497 = vunpack.c.l.b16 %v1402
  %v1498 = vunpack.c.h.b16 %v1402
  %v1499 = vpack.c.b16 %v1439, %v1435
  %v1500 = vpack.c.b16 %v1440, %v1436
  %v1501 = vpack.c.b16 %v1441, %v1437
  %v1502 = vpack.c.b16 %v1442, %v1438
  %v1503 = vpack.c.b16 %v1447, %v1443
  %v1504 = vpack.c.b16 %v1448, %v1444
  %v1505 = vpack.c.b16 %v1449, %v1445
  %v1506 = vpack.c.b16 %v1450, %v1446
  %v1507 = vpack.c.b16 %v1455, %v1451
  %v1508 = vpack.c.b16 %v1456, %v1452
  %v1509 = vpack.c.b16 %v1457, %v1453
  %v1510 = vpack.c.b16 %v1458, %v1454
  %v1511 = vpack.c.b16 %v1463, %v1459
  %v1512 = vpack.c.b16 %v1464, %v1460
  %v1513 = vpack.c.b16 %v1465, %v1461
  %v1514 = vpack.c.b16 %v1466, %v1462
  %v1515 = vpack.c.b16 %v1471, %v1467
  %v1516 = vpack.c.b16 %v1472, %v1468
  %v1517 = vpack.c.b16 %v1473, %v1469
  %v1518 = vpack.c.b16 %v1474, %v1470
  %v1519 = vpack.c.b16 %v1479, %v1475
  %v1520 = vpack.c.b16 %v1480, %v1476
  %v1521 = vpack.c.b16 %v1481, %v1477
  %v1522 = vpack.c.b16 %v1482, %v1478
  %v1523 = vpack.c.b16 %v1487, %v1483
  %v1524 = vpack.c.b16 %v1488, %v1484
  %v1525 = vpack.c.b16 %v1489, %v1485
  %v1526 = vpack.c.b16 %v1490, %v1486
  %v1527 = vpack.c.b16 %v1495, %v1491
  %v1528 = vpack.c.b16 %v1496, %v1492
  %v1529 = vpack.c.b16 %v1497, %v1493
  %v1530 = vpack.c.b16 %v1498, %v1494
  %1563 = vmatprep.subr.bf16.mxu0 %v1528
  %1564 = vmatpush1.bf16.msra.mxu0 %v1527
  %1565 = vmatprep.subr.bf16.mxu0 %v1524
  %1566 = vmatpush1.bf16.msra.mxu0 %v1523
  %1567 = vmatprep.subr.bf16.mxu0 %v1520
  %1568 = vmatpush1.bf16.msra.mxu0 %v1519
  %1569 = vmatprep.subr.bf16.mxu0 %v1516
  %1570 = vmatpush1.bf16.msra.mxu0 %v1515
  %1571 = vmatprep.subr.bf16.mxu0 %v1512
  %1572 = vmatpush1.bf16.msra.mxu0 %v1511
  %1573 = vmatprep.subr.bf16.mxu0 %v1508
  %1574 = vmatpush1.bf16.msra.mxu0 %v1507
  %1575 = vmatprep.subr.bf16.mxu0 %v1504
  %1576 = vmatpush1.bf16.msra.mxu0 %v1503
  %1577 = vmatprep.subr.bf16.mxu0 %v1500
  %1578 = vmatpush1.bf16.msra.mxu0 %v1499
  %1579 = vmatprep.subr.bf16.mxu0 0
  %1580 = vmatpush2.bf16.msra.mxu0 0
  %1581 = vmatprep.subr.bf16.mxu0 0
  %1582 = vmatpush2.bf16.msra.mxu0 0
  %1583 = vmatprep.subr.bf16.mxu0 0
  %1584 = vmatpush2.bf16.msra.mxu0 0
  %1585 = vmatprep.subr.bf16.mxu0 0
  %1586 = vmatpush2.bf16.msra.mxu0 0
  %1587 = vmatprep.subr.bf16.mxu0 0
  %1588 = vmatpush2.bf16.msra.mxu0 0
  %1589 = vmatprep.subr.bf16.mxu0 0
  %1590 = vmatpush2.bf16.msra.mxu0 0
  %1591 = vmatprep.subr.bf16.mxu0 0
  %1592 = vmatpush2.bf16.msra.mxu0 0
  %1593 = vmatprep.subr.bf16.mxu0 0
  %1594 = vmatpush2.bf16.msra.mxu0 0
  %1595 = vmatprep.mubr.bf16.mxu0 0
  %1596 = vmatmul.mubr.bf16.gmra.mxu0 %v1370
  %v1597 = vpop.f32.mrf.mxu0
  %v1598 = vadd.f32 0.0, %v1597
  %v1599 = vpop.f32.mrf.mxu0
  %v1600 = vadd.f32 0.0, %v1599
  %v1601 = vpop.f32.mrf.mxu0
  %v1602 = vpop.f32.mrf.mxu0
  %1603 = vdwg.mxu0
  %1604 = vmatprep.subr.bf16.mxu0 %v1530
  %1605 = vmatpush1.bf16.msra.mxu0 %v1529
  %1606 = vmatprep.subr.bf16.mxu0 %v1526
  %1607 = vmatpush1.bf16.msra.mxu0 %v1525
  %1608 = vmatprep.subr.bf16.mxu0 %v1522
  %1609 = vmatpush1.bf16.msra.mxu0 %v1521
  %1610 = vmatprep.subr.bf16.mxu0 %v1518
  %1611 = vmatpush1.bf16.msra.mxu0 %v1517
  %1612 = vmatprep.subr.bf16.mxu0 %v1514
  %1613 = vmatpush1.bf16.msra.mxu0 %v1513
  %1614 = vmatprep.subr.bf16.mxu0 %v1510
  %1615 = vmatpush1.bf16.msra.mxu0 %v1509
  %1616 = vmatprep.subr.bf16.mxu0 %v1506
  %1617 = vmatpush1.bf16.msra.mxu0 %v1505
  %1618 = vmatprep.subr.bf16.mxu0 %v1502
  %1619 = vmatpush1.bf16.msra.mxu0 %v1501
  %1620 = vmatprep.subr.bf16.mxu0 0
  %1621 = vmatpush2.bf16.msra.mxu0 0
  %1622 = vmatprep.subr.bf16.mxu0 0
  %1623 = vmatpush2.bf16.msra.mxu0 0
  %1624 = vmatprep.subr.bf16.mxu0 0
  %1625 = vmatpush2.bf16.msra.mxu0 0
  %1626 = vmatprep.subr.bf16.mxu0 0
  %1627 = vmatpush2.bf16.msra.mxu0 0
  %1628 = vmatprep.subr.bf16.mxu0 0
  %1629 = vmatpush2.bf16.msra.mxu0 0
  %1630 = vmatprep.subr.bf16.mxu0 0
  %1631 = vmatpush2.bf16.msra.mxu0 0
  %1632 = vmatprep.subr.bf16.mxu0 0
  %1633 = vmatpush2.bf16.msra.mxu0 0
  %1634 = vmatprep.subr.bf16.mxu0 0
  %1635 = vmatpush2.bf16.msra.mxu0 0
  %1636 = vmatprep.mubr.bf16.mxu0 0
  %1637 = vmatmul.mubr.bf16.gmra.mxu0 %v1370
  %v1638 = vpop.f32.mrf.mxu0
  %v1639 = vadd.f32 0.0, %v1638
  %v1640 = vpop.f32.mrf.mxu0
  %v1641 = vadd.f32 0.0, %v1640
  %v1642 = vpop.f32.mrf.mxu0
  %v1643 = vpop.f32.mrf.mxu0
  %1644 = vdwg.mxu0
  %v1645 = vadd.f32 %v1366, %v1598
  %v1646 = vadd.f32 %v1367, %v1600
  %v1647 = vadd.f32 %v1368, %v1639
  %v1648 = vadd.f32 %v1369, %v1641
  %v1649 = vld [vmem:[%s2] sm:$0xf]
  %v1651 = vlaneseq
  %v1652 = vshrl.u32 %v1651, 7
  %v1653 = vsub.s32 0, %v1652
  %v1654 = vrot.slane %v1649, %v1653
  %v1655 = vlaneseq
  %v1656 = vshrl.u32 %v1655, 7
  %v1657 = vsub.s32 1, %v1656
  %v1658 = vrot.slane %v1649, %v1657
  %v1659 = vlaneseq
  %v1660 = vshrl.u32 %v1659, 7
  %v1661 = vsub.s32 2, %v1660
  %v1662 = vrot.slane %v1649, %v1661
  %v1663 = vlaneseq
  %v1664 = vshrl.u32 %v1663, 7
  %v1665 = vsub.s32 3, %v1664
  %v1666 = vrot.slane %v1649, %v1665
  %v1671 = vadd.f32 %v1645, %v1654
  %v1672 = vadd.f32 %v1646, %v1658
  %v1673 = vadd.f32 %v1647, %v1662
  %v1674 = vadd.f32 %v1648, %v1666
  %v1675 = vxor.u32 %v1671, 2147483648
  %v1676 = vmul.f32 %v1675, 1.442695
  %v1677 = vpow.pop %v1676
  %v1678 = vadd.f32 %v1677, 1.0
  %v1679 = vrcp.pop %v1678
  %v1680 = vmul.f32 1.0, %v1679
  %v1681 = vxor.u32 %v1672, 2147483648
  %v1682 = vmul.f32 %v1681, 1.442695
  %v1683 = vpow.pop %v1682
  %v1684 = vadd.f32 %v1683, 1.0
  %v1685 = vrcp.pop %v1684
  %v1686 = vmul.f32 1.0, %v1685
  %v1687 = vtanh.pop %v1673
  %v1688 = vxor.u32 %v1674, 2147483648
  %v1689 = vmul.f32 %v1688, 1.442695
  %v1690 = vpow.pop %v1689
  %v1691 = vadd.f32 %v1690, 1.0
  %v1692 = vrcp.pop %v1691
  %v1693 = vmul.f32 1.0, %v1692
  %v1694 = vmul.f32 %v1686, %v1360
  %v1695 = vmul.f32 %v1680, %v1687
  %v1696 = vadd.f32 %v1694, %v1695
  %v1697 = vtanh.pop %v1696
  %v1698 = vmul.f32 %v1693, %v1697
  %s1699 = scalar_lea.vmem %s3, 32
  %1700 = vst [vmem:[%s1699] sm:$0xff] %v1698
  %s1701 = scalar_lea.vmem %s0, 160
  %v1702 = vld [vmem:[%s1701] sm:$0xff]
  %v1703 = vld [vmem:[%s1701 + $0x8] sm:$0xff]
  %v1704 = vld [vmem:[%s1701 + $0x10] sm:$0xff]
  %v1705 = vld [vmem:[%s1701 + $0x18] sm:$0xff]
  %v1706 = vpack.c.bf16 %v1698, %v1698
  %v1707 = vld [vmem:[%s1] sm:$0xff]
  %v1708 = vld [vmem:[%s1 + $0x8] sm:$0xff]
  %v1709 = vld [vmem:[%s1 + $0x10] sm:$0xff]
  %v1710 = vld [vmem:[%s1 + $0x18] sm:$0xff]
  %v1711 = vld [vmem:[%s1 + $0x20] sm:$0xff]
  %v1712 = vld [vmem:[%s1 + $0x28] sm:$0xff]
  %v1713 = vld [vmem:[%s1 + $0x30] sm:$0xff]
  %v1714 = vld [vmem:[%s1 + $0x38] sm:$0xff]
  %v1715 = vld [vmem:[%s1 + $0x40] sm:$0xff]
  %v1716 = vld [vmem:[%s1 + $0x48] sm:$0xff]
  %v1717 = vld [vmem:[%s1 + $0x50] sm:$0xff]
  %v1718 = vld [vmem:[%s1 + $0x58] sm:$0xff]
  %v1719 = vld [vmem:[%s1 + $0x60] sm:$0xff]
  %v1720 = vld [vmem:[%s1 + $0x68] sm:$0xff]
  %v1721 = vld [vmem:[%s1 + $0x70] sm:$0xff]
  %v1722 = vld [vmem:[%s1 + $0x78] sm:$0xff]
  %v1723 = vld [vmem:[%s1 + $0x80] sm:$0xff]
  %v1724 = vld [vmem:[%s1 + $0x88] sm:$0xff]
  %v1725 = vld [vmem:[%s1 + $0x90] sm:$0xff]
  %v1726 = vld [vmem:[%s1 + $0x98] sm:$0xff]
  %v1727 = vld [vmem:[%s1 + $0xa0] sm:$0xff]
  %v1728 = vld [vmem:[%s1 + $0xa8] sm:$0xff]
  %v1729 = vld [vmem:[%s1 + $0xb0] sm:$0xff]
  %v1730 = vld [vmem:[%s1 + $0xb8] sm:$0xff]
  %v1731 = vld [vmem:[%s1 + $0xc0] sm:$0xff]
  %v1732 = vld [vmem:[%s1 + $0xc8] sm:$0xff]
  %v1733 = vld [vmem:[%s1 + $0xd0] sm:$0xff]
  %v1734 = vld [vmem:[%s1 + $0xd8] sm:$0xff]
  %v1735 = vld [vmem:[%s1 + $0xe0] sm:$0xff]
  %v1736 = vld [vmem:[%s1 + $0xe8] sm:$0xff]
  %v1737 = vld [vmem:[%s1 + $0xf0] sm:$0xff]
  %v1738 = vld [vmem:[%s1 + $0xf8] sm:$0xff]
  %v1771 = vunpack.c.l.b16 %v1707
  %v1772 = vunpack.c.h.b16 %v1707
  %v1773 = vunpack.c.l.b16 %v1708
  %v1774 = vunpack.c.h.b16 %v1708
  %v1775 = vunpack.c.l.b16 %v1709
  %v1776 = vunpack.c.h.b16 %v1709
  %v1777 = vunpack.c.l.b16 %v1710
  %v1778 = vunpack.c.h.b16 %v1710
  %v1779 = vunpack.c.l.b16 %v1711
  %v1780 = vunpack.c.h.b16 %v1711
  %v1781 = vunpack.c.l.b16 %v1712
  %v1782 = vunpack.c.h.b16 %v1712
  %v1783 = vunpack.c.l.b16 %v1713
  %v1784 = vunpack.c.h.b16 %v1713
  %v1785 = vunpack.c.l.b16 %v1714
  %v1786 = vunpack.c.h.b16 %v1714
  %v1787 = vunpack.c.l.b16 %v1715
  %v1788 = vunpack.c.h.b16 %v1715
  %v1789 = vunpack.c.l.b16 %v1716
  %v1790 = vunpack.c.h.b16 %v1716
  %v1791 = vunpack.c.l.b16 %v1717
  %v1792 = vunpack.c.h.b16 %v1717
  %v1793 = vunpack.c.l.b16 %v1718
  %v1794 = vunpack.c.h.b16 %v1718
  %v1795 = vunpack.c.l.b16 %v1719
  %v1796 = vunpack.c.h.b16 %v1719
  %v1797 = vunpack.c.l.b16 %v1720
  %v1798 = vunpack.c.h.b16 %v1720
  %v1799 = vunpack.c.l.b16 %v1721
  %v1800 = vunpack.c.h.b16 %v1721
  %v1801 = vunpack.c.l.b16 %v1722
  %v1802 = vunpack.c.h.b16 %v1722
  %v1803 = vunpack.c.l.b16 %v1723
  %v1804 = vunpack.c.h.b16 %v1723
  %v1805 = vunpack.c.l.b16 %v1724
  %v1806 = vunpack.c.h.b16 %v1724
  %v1807 = vunpack.c.l.b16 %v1725
  %v1808 = vunpack.c.h.b16 %v1725
  %v1809 = vunpack.c.l.b16 %v1726
  %v1810 = vunpack.c.h.b16 %v1726
  %v1811 = vunpack.c.l.b16 %v1727
  %v1812 = vunpack.c.h.b16 %v1727
  %v1813 = vunpack.c.l.b16 %v1728
  %v1814 = vunpack.c.h.b16 %v1728
  %v1815 = vunpack.c.l.b16 %v1729
  %v1816 = vunpack.c.h.b16 %v1729
  %v1817 = vunpack.c.l.b16 %v1730
  %v1818 = vunpack.c.h.b16 %v1730
  %v1819 = vunpack.c.l.b16 %v1731
  %v1820 = vunpack.c.h.b16 %v1731
  %v1821 = vunpack.c.l.b16 %v1732
  %v1822 = vunpack.c.h.b16 %v1732
  %v1823 = vunpack.c.l.b16 %v1733
  %v1824 = vunpack.c.h.b16 %v1733
  %v1825 = vunpack.c.l.b16 %v1734
  %v1826 = vunpack.c.h.b16 %v1734
  %v1827 = vunpack.c.l.b16 %v1735
  %v1828 = vunpack.c.h.b16 %v1735
  %v1829 = vunpack.c.l.b16 %v1736
  %v1830 = vunpack.c.h.b16 %v1736
  %v1831 = vunpack.c.l.b16 %v1737
  %v1832 = vunpack.c.h.b16 %v1737
  %v1833 = vunpack.c.l.b16 %v1738
  %v1834 = vunpack.c.h.b16 %v1738
  %v1835 = vpack.c.b16 %v1775, %v1771
  %v1836 = vpack.c.b16 %v1776, %v1772
  %v1837 = vpack.c.b16 %v1777, %v1773
  %v1838 = vpack.c.b16 %v1778, %v1774
  %v1839 = vpack.c.b16 %v1783, %v1779
  %v1840 = vpack.c.b16 %v1784, %v1780
  %v1841 = vpack.c.b16 %v1785, %v1781
  %v1842 = vpack.c.b16 %v1786, %v1782
  %v1843 = vpack.c.b16 %v1791, %v1787
  %v1844 = vpack.c.b16 %v1792, %v1788
  %v1845 = vpack.c.b16 %v1793, %v1789
  %v1846 = vpack.c.b16 %v1794, %v1790
  %v1847 = vpack.c.b16 %v1799, %v1795
  %v1848 = vpack.c.b16 %v1800, %v1796
  %v1849 = vpack.c.b16 %v1801, %v1797
  %v1850 = vpack.c.b16 %v1802, %v1798
  %v1851 = vpack.c.b16 %v1807, %v1803
  %v1852 = vpack.c.b16 %v1808, %v1804
  %v1853 = vpack.c.b16 %v1809, %v1805
  %v1854 = vpack.c.b16 %v1810, %v1806
  %v1855 = vpack.c.b16 %v1815, %v1811
  %v1856 = vpack.c.b16 %v1816, %v1812
  %v1857 = vpack.c.b16 %v1817, %v1813
  %v1858 = vpack.c.b16 %v1818, %v1814
  %v1859 = vpack.c.b16 %v1823, %v1819
  %v1860 = vpack.c.b16 %v1824, %v1820
  %v1861 = vpack.c.b16 %v1825, %v1821
  %v1862 = vpack.c.b16 %v1826, %v1822
  %v1863 = vpack.c.b16 %v1831, %v1827
  %v1864 = vpack.c.b16 %v1832, %v1828
  %v1865 = vpack.c.b16 %v1833, %v1829
  %v1866 = vpack.c.b16 %v1834, %v1830
  %1899 = vmatprep.subr.bf16.mxu0 %v1864
  %1900 = vmatpush1.bf16.msra.mxu0 %v1863
  %1901 = vmatprep.subr.bf16.mxu0 %v1860
  %1902 = vmatpush1.bf16.msra.mxu0 %v1859
  %1903 = vmatprep.subr.bf16.mxu0 %v1856
  %1904 = vmatpush1.bf16.msra.mxu0 %v1855
  %1905 = vmatprep.subr.bf16.mxu0 %v1852
  %1906 = vmatpush1.bf16.msra.mxu0 %v1851
  %1907 = vmatprep.subr.bf16.mxu0 %v1848
  %1908 = vmatpush1.bf16.msra.mxu0 %v1847
  %1909 = vmatprep.subr.bf16.mxu0 %v1844
  %1910 = vmatpush1.bf16.msra.mxu0 %v1843
  %1911 = vmatprep.subr.bf16.mxu0 %v1840
  %1912 = vmatpush1.bf16.msra.mxu0 %v1839
  %1913 = vmatprep.subr.bf16.mxu0 %v1836
  %1914 = vmatpush1.bf16.msra.mxu0 %v1835
  %1915 = vmatprep.subr.bf16.mxu0 0
  %1916 = vmatpush2.bf16.msra.mxu0 0
  %1917 = vmatprep.subr.bf16.mxu0 0
  %1918 = vmatpush2.bf16.msra.mxu0 0
  %1919 = vmatprep.subr.bf16.mxu0 0
  %1920 = vmatpush2.bf16.msra.mxu0 0
  %1921 = vmatprep.subr.bf16.mxu0 0
  %1922 = vmatpush2.bf16.msra.mxu0 0
  %1923 = vmatprep.subr.bf16.mxu0 0
  %1924 = vmatpush2.bf16.msra.mxu0 0
  %1925 = vmatprep.subr.bf16.mxu0 0
  %1926 = vmatpush2.bf16.msra.mxu0 0
  %1927 = vmatprep.subr.bf16.mxu0 0
  %1928 = vmatpush2.bf16.msra.mxu0 0
  %1929 = vmatprep.subr.bf16.mxu0 0
  %1930 = vmatpush2.bf16.msra.mxu0 0
  %1931 = vmatprep.mubr.bf16.mxu0 0
  %1932 = vmatmul.mubr.bf16.gmra.mxu0 %v1706
  %v1933 = vpop.f32.mrf.mxu0
  %v1934 = vadd.f32 0.0, %v1933
  %v1935 = vpop.f32.mrf.mxu0
  %v1936 = vadd.f32 0.0, %v1935
  %v1937 = vpop.f32.mrf.mxu0
  %v1938 = vpop.f32.mrf.mxu0
  %1939 = vdwg.mxu0
  %1940 = vmatprep.subr.bf16.mxu0 %v1866
  %1941 = vmatpush1.bf16.msra.mxu0 %v1865
  %1942 = vmatprep.subr.bf16.mxu0 %v1862
  %1943 = vmatpush1.bf16.msra.mxu0 %v1861
  %1944 = vmatprep.subr.bf16.mxu0 %v1858
  %1945 = vmatpush1.bf16.msra.mxu0 %v1857
  %1946 = vmatprep.subr.bf16.mxu0 %v1854
  %1947 = vmatpush1.bf16.msra.mxu0 %v1853
  %1948 = vmatprep.subr.bf16.mxu0 %v1850
  %1949 = vmatpush1.bf16.msra.mxu0 %v1849
  %1950 = vmatprep.subr.bf16.mxu0 %v1846
  %1951 = vmatpush1.bf16.msra.mxu0 %v1845
  %1952 = vmatprep.subr.bf16.mxu0 %v1842
  %1953 = vmatpush1.bf16.msra.mxu0 %v1841
  %1954 = vmatprep.subr.bf16.mxu0 %v1838
  %1955 = vmatpush1.bf16.msra.mxu0 %v1837
  %1956 = vmatprep.subr.bf16.mxu0 0
  %1957 = vmatpush2.bf16.msra.mxu0 0
  %1958 = vmatprep.subr.bf16.mxu0 0
  %1959 = vmatpush2.bf16.msra.mxu0 0
  %1960 = vmatprep.subr.bf16.mxu0 0
  %1961 = vmatpush2.bf16.msra.mxu0 0
  %1962 = vmatprep.subr.bf16.mxu0 0
  %1963 = vmatpush2.bf16.msra.mxu0 0
  %1964 = vmatprep.subr.bf16.mxu0 0
  %1965 = vmatpush2.bf16.msra.mxu0 0
  %1966 = vmatprep.subr.bf16.mxu0 0
  %1967 = vmatpush2.bf16.msra.mxu0 0
  %1968 = vmatprep.subr.bf16.mxu0 0
  %1969 = vmatpush2.bf16.msra.mxu0 0
  %1970 = vmatprep.subr.bf16.mxu0 0
  %1971 = vmatpush2.bf16.msra.mxu0 0
  %1972 = vmatprep.mubr.bf16.mxu0 0
  %1973 = vmatmul.mubr.bf16.gmra.mxu0 %v1706
  %v1974 = vpop.f32.mrf.mxu0
  %v1975 = vadd.f32 0.0, %v1974
  %v1976 = vpop.f32.mrf.mxu0
  %v1977 = vadd.f32 0.0, %v1976
  %v1978 = vpop.f32.mrf.mxu0
  %v1979 = vpop.f32.mrf.mxu0
  %1980 = vdwg.mxu0
  %v1981 = vadd.f32 %v1702, %v1934
  %v1982 = vadd.f32 %v1703, %v1936
  %v1983 = vadd.f32 %v1704, %v1975
  %v1984 = vadd.f32 %v1705, %v1977
  %v1985 = vld [vmem:[%s2] sm:$0xf]
  %v1987 = vlaneseq
  %v1988 = vshrl.u32 %v1987, 7
  %v1989 = vsub.s32 0, %v1988
  %v1990 = vrot.slane %v1985, %v1989
  %v1991 = vlaneseq
  %v1992 = vshrl.u32 %v1991, 7
  %v1993 = vsub.s32 1, %v1992
  %v1994 = vrot.slane %v1985, %v1993
  %v1995 = vlaneseq
  %v1996 = vshrl.u32 %v1995, 7
  %v1997 = vsub.s32 2, %v1996
  %v1998 = vrot.slane %v1985, %v1997
  %v1999 = vlaneseq
  %v2000 = vshrl.u32 %v1999, 7
  %v2001 = vsub.s32 3, %v2000
  %v2002 = vrot.slane %v1985, %v2001
  %v2007 = vadd.f32 %v1981, %v1990
  %v2008 = vadd.f32 %v1982, %v1994
  %v2009 = vadd.f32 %v1983, %v1998
  %v2010 = vadd.f32 %v1984, %v2002
  %v2011 = vxor.u32 %v2007, 2147483648
  %v2012 = vmul.f32 %v2011, 1.442695
  %v2013 = vpow.pop %v2012
  %v2014 = vadd.f32 %v2013, 1.0
  %v2015 = vrcp.pop %v2014
  %v2016 = vmul.f32 1.0, %v2015
  %v2017 = vxor.u32 %v2008, 2147483648
  %v2018 = vmul.f32 %v2017, 1.442695
  %v2019 = vpow.pop %v2018
  %v2020 = vadd.f32 %v2019, 1.0
  %v2021 = vrcp.pop %v2020
  %v2022 = vmul.f32 1.0, %v2021
  %v2023 = vtanh.pop %v2009
  %v2024 = vxor.u32 %v2010, 2147483648
  %v2025 = vmul.f32 %v2024, 1.442695
  %v2026 = vpow.pop %v2025
  %v2027 = vadd.f32 %v2026, 1.0
  %v2028 = vrcp.pop %v2027
  %v2029 = vmul.f32 1.0, %v2028
  %v2030 = vmul.f32 %v2022, %v1696
  %v2031 = vmul.f32 %v2016, %v2023
  %v2032 = vadd.f32 %v2030, %v2031
  %v2033 = vtanh.pop %v2032
  %v2034 = vmul.f32 %v2029, %v2033
  %s2035 = scalar_lea.vmem %s3, 40
  %2036 = vst [vmem:[%s2035] sm:$0xff] %v2034
  %s2037 = scalar_lea.vmem %s0, 192
  %v2038 = vld [vmem:[%s2037] sm:$0xff]
  %v2039 = vld [vmem:[%s2037 + $0x8] sm:$0xff]
  %v2040 = vld [vmem:[%s2037 + $0x10] sm:$0xff]
  %v2041 = vld [vmem:[%s2037 + $0x18] sm:$0xff]
  %v2042 = vpack.c.bf16 %v2034, %v2034
  %v2043 = vld [vmem:[%s1] sm:$0xff]
  %v2044 = vld [vmem:[%s1 + $0x8] sm:$0xff]
  %v2045 = vld [vmem:[%s1 + $0x10] sm:$0xff]
  %v2046 = vld [vmem:[%s1 + $0x18] sm:$0xff]
  %v2047 = vld [vmem:[%s1 + $0x20] sm:$0xff]
  %v2048 = vld [vmem:[%s1 + $0x28] sm:$0xff]
  %v2049 = vld [vmem:[%s1 + $0x30] sm:$0xff]
  %v2050 = vld [vmem:[%s1 + $0x38] sm:$0xff]
  %v2051 = vld [vmem:[%s1 + $0x40] sm:$0xff]
  %v2052 = vld [vmem:[%s1 + $0x48] sm:$0xff]
  %v2053 = vld [vmem:[%s1 + $0x50] sm:$0xff]
  %v2054 = vld [vmem:[%s1 + $0x58] sm:$0xff]
  %v2055 = vld [vmem:[%s1 + $0x60] sm:$0xff]
  %v2056 = vld [vmem:[%s1 + $0x68] sm:$0xff]
  %v2057 = vld [vmem:[%s1 + $0x70] sm:$0xff]
  %v2058 = vld [vmem:[%s1 + $0x78] sm:$0xff]
  %v2059 = vld [vmem:[%s1 + $0x80] sm:$0xff]
  %v2060 = vld [vmem:[%s1 + $0x88] sm:$0xff]
  %v2061 = vld [vmem:[%s1 + $0x90] sm:$0xff]
  %v2062 = vld [vmem:[%s1 + $0x98] sm:$0xff]
  %v2063 = vld [vmem:[%s1 + $0xa0] sm:$0xff]
  %v2064 = vld [vmem:[%s1 + $0xa8] sm:$0xff]
  %v2065 = vld [vmem:[%s1 + $0xb0] sm:$0xff]
  %v2066 = vld [vmem:[%s1 + $0xb8] sm:$0xff]
  %v2067 = vld [vmem:[%s1 + $0xc0] sm:$0xff]
  %v2068 = vld [vmem:[%s1 + $0xc8] sm:$0xff]
  %v2069 = vld [vmem:[%s1 + $0xd0] sm:$0xff]
  %v2070 = vld [vmem:[%s1 + $0xd8] sm:$0xff]
  %v2071 = vld [vmem:[%s1 + $0xe0] sm:$0xff]
  %v2072 = vld [vmem:[%s1 + $0xe8] sm:$0xff]
  %v2073 = vld [vmem:[%s1 + $0xf0] sm:$0xff]
  %v2074 = vld [vmem:[%s1 + $0xf8] sm:$0xff]
  %v2107 = vunpack.c.l.b16 %v2043
  %v2108 = vunpack.c.h.b16 %v2043
  %v2109 = vunpack.c.l.b16 %v2044
  %v2110 = vunpack.c.h.b16 %v2044
  %v2111 = vunpack.c.l.b16 %v2045
  %v2112 = vunpack.c.h.b16 %v2045
  %v2113 = vunpack.c.l.b16 %v2046
  %v2114 = vunpack.c.h.b16 %v2046
  %v2115 = vunpack.c.l.b16 %v2047
  %v2116 = vunpack.c.h.b16 %v2047
  %v2117 = vunpack.c.l.b16 %v2048
  %v2118 = vunpack.c.h.b16 %v2048
  %v2119 = vunpack.c.l.b16 %v2049
  %v2120 = vunpack.c.h.b16 %v2049
  %v2121 = vunpack.c.l.b16 %v2050
  %v2122 = vunpack.c.h.b16 %v2050
  %v2123 = vunpack.c.l.b16 %v2051
  %v2124 = vunpack.c.h.b16 %v2051
  %v2125 = vunpack.c.l.b16 %v2052
  %v2126 = vunpack.c.h.b16 %v2052
  %v2127 = vunpack.c.l.b16 %v2053
  %v2128 = vunpack.c.h.b16 %v2053
  %v2129 = vunpack.c.l.b16 %v2054
  %v2130 = vunpack.c.h.b16 %v2054
  %v2131 = vunpack.c.l.b16 %v2055
  %v2132 = vunpack.c.h.b16 %v2055
  %v2133 = vunpack.c.l.b16 %v2056
  %v2134 = vunpack.c.h.b16 %v2056
  %v2135 = vunpack.c.l.b16 %v2057
  %v2136 = vunpack.c.h.b16 %v2057
  %v2137 = vunpack.c.l.b16 %v2058
  %v2138 = vunpack.c.h.b16 %v2058
  %v2139 = vunpack.c.l.b16 %v2059
  %v2140 = vunpack.c.h.b16 %v2059
  %v2141 = vunpack.c.l.b16 %v2060
  %v2142 = vunpack.c.h.b16 %v2060
  %v2143 = vunpack.c.l.b16 %v2061
  %v2144 = vunpack.c.h.b16 %v2061
  %v2145 = vunpack.c.l.b16 %v2062
  %v2146 = vunpack.c.h.b16 %v2062
  %v2147 = vunpack.c.l.b16 %v2063
  %v2148 = vunpack.c.h.b16 %v2063
  %v2149 = vunpack.c.l.b16 %v2064
  %v2150 = vunpack.c.h.b16 %v2064
  %v2151 = vunpack.c.l.b16 %v2065
  %v2152 = vunpack.c.h.b16 %v2065
  %v2153 = vunpack.c.l.b16 %v2066
  %v2154 = vunpack.c.h.b16 %v2066
  %v2155 = vunpack.c.l.b16 %v2067
  %v2156 = vunpack.c.h.b16 %v2067
  %v2157 = vunpack.c.l.b16 %v2068
  %v2158 = vunpack.c.h.b16 %v2068
  %v2159 = vunpack.c.l.b16 %v2069
  %v2160 = vunpack.c.h.b16 %v2069
  %v2161 = vunpack.c.l.b16 %v2070
  %v2162 = vunpack.c.h.b16 %v2070
  %v2163 = vunpack.c.l.b16 %v2071
  %v2164 = vunpack.c.h.b16 %v2071
  %v2165 = vunpack.c.l.b16 %v2072
  %v2166 = vunpack.c.h.b16 %v2072
  %v2167 = vunpack.c.l.b16 %v2073
  %v2168 = vunpack.c.h.b16 %v2073
  %v2169 = vunpack.c.l.b16 %v2074
  %v2170 = vunpack.c.h.b16 %v2074
  %v2171 = vpack.c.b16 %v2111, %v2107
  %v2172 = vpack.c.b16 %v2112, %v2108
  %v2173 = vpack.c.b16 %v2113, %v2109
  %v2174 = vpack.c.b16 %v2114, %v2110
  %v2175 = vpack.c.b16 %v2119, %v2115
  %v2176 = vpack.c.b16 %v2120, %v2116
  %v2177 = vpack.c.b16 %v2121, %v2117
  %v2178 = vpack.c.b16 %v2122, %v2118
  %v2179 = vpack.c.b16 %v2127, %v2123
  %v2180 = vpack.c.b16 %v2128, %v2124
  %v2181 = vpack.c.b16 %v2129, %v2125
  %v2182 = vpack.c.b16 %v2130, %v2126
  %v2183 = vpack.c.b16 %v2135, %v2131
  %v2184 = vpack.c.b16 %v2136, %v2132
  %v2185 = vpack.c.b16 %v2137, %v2133
  %v2186 = vpack.c.b16 %v2138, %v2134
  %v2187 = vpack.c.b16 %v2143, %v2139
  %v2188 = vpack.c.b16 %v2144, %v2140
  %v2189 = vpack.c.b16 %v2145, %v2141
  %v2190 = vpack.c.b16 %v2146, %v2142
  %v2191 = vpack.c.b16 %v2151, %v2147
  %v2192 = vpack.c.b16 %v2152, %v2148
  %v2193 = vpack.c.b16 %v2153, %v2149
  %v2194 = vpack.c.b16 %v2154, %v2150
  %v2195 = vpack.c.b16 %v2159, %v2155
  %v2196 = vpack.c.b16 %v2160, %v2156
  %v2197 = vpack.c.b16 %v2161, %v2157
  %v2198 = vpack.c.b16 %v2162, %v2158
  %v2199 = vpack.c.b16 %v2167, %v2163
  %v2200 = vpack.c.b16 %v2168, %v2164
  %v2201 = vpack.c.b16 %v2169, %v2165
  %v2202 = vpack.c.b16 %v2170, %v2166
  %2235 = vmatprep.subr.bf16.mxu0 %v2200
  %2236 = vmatpush1.bf16.msra.mxu0 %v2199
  %2237 = vmatprep.subr.bf16.mxu0 %v2196
  %2238 = vmatpush1.bf16.msra.mxu0 %v2195
  %2239 = vmatprep.subr.bf16.mxu0 %v2192
  %2240 = vmatpush1.bf16.msra.mxu0 %v2191
  %2241 = vmatprep.subr.bf16.mxu0 %v2188
  %2242 = vmatpush1.bf16.msra.mxu0 %v2187
  %2243 = vmatprep.subr.bf16.mxu0 %v2184
  %2244 = vmatpush1.bf16.msra.mxu0 %v2183
  %2245 = vmatprep.subr.bf16.mxu0 %v2180
  %2246 = vmatpush1.bf16.msra.mxu0 %v2179
  %2247 = vmatprep.subr.bf16.mxu0 %v2176
  %2248 = vmatpush1.bf16.msra.mxu0 %v2175
  %2249 = vmatprep.subr.bf16.mxu0 %v2172
  %2250 = vmatpush1.bf16.msra.mxu0 %v2171
  %2251 = vmatprep.subr.bf16.mxu0 0
  %2252 = vmatpush2.bf16.msra.mxu0 0
  %2253 = vmatprep.subr.bf16.mxu0 0
  %2254 = vmatpush2.bf16.msra.mxu0 0
  %2255 = vmatprep.subr.bf16.mxu0 0
  %2256 = vmatpush2.bf16.msra.mxu0 0
  %2257 = vmatprep.subr.bf16.mxu0 0
  %2258 = vmatpush2.bf16.msra.mxu0 0
  %2259 = vmatprep.subr.bf16.mxu0 0
  %2260 = vmatpush2.bf16.msra.mxu0 0
  %2261 = vmatprep.subr.bf16.mxu0 0
  %2262 = vmatpush2.bf16.msra.mxu0 0
  %2263 = vmatprep.subr.bf16.mxu0 0
  %2264 = vmatpush2.bf16.msra.mxu0 0
  %2265 = vmatprep.subr.bf16.mxu0 0
  %2266 = vmatpush2.bf16.msra.mxu0 0
  %2267 = vmatprep.mubr.bf16.mxu0 0
  %2268 = vmatmul.mubr.bf16.gmra.mxu0 %v2042
  %v2269 = vpop.f32.mrf.mxu0
  %v2270 = vadd.f32 0.0, %v2269
  %v2271 = vpop.f32.mrf.mxu0
  %v2272 = vadd.f32 0.0, %v2271
  %v2273 = vpop.f32.mrf.mxu0
  %v2274 = vpop.f32.mrf.mxu0
  %2275 = vdwg.mxu0
  %2276 = vmatprep.subr.bf16.mxu0 %v2202
  %2277 = vmatpush1.bf16.msra.mxu0 %v2201
  %2278 = vmatprep.subr.bf16.mxu0 %v2198
  %2279 = vmatpush1.bf16.msra.mxu0 %v2197
  %2280 = vmatprep.subr.bf16.mxu0 %v2194
  %2281 = vmatpush1.bf16.msra.mxu0 %v2193
  %2282 = vmatprep.subr.bf16.mxu0 %v2190
  %2283 = vmatpush1.bf16.msra.mxu0 %v2189
  %2284 = vmatprep.subr.bf16.mxu0 %v2186
  %2285 = vmatpush1.bf16.msra.mxu0 %v2185
  %2286 = vmatprep.subr.bf16.mxu0 %v2182
  %2287 = vmatpush1.bf16.msra.mxu0 %v2181
  %2288 = vmatprep.subr.bf16.mxu0 %v2178
  %2289 = vmatpush1.bf16.msra.mxu0 %v2177
  %2290 = vmatprep.subr.bf16.mxu0 %v2174
  %2291 = vmatpush1.bf16.msra.mxu0 %v2173
  %2292 = vmatprep.subr.bf16.mxu0 0
  %2293 = vmatpush2.bf16.msra.mxu0 0
  %2294 = vmatprep.subr.bf16.mxu0 0
  %2295 = vmatpush2.bf16.msra.mxu0 0
  %2296 = vmatprep.subr.bf16.mxu0 0
  %2297 = vmatpush2.bf16.msra.mxu0 0
  %2298 = vmatprep.subr.bf16.mxu0 0
  %2299 = vmatpush2.bf16.msra.mxu0 0
  %2300 = vmatprep.subr.bf16.mxu0 0
  %2301 = vmatpush2.bf16.msra.mxu0 0
  %2302 = vmatprep.subr.bf16.mxu0 0
  %2303 = vmatpush2.bf16.msra.mxu0 0
  %2304 = vmatprep.subr.bf16.mxu0 0
  %2305 = vmatpush2.bf16.msra.mxu0 0
  %2306 = vmatprep.subr.bf16.mxu0 0
  %2307 = vmatpush2.bf16.msra.mxu0 0
  %2308 = vmatprep.mubr.bf16.mxu0 0
  %2309 = vmatmul.mubr.bf16.gmra.mxu0 %v2042
  %v2310 = vpop.f32.mrf.mxu0
  %v2311 = vadd.f32 0.0, %v2310
  %v2312 = vpop.f32.mrf.mxu0
  %v2313 = vadd.f32 0.0, %v2312
  %v2314 = vpop.f32.mrf.mxu0
  %v2315 = vpop.f32.mrf.mxu0
  %2316 = vdwg.mxu0
  %v2317 = vadd.f32 %v2038, %v2270
  %v2318 = vadd.f32 %v2039, %v2272
  %v2319 = vadd.f32 %v2040, %v2311
  %v2320 = vadd.f32 %v2041, %v2313
  %v2321 = vld [vmem:[%s2] sm:$0xf]
  %v2323 = vlaneseq
  %v2324 = vshrl.u32 %v2323, 7
  %v2325 = vsub.s32 0, %v2324
  %v2326 = vrot.slane %v2321, %v2325
  %v2327 = vlaneseq
  %v2328 = vshrl.u32 %v2327, 7
  %v2329 = vsub.s32 1, %v2328
  %v2330 = vrot.slane %v2321, %v2329
  %v2331 = vlaneseq
  %v2332 = vshrl.u32 %v2331, 7
  %v2333 = vsub.s32 2, %v2332
  %v2334 = vrot.slane %v2321, %v2333
  %v2335 = vlaneseq
  %v2336 = vshrl.u32 %v2335, 7
  %v2337 = vsub.s32 3, %v2336
  %v2338 = vrot.slane %v2321, %v2337
  %v2343 = vadd.f32 %v2317, %v2326
  %v2344 = vadd.f32 %v2318, %v2330
  %v2345 = vadd.f32 %v2319, %v2334
  %v2346 = vadd.f32 %v2320, %v2338
  %v2347 = vxor.u32 %v2343, 2147483648
  %v2348 = vmul.f32 %v2347, 1.442695
  %v2349 = vpow.pop %v2348
  %v2350 = vadd.f32 %v2349, 1.0
  %v2351 = vrcp.pop %v2350
  %v2352 = vmul.f32 1.0, %v2351
  %v2353 = vxor.u32 %v2344, 2147483648
  %v2354 = vmul.f32 %v2353, 1.442695
  %v2355 = vpow.pop %v2354
  %v2356 = vadd.f32 %v2355, 1.0
  %v2357 = vrcp.pop %v2356
  %v2358 = vmul.f32 1.0, %v2357
  %v2359 = vtanh.pop %v2345
  %v2360 = vxor.u32 %v2346, 2147483648
  %v2361 = vmul.f32 %v2360, 1.442695
  %v2362 = vpow.pop %v2361
  %v2363 = vadd.f32 %v2362, 1.0
  %v2364 = vrcp.pop %v2363
  %v2365 = vmul.f32 1.0, %v2364
  %v2366 = vmul.f32 %v2358, %v2032
  %v2367 = vmul.f32 %v2352, %v2359
  %v2368 = vadd.f32 %v2366, %v2367
  %v2369 = vtanh.pop %v2368
  %v2370 = vmul.f32 %v2365, %v2369
  %s2371 = scalar_lea.vmem %s3, 48
  %2372 = vst [vmem:[%s2371] sm:$0xff] %v2370
  %s2373 = scalar_lea.vmem %s0, 224
  %v2374 = vld [vmem:[%s2373] sm:$0xff]
  %v2375 = vld [vmem:[%s2373 + $0x8] sm:$0xff]
  %v2376 = vld [vmem:[%s2373 + $0x10] sm:$0xff]
  %v2377 = vld [vmem:[%s2373 + $0x18] sm:$0xff]
  %v2378 = vpack.c.bf16 %v2370, %v2370
  %v2379 = vld [vmem:[%s1] sm:$0xff]
  %v2380 = vld [vmem:[%s1 + $0x8] sm:$0xff]
  %v2381 = vld [vmem:[%s1 + $0x10] sm:$0xff]
  %v2382 = vld [vmem:[%s1 + $0x18] sm:$0xff]
  %v2383 = vld [vmem:[%s1 + $0x20] sm:$0xff]
  %v2384 = vld [vmem:[%s1 + $0x28] sm:$0xff]
  %v2385 = vld [vmem:[%s1 + $0x30] sm:$0xff]
  %v2386 = vld [vmem:[%s1 + $0x38] sm:$0xff]
  %v2387 = vld [vmem:[%s1 + $0x40] sm:$0xff]
  %v2388 = vld [vmem:[%s1 + $0x48] sm:$0xff]
  %v2389 = vld [vmem:[%s1 + $0x50] sm:$0xff]
  %v2390 = vld [vmem:[%s1 + $0x58] sm:$0xff]
  %v2391 = vld [vmem:[%s1 + $0x60] sm:$0xff]
  %v2392 = vld [vmem:[%s1 + $0x68] sm:$0xff]
  %v2393 = vld [vmem:[%s1 + $0x70] sm:$0xff]
  %v2394 = vld [vmem:[%s1 + $0x78] sm:$0xff]
  %v2395 = vld [vmem:[%s1 + $0x80] sm:$0xff]
  %v2396 = vld [vmem:[%s1 + $0x88] sm:$0xff]
  %v2397 = vld [vmem:[%s1 + $0x90] sm:$0xff]
  %v2398 = vld [vmem:[%s1 + $0x98] sm:$0xff]
  %v2399 = vld [vmem:[%s1 + $0xa0] sm:$0xff]
  %v2400 = vld [vmem:[%s1 + $0xa8] sm:$0xff]
  %v2401 = vld [vmem:[%s1 + $0xb0] sm:$0xff]
  %v2402 = vld [vmem:[%s1 + $0xb8] sm:$0xff]
  %v2403 = vld [vmem:[%s1 + $0xc0] sm:$0xff]
  %v2404 = vld [vmem:[%s1 + $0xc8] sm:$0xff]
  %v2405 = vld [vmem:[%s1 + $0xd0] sm:$0xff]
  %v2406 = vld [vmem:[%s1 + $0xd8] sm:$0xff]
  %v2407 = vld [vmem:[%s1 + $0xe0] sm:$0xff]
  %v2408 = vld [vmem:[%s1 + $0xe8] sm:$0xff]
  %v2409 = vld [vmem:[%s1 + $0xf0] sm:$0xff]
  %v2410 = vld [vmem:[%s1 + $0xf8] sm:$0xff]
  %v2443 = vunpack.c.l.b16 %v2379
  %v2444 = vunpack.c.h.b16 %v2379
  %v2445 = vunpack.c.l.b16 %v2380
  %v2446 = vunpack.c.h.b16 %v2380
  %v2447 = vunpack.c.l.b16 %v2381
  %v2448 = vunpack.c.h.b16 %v2381
  %v2449 = vunpack.c.l.b16 %v2382
  %v2450 = vunpack.c.h.b16 %v2382
  %v2451 = vunpack.c.l.b16 %v2383
  %v2452 = vunpack.c.h.b16 %v2383
  %v2453 = vunpack.c.l.b16 %v2384
  %v2454 = vunpack.c.h.b16 %v2384
  %v2455 = vunpack.c.l.b16 %v2385
  %v2456 = vunpack.c.h.b16 %v2385
  %v2457 = vunpack.c.l.b16 %v2386
  %v2458 = vunpack.c.h.b16 %v2386
  %v2459 = vunpack.c.l.b16 %v2387
  %v2460 = vunpack.c.h.b16 %v2387
  %v2461 = vunpack.c.l.b16 %v2388
  %v2462 = vunpack.c.h.b16 %v2388
  %v2463 = vunpack.c.l.b16 %v2389
  %v2464 = vunpack.c.h.b16 %v2389
  %v2465 = vunpack.c.l.b16 %v2390
  %v2466 = vunpack.c.h.b16 %v2390
  %v2467 = vunpack.c.l.b16 %v2391
  %v2468 = vunpack.c.h.b16 %v2391
  %v2469 = vunpack.c.l.b16 %v2392
  %v2470 = vunpack.c.h.b16 %v2392
  %v2471 = vunpack.c.l.b16 %v2393
  %v2472 = vunpack.c.h.b16 %v2393
  %v2473 = vunpack.c.l.b16 %v2394
  %v2474 = vunpack.c.h.b16 %v2394
  %v2475 = vunpack.c.l.b16 %v2395
  %v2476 = vunpack.c.h.b16 %v2395
  %v2477 = vunpack.c.l.b16 %v2396
  %v2478 = vunpack.c.h.b16 %v2396
  %v2479 = vunpack.c.l.b16 %v2397
  %v2480 = vunpack.c.h.b16 %v2397
  %v2481 = vunpack.c.l.b16 %v2398
  %v2482 = vunpack.c.h.b16 %v2398
  %v2483 = vunpack.c.l.b16 %v2399
  %v2484 = vunpack.c.h.b16 %v2399
  %v2485 = vunpack.c.l.b16 %v2400
  %v2486 = vunpack.c.h.b16 %v2400
  %v2487 = vunpack.c.l.b16 %v2401
  %v2488 = vunpack.c.h.b16 %v2401
  %v2489 = vunpack.c.l.b16 %v2402
  %v2490 = vunpack.c.h.b16 %v2402
  %v2491 = vunpack.c.l.b16 %v2403
  %v2492 = vunpack.c.h.b16 %v2403
  %v2493 = vunpack.c.l.b16 %v2404
  %v2494 = vunpack.c.h.b16 %v2404
  %v2495 = vunpack.c.l.b16 %v2405
  %v2496 = vunpack.c.h.b16 %v2405
  %v2497 = vunpack.c.l.b16 %v2406
  %v2498 = vunpack.c.h.b16 %v2406
  %v2499 = vunpack.c.l.b16 %v2407
  %v2500 = vunpack.c.h.b16 %v2407
  %v2501 = vunpack.c.l.b16 %v2408
  %v2502 = vunpack.c.h.b16 %v2408
  %v2503 = vunpack.c.l.b16 %v2409
  %v2504 = vunpack.c.h.b16 %v2409
  %v2505 = vunpack.c.l.b16 %v2410
  %v2506 = vunpack.c.h.b16 %v2410
  %v2507 = vpack.c.b16 %v2447, %v2443
  %v2508 = vpack.c.b16 %v2448, %v2444
  %v2509 = vpack.c.b16 %v2449, %v2445
  %v2510 = vpack.c.b16 %v2450, %v2446
  %v2511 = vpack.c.b16 %v2455, %v2451
  %v2512 = vpack.c.b16 %v2456, %v2452
  %v2513 = vpack.c.b16 %v2457, %v2453
  %v2514 = vpack.c.b16 %v2458, %v2454
  %v2515 = vpack.c.b16 %v2463, %v2459
  %v2516 = vpack.c.b16 %v2464, %v2460
  %v2517 = vpack.c.b16 %v2465, %v2461
  %v2518 = vpack.c.b16 %v2466, %v2462
  %v2519 = vpack.c.b16 %v2471, %v2467
  %v2520 = vpack.c.b16 %v2472, %v2468
  %v2521 = vpack.c.b16 %v2473, %v2469
  %v2522 = vpack.c.b16 %v2474, %v2470
  %v2523 = vpack.c.b16 %v2479, %v2475
  %v2524 = vpack.c.b16 %v2480, %v2476
  %v2525 = vpack.c.b16 %v2481, %v2477
  %v2526 = vpack.c.b16 %v2482, %v2478
  %v2527 = vpack.c.b16 %v2487, %v2483
  %v2528 = vpack.c.b16 %v2488, %v2484
  %v2529 = vpack.c.b16 %v2489, %v2485
  %v2530 = vpack.c.b16 %v2490, %v2486
  %v2531 = vpack.c.b16 %v2495, %v2491
  %v2532 = vpack.c.b16 %v2496, %v2492
  %v2533 = vpack.c.b16 %v2497, %v2493
  %v2534 = vpack.c.b16 %v2498, %v2494
  %v2535 = vpack.c.b16 %v2503, %v2499
  %v2536 = vpack.c.b16 %v2504, %v2500
  %v2537 = vpack.c.b16 %v2505, %v2501
  %v2538 = vpack.c.b16 %v2506, %v2502
  %2571 = vmatprep.subr.bf16.mxu0 %v2536
  %2572 = vmatpush1.bf16.msra.mxu0 %v2535
  %2573 = vmatprep.subr.bf16.mxu0 %v2532
  %2574 = vmatpush1.bf16.msra.mxu0 %v2531
  %2575 = vmatprep.subr.bf16.mxu0 %v2528
  %2576 = vmatpush1.bf16.msra.mxu0 %v2527
  %2577 = vmatprep.subr.bf16.mxu0 %v2524
  %2578 = vmatpush1.bf16.msra.mxu0 %v2523
  %2579 = vmatprep.subr.bf16.mxu0 %v2520
  %2580 = vmatpush1.bf16.msra.mxu0 %v2519
  %2581 = vmatprep.subr.bf16.mxu0 %v2516
  %2582 = vmatpush1.bf16.msra.mxu0 %v2515
  %2583 = vmatprep.subr.bf16.mxu0 %v2512
  %2584 = vmatpush1.bf16.msra.mxu0 %v2511
  %2585 = vmatprep.subr.bf16.mxu0 %v2508
  %2586 = vmatpush1.bf16.msra.mxu0 %v2507
  %2587 = vmatprep.subr.bf16.mxu0 0
  %2588 = vmatpush2.bf16.msra.mxu0 0
  %2589 = vmatprep.subr.bf16.mxu0 0
  %2590 = vmatpush2.bf16.msra.mxu0 0
  %2591 = vmatprep.subr.bf16.mxu0 0
  %2592 = vmatpush2.bf16.msra.mxu0 0
  %2593 = vmatprep.subr.bf16.mxu0 0
  %2594 = vmatpush2.bf16.msra.mxu0 0
  %2595 = vmatprep.subr.bf16.mxu0 0
  %2596 = vmatpush2.bf16.msra.mxu0 0
  %2597 = vmatprep.subr.bf16.mxu0 0
  %2598 = vmatpush2.bf16.msra.mxu0 0
  %2599 = vmatprep.subr.bf16.mxu0 0
  %2600 = vmatpush2.bf16.msra.mxu0 0
  %2601 = vmatprep.subr.bf16.mxu0 0
  %2602 = vmatpush2.bf16.msra.mxu0 0
  %2603 = vmatprep.mubr.bf16.mxu0 0
  %2604 = vmatmul.mubr.bf16.gmra.mxu0 %v2378
  %v2605 = vpop.f32.mrf.mxu0
  %v2606 = vadd.f32 0.0, %v2605
  %v2607 = vpop.f32.mrf.mxu0
  %v2608 = vadd.f32 0.0, %v2607
  %v2609 = vpop.f32.mrf.mxu0
  %v2610 = vpop.f32.mrf.mxu0
  %2611 = vdwg.mxu0
  %2612 = vmatprep.subr.bf16.mxu0 %v2538
  %2613 = vmatpush1.bf16.msra.mxu0 %v2537
  %2614 = vmatprep.subr.bf16.mxu0 %v2534
  %2615 = vmatpush1.bf16.msra.mxu0 %v2533
  %2616 = vmatprep.subr.bf16.mxu0 %v2530
  %2617 = vmatpush1.bf16.msra.mxu0 %v2529
  %2618 = vmatprep.subr.bf16.mxu0 %v2526
  %2619 = vmatpush1.bf16.msra.mxu0 %v2525
  %2620 = vmatprep.subr.bf16.mxu0 %v2522
  %2621 = vmatpush1.bf16.msra.mxu0 %v2521
  %2622 = vmatprep.subr.bf16.mxu0 %v2518
  %2623 = vmatpush1.bf16.msra.mxu0 %v2517
  %2624 = vmatprep.subr.bf16.mxu0 %v2514
  %2625 = vmatpush1.bf16.msra.mxu0 %v2513
  %2626 = vmatprep.subr.bf16.mxu0 %v2510
  %2627 = vmatpush1.bf16.msra.mxu0 %v2509
  %2628 = vmatprep.subr.bf16.mxu0 0
  %2629 = vmatpush2.bf16.msra.mxu0 0
  %2630 = vmatprep.subr.bf16.mxu0 0
  %2631 = vmatpush2.bf16.msra.mxu0 0
  %2632 = vmatprep.subr.bf16.mxu0 0
  %2633 = vmatpush2.bf16.msra.mxu0 0
  %2634 = vmatprep.subr.bf16.mxu0 0
  %2635 = vmatpush2.bf16.msra.mxu0 0
  %2636 = vmatprep.subr.bf16.mxu0 0
  %2637 = vmatpush2.bf16.msra.mxu0 0
  %2638 = vmatprep.subr.bf16.mxu0 0
  %2639 = vmatpush2.bf16.msra.mxu0 0
  %2640 = vmatprep.subr.bf16.mxu0 0
  %2641 = vmatpush2.bf16.msra.mxu0 0
  %2642 = vmatprep.subr.bf16.mxu0 0
  %2643 = vmatpush2.bf16.msra.mxu0 0
  %2644 = vmatprep.mubr.bf16.mxu0 0
  %2645 = vmatmul.mubr.bf16.gmra.mxu0 %v2378
  %v2646 = vpop.f32.mrf.mxu0
  %v2647 = vadd.f32 0.0, %v2646
  %v2648 = vpop.f32.mrf.mxu0
  %v2649 = vadd.f32 0.0, %v2648
  %v2650 = vpop.f32.mrf.mxu0
  %v2651 = vpop.f32.mrf.mxu0
  %2652 = vdwg.mxu0
  %v2653 = vadd.f32 %v2374, %v2606
  %v2654 = vadd.f32 %v2375, %v2608
  %v2655 = vadd.f32 %v2376, %v2647
  %v2656 = vadd.f32 %v2377, %v2649
  %v2657 = vld [vmem:[%s2] sm:$0xf]
  %v2659 = vlaneseq
  %v2660 = vshrl.u32 %v2659, 7
  %v2661 = vsub.s32 0, %v2660
  %v2662 = vrot.slane %v2657, %v2661
  %v2663 = vlaneseq
  %v2664 = vshrl.u32 %v2663, 7
  %v2665 = vsub.s32 1, %v2664
  %v2666 = vrot.slane %v2657, %v2665
  %v2667 = vlaneseq
  %v2668 = vshrl.u32 %v2667, 7
  %v2669 = vsub.s32 2, %v2668
  %v2670 = vrot.slane %v2657, %v2669
  %v2671 = vlaneseq
  %v2672 = vshrl.u32 %v2671, 7
  %v2673 = vsub.s32 3, %v2672
  %v2674 = vrot.slane %v2657, %v2673
  %v2679 = vadd.f32 %v2653, %v2662
  %v2680 = vadd.f32 %v2654, %v2666
  %v2681 = vadd.f32 %v2655, %v2670
  %v2682 = vadd.f32 %v2656, %v2674
  %v2683 = vxor.u32 %v2679, 2147483648
  %v2684 = vmul.f32 %v2683, 1.442695
  %v2685 = vpow.pop %v2684
  %v2686 = vadd.f32 %v2685, 1.0
  %v2687 = vrcp.pop %v2686
  %v2688 = vmul.f32 1.0, %v2687
  %v2689 = vxor.u32 %v2680, 2147483648
  %v2690 = vmul.f32 %v2689, 1.442695
  %v2691 = vpow.pop %v2690
  %v2692 = vadd.f32 %v2691, 1.0
  %v2693 = vrcp.pop %v2692
  %v2694 = vmul.f32 1.0, %v2693
  %v2695 = vtanh.pop %v2681
  %v2696 = vxor.u32 %v2682, 2147483648
  %v2697 = vmul.f32 %v2696, 1.442695
  %v2698 = vpow.pop %v2697
  %v2699 = vadd.f32 %v2698, 1.0
  %v2700 = vrcp.pop %v2699
  %v2701 = vmul.f32 1.0, %v2700
  %v2702 = vmul.f32 %v2694, %v2368
  %v2703 = vmul.f32 %v2688, %v2695
  %v2704 = vadd.f32 %v2702, %v2703
  %v2705 = vtanh.pop %v2704
  %v2706 = vmul.f32 %v2701, %v2705
  %s2707 = scalar_lea.vmem %s3, 56
  %2708 = vst [vmem:[%s2707] sm:$0xff] %v2706
  %2709 = vst [vmem:[#allocation2] sm:$0xff] %v2706
  %2710 = vst [vmem:[#allocation3] sm:$0xff] %v2704
  // Predicated region
  $region18: #{lm_forward.4} parent=0 // pred_check
    _
  $region19: #{lm_forward.4} parent=0 // pred_check_branch
    %2712 = sbr.rel (0) target = $region21
  $region20: #{lm_forward.4} parent=0 // pred_region
    _
  $region21: #{lm_forward.4} parent=0 // pred_fallthru
    _
  // Predicated region
  $region22: #{lm_forward.4} parent=0 // pred_check
    _
  $region23: #{lm_forward.4} parent=0 // pred_check_branch
    %2714 = sbr.rel (0) target = $region25
  $region24: #{lm_forward.4} parent=0 // pred_region
    _
  $region25: #{lm_forward.4} parent=0 // pred_fallthru
    _

</llo_original>
